<compile_context>
chip_gen: v7x
topology: tpu7x:2x2x1
jax: 0.10.0
libtpu: 0.0.40
codegen_flags: <defaults>
</compile_context>

<pallas_src>
import math

import jax
import jax.numpy as jnp
from jax.experimental import pallas as pl
from jax.experimental.pallas import tpu as pltpu

# ---------------- Config (small, consistent with the module) ----------------
N_TOKEN     = 16          # n_token
NUM_ACTIONS = 6           # num_actions
N_EMBD      = 32          # config.n_embd
N_HEAD      = 4           # config.n_head
HEAD        = N_EMBD // N_HEAD   # head_size = 8
HALF        = HEAD // 2
N_HIDDEN    = 64          # SwiGLU hidden size
N_LAYER     = 2           # config.n_layer
BLOCK_SIZE  = 32          # config.block_size
NORM_EPS    = 1e-5        # config.norm_eps
ROPE_BASE   = 10000
CONDENSE    = 1           # config.condense_ratio
N_TAB       = 2 + NUM_ACTIONS + 2   # [pad_acts, pad_rews, action_emb rows, reward_emb rows]
OUT_LANES   = 128         # lane-dense padded head output width


# ------------------------------ RoPE cache -----------------------------------
def build_rope_cache(seq_len, n_elem, base=ROPE_BASE, condense_ratio=CONDENSE):
    theta = 1.0 / (base ** (jnp.arange(0, n_elem, 2, dtype=jnp.float32) / n_elem))
    seq_idx = jnp.arange(seq_len, dtype=jnp.float32) / condense_ratio
    idx_theta = jnp.outer(seq_idx, theta)
    idx_theta = jnp.concatenate([idx_theta, idx_theta], axis=-1)   # (seq_len, n_elem)
    # reference builds the cache in bf16; round once through bf16, hand f32 to the kernel
    cos = jnp.cos(idx_theta).astype(jnp.bfloat16).astype(jnp.float32)
    sin = jnp.sin(idx_theta).astype(jnp.bfloat16).astype(jnp.float32)
    return cos, sin


# ------------------------------ Pallas kernel ---------------------------------
def _make_kernel(T, t, b_blk):
    scale = 1.0 / math.sqrt(HEAD)

    def rmsnorm(h, w):
        var = jnp.mean(h * h, axis=-1, keepdims=True)
        return h * jax.lax.rsqrt(var + NORM_EPS) * w

    def kernel(acts_ref, rews_ref,                                   # SMEM scalar prefetch
               tab_ref, proj_w_ref, rcs_ref, norms_ref,
               wqkv_ref, wo_ref, w12_ref, w3_ref, head_ref,
               out_ref):
        chunk = pl.program_id(0)

        # fused cos||sin cache: (T, 2*HEAD)
        cos = rcs_ref[:, :HEAD]                                      # (T, HEAD) f32
        sin = rcs_ref[:, HEAD:]

        def rope(u):                                                 # (T, HEAD), rotate-half
            rot = jnp.concatenate([-u[:, HALF:], u[:, :HALF]], axis=-1)
            return u * cos + rot * sin

        # fused norm weights / proj bias: rows [0:L]=rms1, [L:2L]=rms2, [2L]=ln_f, [2L+1]=proj_b
        norms = norms_ref[...]                                       # (2L+2, C)
        rms1_all = norms[0:N_LAYER]
        rms2_all = norms[N_LAYER:2 * N_LAYER]
        lnf_w    = norms[2 * N_LAYER:2 * N_LAYER + 1]
        proj_b   = norms[2 * N_LAYER + 1:2 * N_LAYER + 2]

        # Project the tiny combined embedding/pad table once: (N_TAB, C)
        tab_proj = jnp.dot(tab_ref[...], proj_w_ref[...],
                           preferred_element_type=jnp.float32) + proj_b

        # ---- build the interleaved, projected input sequence (b_blk*T, C) ----
        row_i = jax.lax.broadcasted_iota(jnp.int32, (T, N_TAB), 0)
        col_i = jax.lax.broadcasted_iota(jnp.int32, (T, N_TAB), 1)
        x_parts = []
        for bb in range(b_blk):                                      # static
            b_idx = chunk * b_blk + bb
            oh = jnp.zeros((T, N_TAB), jnp.float32)
            oh = jnp.where((row_i == 0) & (col_i == 0), 1.0, oh)     # pad_acts at pos 0
            oh = jnp.where((row_i == 1) & (col_i == 1), 1.0, oh)     # pad_rews at pos 1
            for i in range(t):                                       # static, tiny
                a = acts_ref[b_idx, i]
                r = rews_ref[b_idx, i]
                oh = jnp.where((row_i == 2 + 2 * i) & (col_i == 2 + a), 1.0, oh)
                oh = jnp.where((row_i == 3 + 2 * i) &
                               (col_i == 2 + NUM_ACTIONS + r), 1.0, oh)
            x_parts.append(jnp.dot(oh, tab_proj, preferred_element_type=jnp.float32))
        x = x_parts[0] if b_blk == 1 else jnp.concatenate(x_parts, axis=0)   # (R, C)

        # causal mask (SDPA with mask=None -> is_causal=True in the reference block)
        rr = jax.lax.broadcasted_iota(jnp.int32, (T, T), 0)
        cc = jax.lax.broadcasted_iota(jnp.int32, (T, T), 1)
        causal = rr >= cc

        for l in range(N_LAYER):                                     # static unroll
            # ---------------- attention ----------------
            h = rmsnorm(x, rms1_all[l:l + 1, :])
            qkv = jnp.dot(h, wqkv_ref[l], preferred_element_type=jnp.float32)  # (R, 3C)
            attn_parts = []
            for bb in range(b_blk):                                  # per batch element
                r0 = bb * T
                heads = []
                for hh in range(N_HEAD):                             # 2-D per-head slices
                    c = hh * HEAD
                    q_h = rope(qkv[r0:r0 + T, c:c + HEAD])
                    k_h = rope(qkv[r0:r0 + T, N_EMBD + c:N_EMBD + c + HEAD])
                    v_h = qkv[r0:r0 + T, 2 * N_EMBD + c:2 * N_EMBD + c + HEAD]
                    s = jax.lax.dot_general(
                        q_h, k_h, (((1,), (1,)), ((), ())),
                        preferred_element_type=jnp.float32) * scale           # (T, T)
                    s = jnp.where(causal, s, -1e30)
                    s = s - jnp.max(s, axis=-1, keepdims=True)
                    p = jnp.exp(s)
                    p = p * pl.reciprocal(jnp.sum(p, axis=-1, keepdims=True), approx=True)
                    heads.append(jnp.dot(p, v_h, preferred_element_type=jnp.float32))
                attn_parts.append(jnp.concatenate(heads, axis=-1))            # (T, C)
            attn = attn_parts[0] if b_blk == 1 else jnp.concatenate(attn_parts, axis=0)
            x = x + jnp.dot(attn, wo_ref[l], preferred_element_type=jnp.float32)

            # ---------------- SwiGLU MLP (fused w1||w2) ----------------
            h2 = rmsnorm(x, rms2_all[l:l + 1, :])
            gu = jnp.dot(h2, w12_ref[l], preferred_element_type=jnp.float32)  # (R, 2*hid)
            g = gu[:, :N_HIDDEN]
            u = gu[:, N_HIDDEN:]
            x = x + jnp.dot(jax.nn.silu(g) * u, w3_ref[l],
                            preferred_element_type=jnp.float32)

        # ---- final norm, 1::2 row selection, lane-dense head ----
        xn = rmsnorm(x, lnf_w)
        si = jax.lax.broadcasted_iota(jnp.int32, (t + 1, T), 0)
        sj = jax.lax.broadcasted_iota(jnp.int32, (t + 1, T), 1)
        sel_mat = (sj == 2 * si + 1).astype(jnp.float32)             # picks rows 1,3,5,...
        head_w = head_ref[...]                                       # (C, 128) zero-padded
        for bb in range(b_blk):
            xb = xn[bb * T:(bb + 1) * T]                             # (T, C)
            xs = jnp.dot(sel_mat, xb, preferred_element_type=jnp.float32)     # (t+1, C)
            out_ref[bb] = jnp.dot(xs, head_w, preferred_element_type=jnp.float32)

    return kernel


# ------------------------------ params ---------------------------------------
def make_params(key):
    ks = jax.random.split(key, 16)
    std_tok  = math.sqrt(2.0 / 5 / N_TOKEN)
    std_embd = math.sqrt(2.0 / 5 / N_EMBD)
    p = {
        'reward_emb': jax.random.normal(ks[0], (2, N_TOKEN), jnp.float32) * std_tok,
        'action_emb': jax.random.normal(ks[1], (NUM_ACTIONS, N_TOKEN), jnp.float32) * std_tok,
        'pad_acts':   jax.random.normal(ks[2], (1, 1, N_TOKEN), jnp.float32),
        'pad_rews':   jax.random.normal(ks[3], (1, 1, N_TOKEN), jnp.float32),
        'proj_w':     jax.random.normal(ks[4], (N_TOKEN, N_EMBD), jnp.float32) * std_tok,
        'proj_b':     jnp.zeros((1, N_EMBD), jnp.float32),
        'rms1_w':     jnp.ones((N_LAYER, N_EMBD), jnp.float32),
        'wqkv':       jax.random.normal(ks[5], (N_LAYER, N_EMBD, 3 * N_EMBD), jnp.float32) * std_embd,
        'wo':         jax.random.normal(ks[6], (N_LAYER, N_EMBD, N_EMBD), jnp.float32) * std_embd,
        'rms2_w':     jnp.ones((N_LAYER, N_EMBD), jnp.float32),
        'w1':         jax.random.normal(ks[7], (N_LAYER, N_EMBD, N_HIDDEN), jnp.float32) * std_embd,
        'w2':         jax.random.normal(ks[8], (N_LAYER, N_EMBD, N_HIDDEN), jnp.float32) * std_embd,
        'w3':         jax.random.normal(ks[9], (N_LAYER, N_HIDDEN, N_EMBD), jnp.float32)
                      * (1.0 / math.sqrt(N_EMBD) / N_LAYER),
        'lnf_w':      jnp.ones((1, N_EMBD), jnp.float32),
        'head_w':     jax.random.normal(ks[10], (N_EMBD, NUM_ACTIONS), jnp.float32) * std_embd,
    }
    return p


# ------------------------------ wrapper ---------------------------------------
@jax.jit
def model_forward(actions, rewards, params):
    b, t = rewards.shape
    T = 2 * t + 2
    assert T <= BLOCK_SIZE

    # 2-way batch-chunk grid (parallel) so both v7x TensorCores get work; a no-op
    # grid split on single-TC v5e/v6e.
    num_chunks = 2 if b >= 2 else 1
    b_blk = -(-b // num_chunks)
    b_pad = num_chunks * b_blk
    actions = actions.astype(jnp.int32)
    rewards = rewards.astype(jnp.int32)
    if b_pad != b:
        actions = jnp.pad(actions, ((0, b_pad - b), (0, 0)))
        rewards = jnp.pad(rewards, ((0, b_pad - b), (0, 0)))

    # Tiny parameter-only reshuffles (batch independent, fused by XLA under jit).
    tab = jnp.concatenate([params['pad_acts'].reshape(1, N_TOKEN),
                           params['pad_rews'].reshape(1, N_TOKEN),
                           params['action_emb'],
                           params['reward_emb']], axis=0)                      # (N_TAB, n_token)
    w12 = jnp.concatenate([params['w1'], params['w2']], axis=-1)               # (L, C, 2*hid)
    head_pad = jnp.pad(params['head_w'], ((0, 0), (0, OUT_LANES - NUM_ACTIONS)))  # (C, 128)
    norms = jnp.concatenate([params['rms1_w'], params['rms2_w'],
                             params['lnf_w'], params['proj_b']], axis=0)       # (2L+2, C)

    cos, sin = build_rope_cache(BLOCK_SIZE, HEAD)
    rope_cs = jnp.concatenate([cos[:T], sin[:T]], axis=-1)                     # (T, 2*HEAD)

    def fixed(*dims):
        nd = len(dims)
        return pl.BlockSpec(dims, lambda i, *_: (0,) * nd)

    kernel = _make_kernel(T, t, b_blk)
    out = pl.pallas_call(
        kernel,
        out_shape=jax.ShapeDtypeStruct((b_pad, t + 1, OUT_LANES), jnp.float32),
        grid_spec=pltpu.PrefetchScalarGridSpec(
            num_scalar_prefetch=2,                       # actions, rewards -> SMEM
            grid=(num_chunks,),
            in_specs=[
                fixed(N_TAB, N_TOKEN),                   # tab
                fixed(N_TOKEN, N_EMBD),                  # proj_w
                fixed(T, 2 * HEAD),                      # cos||sin
                fixed(2 * N_LAYER + 2, N_EMBD),          # rms1||rms2||ln_f||proj_b
                fixed(N_LAYER, N_EMBD, 3 * N_EMBD),      # wqkv
                fixed(N_LAYER, N_EMBD, N_EMBD),          # wo
                fixed(N_LAYER, N_EMBD, 2 * N_HIDDEN),    # w12 (fused w1||w2)
                fixed(N_LAYER, N_HIDDEN, N_EMBD),        # w3
                fixed(N_EMBD, OUT_LANES),                # head_w (lane padded)
            ],
            out_specs=pl.BlockSpec((b_blk, t + 1, OUT_LANES), lambda i, *_: (i, 0, 0)),
        ),
        compiler_params=pltpu.CompilerParams(dimension_semantics=("parallel",)),
    )(actions, rewards,
      tab, params['proj_w'], rope_cs, norms,
      params['wqkv'], params['wo'], w12, params['w3'], head_pad)

    # kernel already emitted only rows 1::2 -> (b_pad, t+1, 128); drop lane/batch padding
    return out[:b, :, :NUM_ACTIONS]


if __name__ == "__main__":
    key = jax.random.PRNGKey(0)
    kp, ka, kr = jax.random.split(key, 3)
    params = make_params(kp)

    b, t = 2, 8
    actions = jax.random.randint(ka, (b, t), 0, NUM_ACTIONS, dtype=jnp.int32)
    rewards = jax.random.randint(kr, (b, t), 0, 2, dtype=jnp.int32)

    out = model_forward(actions, rewards, params)
    out = jax.block_until_ready(out)

    assert out.shape == (b, t + 1, NUM_ACTIONS), out.shape
    assert bool(jnp.all(jnp.isfinite(out)))
    print("KERNEL_OK")
</pallas_src>

<mosaic_0001>
module attributes {stable_mosaic.version = 11 : i64} {
  func.func @kernel(%arg0: i32, %arg1: memref<2x8xi32, #tpu.memory_space<smem>>, %arg2: memref<2x8xi32, #tpu.memory_space<smem>>, %arg3: memref<10x16xf32, #tpu.memory_space<vmem>>, %arg4: memref<16x32xf32, #tpu.memory_space<vmem>>, %arg5: memref<18x16xf32, #tpu.memory_space<vmem>>, %arg6: memref<6x32xf32, #tpu.memory_space<vmem>>, %arg7: memref<2x32x96xf32, #tpu.memory_space<vmem>>, %arg8: memref<2x32x32xf32, #tpu.memory_space<vmem>>, %arg9: memref<2x32x128xf32, #tpu.memory_space<vmem>>, %arg10: memref<2x64x32xf32, #tpu.memory_space<vmem>>, %arg11: memref<32x128xf32, #tpu.memory_space<vmem>>, %arg12: memref<1x9x128xf32, #tpu.memory_space<vmem>>) attributes {dimension_semantics = [#tpu.dimension_semantics<parallel>], iteration_bounds = array<i64: 2>, scalar_prefetch = 2 : i64, scratch_operands = 0 : i64, tpu.core_type = #tpu.core_type<tc>, window_params = [{pipeline_mode = #tpu.pipeline_mode<synchronous>, transform_indices = @transform_0, window_bounds = array<i64: 10, 16>}, {pipeline_mode = #tpu.pipeline_mode<synchronous>, transform_indices = @transform_1, window_bounds = array<i64: 16, 32>}, {pipeline_mode = #tpu.pipeline_mode<synchronous>, transform_indices = @transform_2, window_bounds = array<i64: 18, 16>}, {pipeline_mode = #tpu.pipeline_mode<synchronous>, transform_indices = @transform_3, window_bounds = array<i64: 6, 32>}, {pipeline_mode = #tpu.pipeline_mode<synchronous>, transform_indices = @transform_4, window_bounds = array<i64: 2, 32, 96>}, {pipeline_mode = #tpu.pipeline_mode<synchronous>, transform_indices = @transform_5, window_bounds = array<i64: 2, 32, 32>}, {pipeline_mode = #tpu.pipeline_mode<synchronous>, transform_indices = @transform_6, window_bounds = array<i64: 2, 32, 128>}, {pipeline_mode = #tpu.pipeline_mode<synchronous>, transform_indices = @transform_7, window_bounds = array<i64: 2, 64, 32>}, {pipeline_mode = #tpu.pipeline_mode<synchronous>, transform_indices = @transform_8, window_bounds = array<i64: 32, 128>}, {transform_indices = @transform_9, window_bounds = array<i64: 1, 9, 128>}]} {
    %c0 = arith.constant 0 : index
    %c0_0 = arith.constant 0 : index
    %0 = vector.load %arg5[%c0, %c0_0] : memref<18x16xf32, #tpu.memory_space<vmem>>, vector<18x8xf32>
    %c0_1 = arith.constant 0 : index
    %c8 = arith.constant 8 : index
    %1 = vector.load %arg5[%c0_1, %c8] : memref<18x16xf32, #tpu.memory_space<vmem>>, vector<18x8xf32>
    %c0_2 = arith.constant 0 : index
    %c0_3 = arith.constant 0 : index
    %2 = vector.load %arg6[%c0_2, %c0_3] : memref<6x32xf32, #tpu.memory_space<vmem>>, vector<6x32xf32>
    %3 = vector.extract_strided_slice %2 {offsets = [0, 0], sizes = [2, 32], strides = [1, 1]} : vector<6x32xf32> to vector<2x32xf32>
    %4 = vector.extract_strided_slice %2 {offsets = [2, 0], sizes = [2, 32], strides = [1, 1]} : vector<6x32xf32> to vector<2x32xf32>
    %5 = vector.extract_strided_slice %2 {offsets = [4, 0], sizes = [1, 32], strides = [1, 1]} : vector<6x32xf32> to vector<1x32xf32>
    %6 = vector.extract_strided_slice %2 {offsets = [5, 0], sizes = [1, 32], strides = [1, 1]} : vector<6x32xf32> to vector<1x32xf32>
    %c0_4 = arith.constant 0 : index
    %c0_5 = arith.constant 0 : index
    %7 = vector.load %arg3[%c0_4, %c0_5] : memref<10x16xf32, #tpu.memory_space<vmem>>, vector<10x16xf32>
    %c0_6 = arith.constant 0 : index
    %c0_7 = arith.constant 0 : index
    %8 = vector.load %arg4[%c0_6, %c0_7] : memref<16x32xf32, #tpu.memory_space<vmem>>, vector<16x32xf32>
    %cst = arith.constant dense<0.000000e+00> : vector<10x32xf32>
    %9 = tpu.matmul %7, %8, %cst {dimension_numbers = #tpu.dot_dimension_numbers<[1], [0], [0], [1], [0, 0, 1, 1], [], []>} : vector<10x16xf32>, vector<16x32xf32>, vector<10x32xf32> -> vector<10x32xf32>
    %10 = vector.broadcast %6 : vector<1x32xf32> to vector<10x32xf32>
    %11 = arith.addf %9, %10 : vector<10x32xf32>
    %12 = tpu.iota {dimensions = array<i32: 0>} : vector<18x10xi32>
    %13 = tpu.iota {dimensions = array<i32: 1>} : vector<18x10xi32>
    %c1_i32 = arith.constant 1 : i32
    %14 = arith.muli %arg0, %c1_i32 : i32
    %c0_i32 = arith.constant 0 : i32
    %15 = arith.addi %14, %c0_i32 : i32
    %cst_8 = arith.constant 0.000000e+00 : f32
    %16 = vector.broadcast %cst_8 : f32 to vector<18x10xf32>
    %c0_i32_9 = arith.constant 0 : i32
    %17 = vector.broadcast %c0_i32_9 : i32 to vector<18x10xi32>
    %18 = arith.cmpi eq, %12, %17 : vector<18x10xi32>
    %c0_i32_10 = arith.constant 0 : i32
    %19 = vector.broadcast %c0_i32_10 : i32 to vector<18x10xi32>
    %20 = arith.cmpi eq, %13, %19 : vector<18x10xi32>
    %21 = arith.andi %18, %20 : vector<18x10xi1>
    %cst_11 = arith.constant 1.000000e+00 : f32
    %22 = vector.broadcast %cst_11 : f32 to vector<18x10xf32>
    %23 = arith.select %21, %22, %16 : vector<18x10xi1>, vector<18x10xf32>
    %c1_i32_12 = arith.constant 1 : i32
    %24 = vector.broadcast %c1_i32_12 : i32 to vector<18x10xi32>
    %25 = arith.cmpi eq, %12, %24 : vector<18x10xi32>
    %c1_i32_13 = arith.constant 1 : i32
    %26 = vector.broadcast %c1_i32_13 : i32 to vector<18x10xi32>
    %27 = arith.cmpi eq, %13, %26 : vector<18x10xi32>
    %28 = arith.andi %25, %27 : vector<18x10xi1>
    %cst_14 = arith.constant 1.000000e+00 : f32
    %29 = vector.broadcast %cst_14 : f32 to vector<18x10xf32>
    %30 = arith.select %28, %29, %23 : vector<18x10xi1>, vector<18x10xf32>
    %31 = arith.index_cast %15 : i32 to index
    %c0_15 = arith.constant 0 : index
    %32 = memref.load %arg1[%31, %c0_15] : memref<2x8xi32, #tpu.memory_space<smem>>
    %33 = arith.index_cast %15 : i32 to index
    %c0_16 = arith.constant 0 : index
    %34 = memref.load %arg2[%33, %c0_16] : memref<2x8xi32, #tpu.memory_space<smem>>
    %c2_i32 = arith.constant 2 : i32
    %35 = vector.broadcast %c2_i32 : i32 to vector<18x10xi32>
    %36 = arith.cmpi eq, %12, %35 : vector<18x10xi32>
    %c2_i32_17 = arith.constant 2 : i32
    %37 = arith.addi %c2_i32_17, %32 : i32
    %38 = vector.broadcast %37 : i32 to vector<18x10xi32>
    %39 = arith.cmpi eq, %13, %38 : vector<18x10xi32>
    %40 = arith.andi %36, %39 : vector<18x10xi1>
    %cst_18 = arith.constant 1.000000e+00 : f32
    %41 = vector.broadcast %cst_18 : f32 to vector<18x10xf32>
    %42 = arith.select %40, %41, %30 : vector<18x10xi1>, vector<18x10xf32>
    %c3_i32 = arith.constant 3 : i32
    %43 = vector.broadcast %c3_i32 : i32 to vector<18x10xi32>
    %44 = arith.cmpi eq, %12, %43 : vector<18x10xi32>
    %c8_i32 = arith.constant 8 : i32
    %45 = arith.addi %c8_i32, %34 : i32
    %46 = vector.broadcast %45 : i32 to vector<18x10xi32>
    %47 = arith.cmpi eq, %13, %46 : vector<18x10xi32>
    %48 = arith.andi %44, %47 : vector<18x10xi1>
    %cst_19 = arith.constant 1.000000e+00 : f32
    %49 = vector.broadcast %cst_19 : f32 to vector<18x10xf32>
    %50 = arith.select %48, %49, %42 : vector<18x10xi1>, vector<18x10xf32>
    %51 = arith.index_cast %15 : i32 to index
    %c1 = arith.constant 1 : index
    %52 = memref.load %arg1[%51, %c1] : memref<2x8xi32, #tpu.memory_space<smem>>
    %53 = arith.index_cast %15 : i32 to index
    %c1_20 = arith.constant 1 : index
    %54 = memref.load %arg2[%53, %c1_20] : memref<2x8xi32, #tpu.memory_space<smem>>
    %c4_i32 = arith.constant 4 : i32
    %55 = vector.broadcast %c4_i32 : i32 to vector<18x10xi32>
    %56 = arith.cmpi eq, %12, %55 : vector<18x10xi32>
    %c2_i32_21 = arith.constant 2 : i32
    %57 = arith.addi %c2_i32_21, %52 : i32
    %58 = vector.broadcast %57 : i32 to vector<18x10xi32>
    %59 = arith.cmpi eq, %13, %58 : vector<18x10xi32>
    %60 = arith.andi %56, %59 : vector<18x10xi1>
    %cst_22 = arith.constant 1.000000e+00 : f32
    %61 = vector.broadcast %cst_22 : f32 to vector<18x10xf32>
    %62 = arith.select %60, %61, %50 : vector<18x10xi1>, vector<18x10xf32>
    %c5_i32 = arith.constant 5 : i32
    %63 = vector.broadcast %c5_i32 : i32 to vector<18x10xi32>
    %64 = arith.cmpi eq, %12, %63 : vector<18x10xi32>
    %c8_i32_23 = arith.constant 8 : i32
    %65 = arith.addi %c8_i32_23, %54 : i32
    %66 = vector.broadcast %65 : i32 to vector<18x10xi32>
    %67 = arith.cmpi eq, %13, %66 : vector<18x10xi32>
    %68 = arith.andi %64, %67 : vector<18x10xi1>
    %cst_24 = arith.constant 1.000000e+00 : f32
    %69 = vector.broadcast %cst_24 : f32 to vector<18x10xf32>
    %70 = arith.select %68, %69, %62 : vector<18x10xi1>, vector<18x10xf32>
    %71 = arith.index_cast %15 : i32 to index
    %c2 = arith.constant 2 : index
    %72 = memref.load %arg1[%71, %c2] : memref<2x8xi32, #tpu.memory_space<smem>>
    %73 = arith.index_cast %15 : i32 to index
    %c2_25 = arith.constant 2 : index
    %74 = memref.load %arg2[%73, %c2_25] : memref<2x8xi32, #tpu.memory_space<smem>>
    %c6_i32 = arith.constant 6 : i32
    %75 = vector.broadcast %c6_i32 : i32 to vector<18x10xi32>
    %76 = arith.cmpi eq, %12, %75 : vector<18x10xi32>
    %c2_i32_26 = arith.constant 2 : i32
    %77 = arith.addi %c2_i32_26, %72 : i32
    %78 = vector.broadcast %77 : i32 to vector<18x10xi32>
    %79 = arith.cmpi eq, %13, %78 : vector<18x10xi32>
    %80 = arith.andi %76, %79 : vector<18x10xi1>
    %cst_27 = arith.constant 1.000000e+00 : f32
    %81 = vector.broadcast %cst_27 : f32 to vector<18x10xf32>
    %82 = arith.select %80, %81, %70 : vector<18x10xi1>, vector<18x10xf32>
    %c7_i32 = arith.constant 7 : i32
    %83 = vector.broadcast %c7_i32 : i32 to vector<18x10xi32>
    %84 = arith.cmpi eq, %12, %83 : vector<18x10xi32>
    %c8_i32_28 = arith.constant 8 : i32
    %85 = arith.addi %c8_i32_28, %74 : i32
    %86 = vector.broadcast %85 : i32 to vector<18x10xi32>
    %87 = arith.cmpi eq, %13, %86 : vector<18x10xi32>
    %88 = arith.andi %84, %87 : vector<18x10xi1>
    %cst_29 = arith.constant 1.000000e+00 : f32
    %89 = vector.broadcast %cst_29 : f32 to vector<18x10xf32>
    %90 = arith.select %88, %89, %82 : vector<18x10xi1>, vector<18x10xf32>
    %91 = arith.index_cast %15 : i32 to index
    %c3 = arith.constant 3 : index
    %92 = memref.load %arg1[%91, %c3] : memref<2x8xi32, #tpu.memory_space<smem>>
    %93 = arith.index_cast %15 : i32 to index
    %c3_30 = arith.constant 3 : index
    %94 = memref.load %arg2[%93, %c3_30] : memref<2x8xi32, #tpu.memory_space<smem>>
    %c8_i32_31 = arith.constant 8 : i32
    %95 = vector.broadcast %c8_i32_31 : i32 to vector<18x10xi32>
    %96 = arith.cmpi eq, %12, %95 : vector<18x10xi32>
    %c2_i32_32 = arith.constant 2 : i32
    %97 = arith.addi %c2_i32_32, %92 : i32
    %98 = vector.broadcast %97 : i32 to vector<18x10xi32>
    %99 = arith.cmpi eq, %13, %98 : vector<18x10xi32>
    %100 = arith.andi %96, %99 : vector<18x10xi1>
    %cst_33 = arith.constant 1.000000e+00 : f32
    %101 = vector.broadcast %cst_33 : f32 to vector<18x10xf32>
    %102 = arith.select %100, %101, %90 : vector<18x10xi1>, vector<18x10xf32>
    %c9_i32 = arith.constant 9 : i32
    %103 = vector.broadcast %c9_i32 : i32 to vector<18x10xi32>
    %104 = arith.cmpi eq, %12, %103 : vector<18x10xi32>
    %c8_i32_34 = arith.constant 8 : i32
    %105 = arith.addi %c8_i32_34, %94 : i32
    %106 = vector.broadcast %105 : i32 to vector<18x10xi32>
    %107 = arith.cmpi eq, %13, %106 : vector<18x10xi32>
    %108 = arith.andi %104, %107 : vector<18x10xi1>
    %cst_35 = arith.constant 1.000000e+00 : f32
    %109 = vector.broadcast %cst_35 : f32 to vector<18x10xf32>
    %110 = arith.select %108, %109, %102 : vector<18x10xi1>, vector<18x10xf32>
    %111 = arith.index_cast %15 : i32 to index
    %c4 = arith.constant 4 : index
    %112 = memref.load %arg1[%111, %c4] : memref<2x8xi32, #tpu.memory_space<smem>>
    %113 = arith.index_cast %15 : i32 to index
    %c4_36 = arith.constant 4 : index
    %114 = memref.load %arg2[%113, %c4_36] : memref<2x8xi32, #tpu.memory_space<smem>>
    %c10_i32 = arith.constant 10 : i32
    %115 = vector.broadcast %c10_i32 : i32 to vector<18x10xi32>
    %116 = arith.cmpi eq, %12, %115 : vector<18x10xi32>
    %c2_i32_37 = arith.constant 2 : i32
    %117 = arith.addi %c2_i32_37, %112 : i32
    %118 = vector.broadcast %117 : i32 to vector<18x10xi32>
    %119 = arith.cmpi eq, %13, %118 : vector<18x10xi32>
    %120 = arith.andi %116, %119 : vector<18x10xi1>
    %cst_38 = arith.constant 1.000000e+00 : f32
    %121 = vector.broadcast %cst_38 : f32 to vector<18x10xf32>
    %122 = arith.select %120, %121, %110 : vector<18x10xi1>, vector<18x10xf32>
    %c11_i32 = arith.constant 11 : i32
    %123 = vector.broadcast %c11_i32 : i32 to vector<18x10xi32>
    %124 = arith.cmpi eq, %12, %123 : vector<18x10xi32>
    %c8_i32_39 = arith.constant 8 : i32
    %125 = arith.addi %c8_i32_39, %114 : i32
    %126 = vector.broadcast %125 : i32 to vector<18x10xi32>
    %127 = arith.cmpi eq, %13, %126 : vector<18x10xi32>
    %128 = arith.andi %124, %127 : vector<18x10xi1>
    %cst_40 = arith.constant 1.000000e+00 : f32
    %129 = vector.broadcast %cst_40 : f32 to vector<18x10xf32>
    %130 = arith.select %128, %129, %122 : vector<18x10xi1>, vector<18x10xf32>
    %131 = arith.index_cast %15 : i32 to index
    %c5 = arith.constant 5 : index
    %132 = memref.load %arg1[%131, %c5] : memref<2x8xi32, #tpu.memory_space<smem>>
    %133 = arith.index_cast %15 : i32 to index
    %c5_41 = arith.constant 5 : index
    %134 = memref.load %arg2[%133, %c5_41] : memref<2x8xi32, #tpu.memory_space<smem>>
    %c12_i32 = arith.constant 12 : i32
    %135 = vector.broadcast %c12_i32 : i32 to vector<18x10xi32>
    %136 = arith.cmpi eq, %12, %135 : vector<18x10xi32>
    %c2_i32_42 = arith.constant 2 : i32
    %137 = arith.addi %c2_i32_42, %132 : i32
    %138 = vector.broadcast %137 : i32 to vector<18x10xi32>
    %139 = arith.cmpi eq, %13, %138 : vector<18x10xi32>
    %140 = arith.andi %136, %139 : vector<18x10xi1>
    %cst_43 = arith.constant 1.000000e+00 : f32
    %141 = vector.broadcast %cst_43 : f32 to vector<18x10xf32>
    %142 = arith.select %140, %141, %130 : vector<18x10xi1>, vector<18x10xf32>
    %c13_i32 = arith.constant 13 : i32
    %143 = vector.broadcast %c13_i32 : i32 to vector<18x10xi32>
    %144 = arith.cmpi eq, %12, %143 : vector<18x10xi32>
    %c8_i32_44 = arith.constant 8 : i32
    %145 = arith.addi %c8_i32_44, %134 : i32
    %146 = vector.broadcast %145 : i32 to vector<18x10xi32>
    %147 = arith.cmpi eq, %13, %146 : vector<18x10xi32>
    %148 = arith.andi %144, %147 : vector<18x10xi1>
    %cst_45 = arith.constant 1.000000e+00 : f32
    %149 = vector.broadcast %cst_45 : f32 to vector<18x10xf32>
    %150 = arith.select %148, %149, %142 : vector<18x10xi1>, vector<18x10xf32>
    %151 = arith.index_cast %15 : i32 to index
    %c6 = arith.constant 6 : index
    %152 = memref.load %arg1[%151, %c6] : memref<2x8xi32, #tpu.memory_space<smem>>
    %153 = arith.index_cast %15 : i32 to index
    %c6_46 = arith.constant 6 : index
    %154 = memref.load %arg2[%153, %c6_46] : memref<2x8xi32, #tpu.memory_space<smem>>
    %c14_i32 = arith.constant 14 : i32
    %155 = vector.broadcast %c14_i32 : i32 to vector<18x10xi32>
    %156 = arith.cmpi eq, %12, %155 : vector<18x10xi32>
    %c2_i32_47 = arith.constant 2 : i32
    %157 = arith.addi %c2_i32_47, %152 : i32
    %158 = vector.broadcast %157 : i32 to vector<18x10xi32>
    %159 = arith.cmpi eq, %13, %158 : vector<18x10xi32>
    %160 = arith.andi %156, %159 : vector<18x10xi1>
    %cst_48 = arith.constant 1.000000e+00 : f32
    %161 = vector.broadcast %cst_48 : f32 to vector<18x10xf32>
    %162 = arith.select %160, %161, %150 : vector<18x10xi1>, vector<18x10xf32>
    %c15_i32 = arith.constant 15 : i32
    %163 = vector.broadcast %c15_i32 : i32 to vector<18x10xi32>
    %164 = arith.cmpi eq, %12, %163 : vector<18x10xi32>
    %c8_i32_49 = arith.constant 8 : i32
    %165 = arith.addi %c8_i32_49, %154 : i32
    %166 = vector.broadcast %165 : i32 to vector<18x10xi32>
    %167 = arith.cmpi eq, %13, %166 : vector<18x10xi32>
    %168 = arith.andi %164, %167 : vector<18x10xi1>
    %cst_50 = arith.constant 1.000000e+00 : f32
    %169 = vector.broadcast %cst_50 : f32 to vector<18x10xf32>
    %170 = arith.select %168, %169, %162 : vector<18x10xi1>, vector<18x10xf32>
    %171 = arith.index_cast %15 : i32 to index
    %c7 = arith.constant 7 : index
    %172 = memref.load %arg1[%171, %c7] : memref<2x8xi32, #tpu.memory_space<smem>>
    %173 = arith.index_cast %15 : i32 to index
    %c7_51 = arith.constant 7 : index
    %174 = memref.load %arg2[%173, %c7_51] : memref<2x8xi32, #tpu.memory_space<smem>>
    %c16_i32 = arith.constant 16 : i32
    %175 = vector.broadcast %c16_i32 : i32 to vector<18x10xi32>
    %176 = arith.cmpi eq, %12, %175 : vector<18x10xi32>
    %c2_i32_52 = arith.constant 2 : i32
    %177 = arith.addi %c2_i32_52, %172 : i32
    %178 = vector.broadcast %177 : i32 to vector<18x10xi32>
    %179 = arith.cmpi eq, %13, %178 : vector<18x10xi32>
    %180 = arith.andi %176, %179 : vector<18x10xi1>
    %cst_53 = arith.constant 1.000000e+00 : f32
    %181 = vector.broadcast %cst_53 : f32 to vector<18x10xf32>
    %182 = arith.select %180, %181, %170 : vector<18x10xi1>, vector<18x10xf32>
    %c17_i32 = arith.constant 17 : i32
    %183 = vector.broadcast %c17_i32 : i32 to vector<18x10xi32>
    %184 = arith.cmpi eq, %12, %183 : vector<18x10xi32>
    %c8_i32_54 = arith.constant 8 : i32
    %185 = arith.addi %c8_i32_54, %174 : i32
    %186 = vector.broadcast %185 : i32 to vector<18x10xi32>
    %187 = arith.cmpi eq, %13, %186 : vector<18x10xi32>
    %188 = arith.andi %184, %187 : vector<18x10xi1>
    %cst_55 = arith.constant 1.000000e+00 : f32
    %189 = vector.broadcast %cst_55 : f32 to vector<18x10xf32>
    %190 = arith.select %188, %189, %182 : vector<18x10xi1>, vector<18x10xf32>
    %cst_56 = arith.constant dense<0.000000e+00> : vector<18x32xf32>
    %191 = tpu.matmul %190, %11, %cst_56 {dimension_numbers = #tpu.dot_dimension_numbers<[1], [0], [0], [1], [0, 0, 1, 1], [], []>} : vector<18x10xf32>, vector<10x32xf32>, vector<18x32xf32> -> vector<18x32xf32>
    %192 = tpu.iota {dimensions = array<i32: 0>} : vector<18x18xi32>
    %193 = tpu.iota {dimensions = array<i32: 1>} : vector<18x18xi32>
    %194 = arith.cmpi sge, %192, %193 : vector<18x18xi32>
    %195 = vector.extract_strided_slice %3 {offsets = [0, 0], sizes = [1, 32], strides = [1, 1]} : vector<2x32xf32> to vector<1x32xf32>
    %196 = arith.mulf %191, %191 : vector<18x32xf32>
    %cst_57 = arith.constant dense<0.000000e+00> : vector<18xf32>
    %197 = vector.multi_reduction <add>, %196, %cst_57 [1] : vector<18x32xf32> to vector<18xf32>
    %198 = vector.shape_cast %197 : vector<18xf32> to vector<18x1xf32>
    %cst_58 = arith.constant 3.200000e+01 : f32
    %199 = vector.broadcast %cst_58 : f32 to vector<18x1xf32>
    %200 = arith.divf %198, %199 : vector<18x1xf32>
    %cst_59 = arith.constant 9.99999974E-6 : f32
    %201 = vector.broadcast %cst_59 : f32 to vector<18x1xf32>
    %202 = arith.addf %200, %201 : vector<18x1xf32>
    %203 = math.rsqrt %202 : vector<18x1xf32>
    %204 = vector.broadcast %203 : vector<18x1xf32> to vector<18x32xf32>
    %205 = arith.mulf %191, %204 : vector<18x32xf32>
    %206 = vector.broadcast %195 : vector<1x32xf32> to vector<18x32xf32>
    %207 = arith.mulf %205, %206 : vector<18x32xf32>
    %c0_60 = arith.constant 0 : index
    %c0_61 = arith.constant 0 : index
    %c0_62 = arith.constant 0 : index
    %208 = vector.load %arg7[%c0_60, %c0_61, %c0_62] : memref<2x32x96xf32, #tpu.memory_space<vmem>>, vector<1x32x96xf32>
    %209 = vector.shape_cast %208 : vector<1x32x96xf32> to vector<32x96xf32>
    %cst_63 = arith.constant dense<0.000000e+00> : vector<18x96xf32>
    %210 = tpu.matmul %207, %209, %cst_63 {dimension_numbers = #tpu.dot_dimension_numbers<[1], [0], [0], [1], [0, 0, 1, 1], [], []>} : vector<18x32xf32>, vector<32x96xf32>, vector<18x96xf32> -> vector<18x96xf32>
    %211 = vector.extract_strided_slice %210 {offsets = [0, 0], sizes = [18, 8], strides = [1, 1]} : vector<18x96xf32> to vector<18x8xf32>
    %212 = vector.extract_strided_slice %211 {offsets = [0, 4], sizes = [18, 4], strides = [1, 1]} : vector<18x8xf32> to vector<18x4xf32>
    %cst_64 = arith.constant 0.000000e+00 : f32
    %213 = vector.broadcast %cst_64 : f32 to vector<18x4xf32>
    %214 = arith.subf %213, %212 : vector<18x4xf32>
    %215 = vector.extract_strided_slice %211 {offsets = [0, 0], sizes = [18, 4], strides = [1, 1]} : vector<18x8xf32> to vector<18x4xf32>
    %216 = tpu.concatenate %214, %215 in 1 : vector<18x4xf32>, vector<18x4xf32> -> vector<18x8xf32>
    %217 = arith.mulf %211, %0 : vector<18x8xf32>
    %218 = arith.mulf %216, %1 : vector<18x8xf32>
    %219 = arith.addf %217, %218 : vector<18x8xf32>
    %220 = vector.extract_strided_slice %210 {offsets = [0, 32], sizes = [18, 8], strides = [1, 1]} : vector<18x96xf32> to vector<18x8xf32>
    %221 = vector.extract_strided_slice %220 {offsets = [0, 4], sizes = [18, 4], strides = [1, 1]} : vector<18x8xf32> to vector<18x4xf32>
    %cst_65 = arith.constant 0.000000e+00 : f32
    %222 = vector.broadcast %cst_65 : f32 to vector<18x4xf32>
    %223 = arith.subf %222, %221 : vector<18x4xf32>
    %224 = vector.extract_strided_slice %220 {offsets = [0, 0], sizes = [18, 4], strides = [1, 1]} : vector<18x8xf32> to vector<18x4xf32>
    %225 = tpu.concatenate %223, %224 in 1 : vector<18x4xf32>, vector<18x4xf32> -> vector<18x8xf32>
    %226 = arith.mulf %220, %0 : vector<18x8xf32>
    %227 = arith.mulf %225, %1 : vector<18x8xf32>
    %228 = arith.addf %226, %227 : vector<18x8xf32>
    %229 = vector.extract_strided_slice %210 {offsets = [0, 64], sizes = [18, 8], strides = [1, 1]} : vector<18x96xf32> to vector<18x8xf32>
    %cst_66 = arith.constant dense<0.000000e+00> : vector<18x18xf32>
    %230 = tpu.matmul %219, %228, %cst_66 {dimension_numbers = #tpu.dot_dimension_numbers<[1], [1], [0], [0], [0, 0, 1, 0], [], []>} : vector<18x8xf32>, vector<18x8xf32>, vector<18x18xf32> -> vector<18x18xf32>
    %cst_67 = arith.constant 0.353553385 : f32
    %231 = vector.broadcast %cst_67 : f32 to vector<18x18xf32>
    %232 = arith.mulf %230, %231 : vector<18x18xf32>
    %cst_68 = arith.constant -1.000000e+30 : f32
    %233 = vector.broadcast %cst_68 : f32 to vector<18x18xf32>
    %234 = arith.select %194, %232, %233 : vector<18x18xi1>, vector<18x18xf32>
    %cst_69 = arith.constant dense<0xFF800000> : vector<18xf32>
    %235 = vector.multi_reduction <maximumf>, %234, %cst_69 [1] : vector<18x18xf32> to vector<18xf32>
    %236 = vector.shape_cast %235 : vector<18xf32> to vector<18x1xf32>
    %237 = vector.broadcast %236 : vector<18x1xf32> to vector<18x18xf32>
    %238 = arith.subf %234, %237 : vector<18x18xf32>
    %239 = math.exp %238 : vector<18x18xf32>
    %cst_70 = arith.constant dense<0.000000e+00> : vector<18xf32>
    %240 = vector.multi_reduction <add>, %239, %cst_70 [1] : vector<18x18xf32> to vector<18xf32>
    %241 = vector.shape_cast %240 : vector<18xf32> to vector<18x1xf32>
    %242 = tpu.reciprocal %241 {approx = true} : vector<18x1xf32> -> vector<18x1xf32>
    %243 = vector.broadcast %242 : vector<18x1xf32> to vector<18x18xf32>
    %244 = arith.mulf %239, %243 : vector<18x18xf32>
    %cst_71 = arith.constant dense<0.000000e+00> : vector<18x8xf32>
    %245 = tpu.matmul %244, %229, %cst_71 {dimension_numbers = #tpu.dot_dimension_numbers<[1], [0], [0], [1], [0, 0, 1, 1], [], []>} : vector<18x18xf32>, vector<18x8xf32>, vector<18x8xf32> -> vector<18x8xf32>
    %246 = vector.extract_strided_slice %210 {offsets = [0, 8], sizes = [18, 8], strides = [1, 1]} : vector<18x96xf32> to vector<18x8xf32>
    %247 = vector.extract_strided_slice %246 {offsets = [0, 4], sizes = [18, 4], strides = [1, 1]} : vector<18x8xf32> to vector<18x4xf32>
    %cst_72 = arith.constant 0.000000e+00 : f32
    %248 = vector.broadcast %cst_72 : f32 to vector<18x4xf32>
    %249 = arith.subf %248, %247 : vector<18x4xf32>
    %250 = vector.extract_strided_slice %246 {offsets = [0, 0], sizes = [18, 4], strides = [1, 1]} : vector<18x8xf32> to vector<18x4xf32>
    %251 = tpu.concatenate %249, %250 in 1 : vector<18x4xf32>, vector<18x4xf32> -> vector<18x8xf32>
    %252 = arith.mulf %246, %0 : vector<18x8xf32>
    %253 = arith.mulf %251, %1 : vector<18x8xf32>
    %254 = arith.addf %252, %253 : vector<18x8xf32>
    %255 = vector.extract_strided_slice %210 {offsets = [0, 40], sizes = [18, 8], strides = [1, 1]} : vector<18x96xf32> to vector<18x8xf32>
    %256 = vector.extract_strided_slice %255 {offsets = [0, 4], sizes = [18, 4], strides = [1, 1]} : vector<18x8xf32> to vector<18x4xf32>
    %cst_73 = arith.constant 0.000000e+00 : f32
    %257 = vector.broadcast %cst_73 : f32 to vector<18x4xf32>
    %258 = arith.subf %257, %256 : vector<18x4xf32>
    %259 = vector.extract_strided_slice %255 {offsets = [0, 0], sizes = [18, 4], strides = [1, 1]} : vector<18x8xf32> to vector<18x4xf32>
    %260 = tpu.concatenate %258, %259 in 1 : vector<18x4xf32>, vector<18x4xf32> -> vector<18x8xf32>
    %261 = arith.mulf %255, %0 : vector<18x8xf32>
    %262 = arith.mulf %260, %1 : vector<18x8xf32>
    %263 = arith.addf %261, %262 : vector<18x8xf32>
    %264 = vector.extract_strided_slice %210 {offsets = [0, 72], sizes = [18, 8], strides = [1, 1]} : vector<18x96xf32> to vector<18x8xf32>
    %cst_74 = arith.constant dense<0.000000e+00> : vector<18x18xf32>
    %265 = tpu.matmul %254, %263, %cst_74 {dimension_numbers = #tpu.dot_dimension_numbers<[1], [1], [0], [0], [0, 0, 1, 0], [], []>} : vector<18x8xf32>, vector<18x8xf32>, vector<18x18xf32> -> vector<18x18xf32>
    %cst_75 = arith.constant 0.353553385 : f32
    %266 = vector.broadcast %cst_75 : f32 to vector<18x18xf32>
    %267 = arith.mulf %265, %266 : vector<18x18xf32>
    %cst_76 = arith.constant -1.000000e+30 : f32
    %268 = vector.broadcast %cst_76 : f32 to vector<18x18xf32>
    %269 = arith.select %194, %267, %268 : vector<18x18xi1>, vector<18x18xf32>
    %cst_77 = arith.constant dense<0xFF800000> : vector<18xf32>
    %270 = vector.multi_reduction <maximumf>, %269, %cst_77 [1] : vector<18x18xf32> to vector<18xf32>
    %271 = vector.shape_cast %270 : vector<18xf32> to vector<18x1xf32>
    %272 = vector.broadcast %271 : vector<18x1xf32> to vector<18x18xf32>
    %273 = arith.subf %269, %272 : vector<18x18xf32>
    %274 = math.exp %273 : vector<18x18xf32>
    %cst_78 = arith.constant dense<0.000000e+00> : vector<18xf32>
    %275 = vector.multi_reduction <add>, %274, %cst_78 [1] : vector<18x18xf32> to vector<18xf32>
    %276 = vector.shape_cast %275 : vector<18xf32> to vector<18x1xf32>
    %277 = tpu.reciprocal %276 {approx = true} : vector<18x1xf32> -> vector<18x1xf32>
    %278 = vector.broadcast %277 : vector<18x1xf32> to vector<18x18xf32>
    %279 = arith.mulf %274, %278 : vector<18x18xf32>
    %cst_79 = arith.constant dense<0.000000e+00> : vector<18x8xf32>
    %280 = tpu.matmul %279, %264, %cst_79 {dimension_numbers = #tpu.dot_dimension_numbers<[1], [0], [0], [1], [0, 0, 1, 1], [], []>} : vector<18x18xf32>, vector<18x8xf32>, vector<18x8xf32> -> vector<18x8xf32>
    %281 = vector.extract_strided_slice %210 {offsets = [0, 16], sizes = [18, 8], strides = [1, 1]} : vector<18x96xf32> to vector<18x8xf32>
    %282 = vector.extract_strided_slice %281 {offsets = [0, 4], sizes = [18, 4], strides = [1, 1]} : vector<18x8xf32> to vector<18x4xf32>
    %cst_80 = arith.constant 0.000000e+00 : f32
    %283 = vector.broadcast %cst_80 : f32 to vector<18x4xf32>
    %284 = arith.subf %283, %282 : vector<18x4xf32>
    %285 = vector.extract_strided_slice %281 {offsets = [0, 0], sizes = [18, 4], strides = [1, 1]} : vector<18x8xf32> to vector<18x4xf32>
    %286 = tpu.concatenate %284, %285 in 1 : vector<18x4xf32>, vector<18x4xf32> -> vector<18x8xf32>
    %287 = arith.mulf %281, %0 : vector<18x8xf32>
    %288 = arith.mulf %286, %1 : vector<18x8xf32>
    %289 = arith.addf %287, %288 : vector<18x8xf32>
    %290 = vector.extract_strided_slice %210 {offsets = [0, 48], sizes = [18, 8], strides = [1, 1]} : vector<18x96xf32> to vector<18x8xf32>
    %291 = vector.extract_strided_slice %290 {offsets = [0, 4], sizes = [18, 4], strides = [1, 1]} : vector<18x8xf32> to vector<18x4xf32>
    %cst_81 = arith.constant 0.000000e+00 : f32
    %292 = vector.broadcast %cst_81 : f32 to vector<18x4xf32>
    %293 = arith.subf %292, %291 : vector<18x4xf32>
    %294 = vector.extract_strided_slice %290 {offsets = [0, 0], sizes = [18, 4], strides = [1, 1]} : vector<18x8xf32> to vector<18x4xf32>
    %295 = tpu.concatenate %293, %294 in 1 : vector<18x4xf32>, vector<18x4xf32> -> vector<18x8xf32>
    %296 = arith.mulf %290, %0 : vector<18x8xf32>
    %297 = arith.mulf %295, %1 : vector<18x8xf32>
    %298 = arith.addf %296, %297 : vector<18x8xf32>
    %299 = vector.extract_strided_slice %210 {offsets = [0, 80], sizes = [18, 8], strides = [1, 1]} : vector<18x96xf32> to vector<18x8xf32>
    %cst_82 = arith.constant dense<0.000000e+00> : vector<18x18xf32>
    %300 = tpu.matmul %289, %298, %cst_82 {dimension_numbers = #tpu.dot_dimension_numbers<[1], [1], [0], [0], [0, 0, 1, 0], [], []>} : vector<18x8xf32>, vector<18x8xf32>, vector<18x18xf32> -> vector<18x18xf32>
    %cst_83 = arith.constant 0.353553385 : f32
    %301 = vector.broadcast %cst_83 : f32 to vector<18x18xf32>
    %302 = arith.mulf %300, %301 : vector<18x18xf32>
    %cst_84 = arith.constant -1.000000e+30 : f32
    %303 = vector.broadcast %cst_84 : f32 to vector<18x18xf32>
    %304 = arith.select %194, %302, %303 : vector<18x18xi1>, vector<18x18xf32>
    %cst_85 = arith.constant dense<0xFF800000> : vector<18xf32>
    %305 = vector.multi_reduction <maximumf>, %304, %cst_85 [1] : vector<18x18xf32> to vector<18xf32>
    %306 = vector.shape_cast %305 : vector<18xf32> to vector<18x1xf32>
    %307 = vector.broadcast %306 : vector<18x1xf32> to vector<18x18xf32>
    %308 = arith.subf %304, %307 : vector<18x18xf32>
    %309 = math.exp %308 : vector<18x18xf32>
    %cst_86 = arith.constant dense<0.000000e+00> : vector<18xf32>
    %310 = vector.multi_reduction <add>, %309, %cst_86 [1] : vector<18x18xf32> to vector<18xf32>
    %311 = vector.shape_cast %310 : vector<18xf32> to vector<18x1xf32>
    %312 = tpu.reciprocal %311 {approx = true} : vector<18x1xf32> -> vector<18x1xf32>
    %313 = vector.broadcast %312 : vector<18x1xf32> to vector<18x18xf32>
    %314 = arith.mulf %309, %313 : vector<18x18xf32>
    %cst_87 = arith.constant dense<0.000000e+00> : vector<18x8xf32>
    %315 = tpu.matmul %314, %299, %cst_87 {dimension_numbers = #tpu.dot_dimension_numbers<[1], [0], [0], [1], [0, 0, 1, 1], [], []>} : vector<18x18xf32>, vector<18x8xf32>, vector<18x8xf32> -> vector<18x8xf32>
    %316 = vector.extract_strided_slice %210 {offsets = [0, 24], sizes = [18, 8], strides = [1, 1]} : vector<18x96xf32> to vector<18x8xf32>
    %317 = vector.extract_strided_slice %316 {offsets = [0, 4], sizes = [18, 4], strides = [1, 1]} : vector<18x8xf32> to vector<18x4xf32>
    %cst_88 = arith.constant 0.000000e+00 : f32
    %318 = vector.broadcast %cst_88 : f32 to vector<18x4xf32>
    %319 = arith.subf %318, %317 : vector<18x4xf32>
    %320 = vector.extract_strided_slice %316 {offsets = [0, 0], sizes = [18, 4], strides = [1, 1]} : vector<18x8xf32> to vector<18x4xf32>
    %321 = tpu.concatenate %319, %320 in 1 : vector<18x4xf32>, vector<18x4xf32> -> vector<18x8xf32>
    %322 = arith.mulf %316, %0 : vector<18x8xf32>
    %323 = arith.mulf %321, %1 : vector<18x8xf32>
    %324 = arith.addf %322, %323 : vector<18x8xf32>
    %325 = vector.extract_strided_slice %210 {offsets = [0, 56], sizes = [18, 8], strides = [1, 1]} : vector<18x96xf32> to vector<18x8xf32>
    %326 = vector.extract_strided_slice %325 {offsets = [0, 4], sizes = [18, 4], strides = [1, 1]} : vector<18x8xf32> to vector<18x4xf32>
    %cst_89 = arith.constant 0.000000e+00 : f32
    %327 = vector.broadcast %cst_89 : f32 to vector<18x4xf32>
    %328 = arith.subf %327, %326 : vector<18x4xf32>
    %329 = vector.extract_strided_slice %325 {offsets = [0, 0], sizes = [18, 4], strides = [1, 1]} : vector<18x8xf32> to vector<18x4xf32>
    %330 = tpu.concatenate %328, %329 in 1 : vector<18x4xf32>, vector<18x4xf32> -> vector<18x8xf32>
    %331 = arith.mulf %325, %0 : vector<18x8xf32>
    %332 = arith.mulf %330, %1 : vector<18x8xf32>
    %333 = arith.addf %331, %332 : vector<18x8xf32>
    %334 = vector.extract_strided_slice %210 {offsets = [0, 88], sizes = [18, 8], strides = [1, 1]} : vector<18x96xf32> to vector<18x8xf32>
    %cst_90 = arith.constant dense<0.000000e+00> : vector<18x18xf32>
    %335 = tpu.matmul %324, %333, %cst_90 {dimension_numbers = #tpu.dot_dimension_numbers<[1], [1], [0], [0], [0, 0, 1, 0], [], []>} : vector<18x8xf32>, vector<18x8xf32>, vector<18x18xf32> -> vector<18x18xf32>
    %cst_91 = arith.constant 0.353553385 : f32
    %336 = vector.broadcast %cst_91 : f32 to vector<18x18xf32>
    %337 = arith.mulf %335, %336 : vector<18x18xf32>
    %cst_92 = arith.constant -1.000000e+30 : f32
    %338 = vector.broadcast %cst_92 : f32 to vector<18x18xf32>
    %339 = arith.select %194, %337, %338 : vector<18x18xi1>, vector<18x18xf32>
    %cst_93 = arith.constant dense<0xFF800000> : vector<18xf32>
    %340 = vector.multi_reduction <maximumf>, %339, %cst_93 [1] : vector<18x18xf32> to vector<18xf32>
    %341 = vector.shape_cast %340 : vector<18xf32> to vector<18x1xf32>
    %342 = vector.broadcast %341 : vector<18x1xf32> to vector<18x18xf32>
    %343 = arith.subf %339, %342 : vector<18x18xf32>
    %344 = math.exp %343 : vector<18x18xf32>
    %cst_94 = arith.constant dense<0.000000e+00> : vector<18xf32>
    %345 = vector.multi_reduction <add>, %344, %cst_94 [1] : vector<18x18xf32> to vector<18xf32>
    %346 = vector.shape_cast %345 : vector<18xf32> to vector<18x1xf32>
    %347 = tpu.reciprocal %346 {approx = true} : vector<18x1xf32> -> vector<18x1xf32>
    %348 = vector.broadcast %347 : vector<18x1xf32> to vector<18x18xf32>
    %349 = arith.mulf %344, %348 : vector<18x18xf32>
    %cst_95 = arith.constant dense<0.000000e+00> : vector<18x8xf32>
    %350 = tpu.matmul %349, %334, %cst_95 {dimension_numbers = #tpu.dot_dimension_numbers<[1], [0], [0], [1], [0, 0, 1, 1], [], []>} : vector<18x18xf32>, vector<18x8xf32>, vector<18x8xf32> -> vector<18x8xf32>
    %351 = tpu.concatenate %245, %280, %315, %350 in 1 : vector<18x8xf32>, vector<18x8xf32>, vector<18x8xf32>, vector<18x8xf32> -> vector<18x32xf32>
    %c0_96 = arith.constant 0 : index
    %c0_97 = arith.constant 0 : index
    %c0_98 = arith.constant 0 : index
    %352 = vector.load %arg8[%c0_96, %c0_97, %c0_98] : memref<2x32x32xf32, #tpu.memory_space<vmem>>, vector<1x32x32xf32>
    %353 = vector.shape_cast %352 : vector<1x32x32xf32> to vector<32x32xf32>
    %cst_99 = arith.constant dense<0.000000e+00> : vector<18x32xf32>
    %354 = tpu.matmul %351, %353, %cst_99 {dimension_numbers = #tpu.dot_dimension_numbers<[1], [0], [0], [1], [0, 0, 1, 1], [], []>} : vector<18x32xf32>, vector<32x32xf32>, vector<18x32xf32> -> vector<18x32xf32>
    %355 = arith.addf %191, %354 : vector<18x32xf32>
    %356 = vector.extract_strided_slice %4 {offsets = [0, 0], sizes = [1, 32], strides = [1, 1]} : vector<2x32xf32> to vector<1x32xf32>
    %357 = arith.mulf %355, %355 : vector<18x32xf32>
    %cst_100 = arith.constant dense<0.000000e+00> : vector<18xf32>
    %358 = vector.multi_reduction <add>, %357, %cst_100 [1] : vector<18x32xf32> to vector<18xf32>
    %359 = vector.shape_cast %358 : vector<18xf32> to vector<18x1xf32>
    %cst_101 = arith.constant 3.200000e+01 : f32
    %360 = vector.broadcast %cst_101 : f32 to vector<18x1xf32>
    %361 = arith.divf %359, %360 : vector<18x1xf32>
    %cst_102 = arith.constant 9.99999974E-6 : f32
    %362 = vector.broadcast %cst_102 : f32 to vector<18x1xf32>
    %363 = arith.addf %361, %362 : vector<18x1xf32>
    %364 = math.rsqrt %363 : vector<18x1xf32>
    %365 = vector.broadcast %364 : vector<18x1xf32> to vector<18x32xf32>
    %366 = arith.mulf %355, %365 : vector<18x32xf32>
    %367 = vector.broadcast %356 : vector<1x32xf32> to vector<18x32xf32>
    %368 = arith.mulf %366, %367 : vector<18x32xf32>
    %c0_103 = arith.constant 0 : index
    %c0_104 = arith.constant 0 : index
    %c0_105 = arith.constant 0 : index
    %369 = vector.load %arg9[%c0_103, %c0_104, %c0_105] : memref<2x32x128xf32, #tpu.memory_space<vmem>>, vector<1x32x128xf32>
    %370 = vector.shape_cast %369 : vector<1x32x128xf32> to vector<32x128xf32>
    %cst_106 = arith.constant dense<0.000000e+00> : vector<18x128xf32>
    %371 = tpu.matmul %368, %370, %cst_106 {dimension_numbers = #tpu.dot_dimension_numbers<[1], [0], [0], [1], [0, 0, 1, 1], [], []>} : vector<18x32xf32>, vector<32x128xf32>, vector<18x128xf32> -> vector<18x128xf32>
    %372 = vector.extract_strided_slice %371 {offsets = [0, 0], sizes = [18, 64], strides = [1, 1]} : vector<18x128xf32> to vector<18x64xf32>
    %373 = vector.extract_strided_slice %371 {offsets = [0, 64], sizes = [18, 64], strides = [1, 1]} : vector<18x128xf32> to vector<18x64xf32>
    %374 = arith.negf %372 : vector<18x64xf32>
    %375 = math.exp %374 : vector<18x64xf32>
    %cst_107 = arith.constant 1.000000e+00 : f32
    %376 = vector.broadcast %cst_107 : f32 to vector<18x64xf32>
    %377 = arith.addf %376, %375 : vector<18x64xf32>
    %378 = arith.divf %376, %377 : vector<18x64xf32>
    %379 = arith.mulf %372, %378 : vector<18x64xf32>
    %380 = arith.mulf %379, %373 : vector<18x64xf32>
    %c0_108 = arith.constant 0 : index
    %c0_109 = arith.constant 0 : index
    %c0_110 = arith.constant 0 : index
    %381 = vector.load %arg10[%c0_108, %c0_109, %c0_110] : memref<2x64x32xf32, #tpu.memory_space<vmem>>, vector<1x64x32xf32>
    %382 = vector.shape_cast %381 : vector<1x64x32xf32> to vector<64x32xf32>
    %cst_111 = arith.constant dense<0.000000e+00> : vector<18x32xf32>
    %383 = tpu.matmul %380, %382, %cst_111 {dimension_numbers = #tpu.dot_dimension_numbers<[1], [0], [0], [1], [0, 0, 1, 1], [], []>} : vector<18x64xf32>, vector<64x32xf32>, vector<18x32xf32> -> vector<18x32xf32>
    %384 = arith.addf %355, %383 : vector<18x32xf32>
    %385 = vector.extract_strided_slice %3 {offsets = [1, 0], sizes = [1, 32], strides = [1, 1]} : vector<2x32xf32> to vector<1x32xf32>
    %386 = arith.mulf %384, %384 : vector<18x32xf32>
    %cst_112 = arith.constant dense<0.000000e+00> : vector<18xf32>
    %387 = vector.multi_reduction <add>, %386, %cst_112 [1] : vector<18x32xf32> to vector<18xf32>
    %388 = vector.shape_cast %387 : vector<18xf32> to vector<18x1xf32>
    %cst_113 = arith.constant 3.200000e+01 : f32
    %389 = vector.broadcast %cst_113 : f32 to vector<18x1xf32>
    %390 = arith.divf %388, %389 : vector<18x1xf32>
    %cst_114 = arith.constant 9.99999974E-6 : f32
    %391 = vector.broadcast %cst_114 : f32 to vector<18x1xf32>
    %392 = arith.addf %390, %391 : vector<18x1xf32>
    %393 = math.rsqrt %392 : vector<18x1xf32>
    %394 = vector.broadcast %393 : vector<18x1xf32> to vector<18x32xf32>
    %395 = arith.mulf %384, %394 : vector<18x32xf32>
    %396 = vector.broadcast %385 : vector<1x32xf32> to vector<18x32xf32>
    %397 = arith.mulf %395, %396 : vector<18x32xf32>
    %c1_115 = arith.constant 1 : index
    %c0_116 = arith.constant 0 : index
    %c0_117 = arith.constant 0 : index
    %398 = vector.load %arg7[%c1_115, %c0_116, %c0_117] : memref<2x32x96xf32, #tpu.memory_space<vmem>>, vector<1x32x96xf32>
    %399 = vector.shape_cast %398 : vector<1x32x96xf32> to vector<32x96xf32>
    %cst_118 = arith.constant dense<0.000000e+00> : vector<18x96xf32>
    %400 = tpu.matmul %397, %399, %cst_118 {dimension_numbers = #tpu.dot_dimension_numbers<[1], [0], [0], [1], [0, 0, 1, 1], [], []>} : vector<18x32xf32>, vector<32x96xf32>, vector<18x96xf32> -> vector<18x96xf32>
    %401 = vector.extract_strided_slice %400 {offsets = [0, 0], sizes = [18, 8], strides = [1, 1]} : vector<18x96xf32> to vector<18x8xf32>
    %402 = vector.extract_strided_slice %401 {offsets = [0, 4], sizes = [18, 4], strides = [1, 1]} : vector<18x8xf32> to vector<18x4xf32>
    %cst_119 = arith.constant 0.000000e+00 : f32
    %403 = vector.broadcast %cst_119 : f32 to vector<18x4xf32>
    %404 = arith.subf %403, %402 : vector<18x4xf32>
    %405 = vector.extract_strided_slice %401 {offsets = [0, 0], sizes = [18, 4], strides = [1, 1]} : vector<18x8xf32> to vector<18x4xf32>
    %406 = tpu.concatenate %404, %405 in 1 : vector<18x4xf32>, vector<18x4xf32> -> vector<18x8xf32>
    %407 = arith.mulf %401, %0 : vector<18x8xf32>
    %408 = arith.mulf %406, %1 : vector<18x8xf32>
    %409 = arith.addf %407, %408 : vector<18x8xf32>
    %410 = vector.extract_strided_slice %400 {offsets = [0, 32], sizes = [18, 8], strides = [1, 1]} : vector<18x96xf32> to vector<18x8xf32>
    %411 = vector.extract_strided_slice %410 {offsets = [0, 4], sizes = [18, 4], strides = [1, 1]} : vector<18x8xf32> to vector<18x4xf32>
    %cst_120 = arith.constant 0.000000e+00 : f32
    %412 = vector.broadcast %cst_120 : f32 to vector<18x4xf32>
    %413 = arith.subf %412, %411 : vector<18x4xf32>
    %414 = vector.extract_strided_slice %410 {offsets = [0, 0], sizes = [18, 4], strides = [1, 1]} : vector<18x8xf32> to vector<18x4xf32>
    %415 = tpu.concatenate %413, %414 in 1 : vector<18x4xf32>, vector<18x4xf32> -> vector<18x8xf32>
    %416 = arith.mulf %410, %0 : vector<18x8xf32>
    %417 = arith.mulf %415, %1 : vector<18x8xf32>
    %418 = arith.addf %416, %417 : vector<18x8xf32>
    %419 = vector.extract_strided_slice %400 {offsets = [0, 64], sizes = [18, 8], strides = [1, 1]} : vector<18x96xf32> to vector<18x8xf32>
    %cst_121 = arith.constant dense<0.000000e+00> : vector<18x18xf32>
    %420 = tpu.matmul %409, %418, %cst_121 {dimension_numbers = #tpu.dot_dimension_numbers<[1], [1], [0], [0], [0, 0, 1, 0], [], []>} : vector<18x8xf32>, vector<18x8xf32>, vector<18x18xf32> -> vector<18x18xf32>
    %cst_122 = arith.constant 0.353553385 : f32
    %421 = vector.broadcast %cst_122 : f32 to vector<18x18xf32>
    %422 = arith.mulf %420, %421 : vector<18x18xf32>
    %cst_123 = arith.constant -1.000000e+30 : f32
    %423 = vector.broadcast %cst_123 : f32 to vector<18x18xf32>
    %424 = arith.select %194, %422, %423 : vector<18x18xi1>, vector<18x18xf32>
    %cst_124 = arith.constant dense<0xFF800000> : vector<18xf32>
    %425 = vector.multi_reduction <maximumf>, %424, %cst_124 [1] : vector<18x18xf32> to vector<18xf32>
    %426 = vector.shape_cast %425 : vector<18xf32> to vector<18x1xf32>
    %427 = vector.broadcast %426 : vector<18x1xf32> to vector<18x18xf32>
    %428 = arith.subf %424, %427 : vector<18x18xf32>
    %429 = math.exp %428 : vector<18x18xf32>
    %cst_125 = arith.constant dense<0.000000e+00> : vector<18xf32>
    %430 = vector.multi_reduction <add>, %429, %cst_125 [1] : vector<18x18xf32> to vector<18xf32>
    %431 = vector.shape_cast %430 : vector<18xf32> to vector<18x1xf32>
    %432 = tpu.reciprocal %431 {approx = true} : vector<18x1xf32> -> vector<18x1xf32>
    %433 = vector.broadcast %432 : vector<18x1xf32> to vector<18x18xf32>
    %434 = arith.mulf %429, %433 : vector<18x18xf32>
    %cst_126 = arith.constant dense<0.000000e+00> : vector<18x8xf32>
    %435 = tpu.matmul %434, %419, %cst_126 {dimension_numbers = #tpu.dot_dimension_numbers<[1], [0], [0], [1], [0, 0, 1, 1], [], []>} : vector<18x18xf32>, vector<18x8xf32>, vector<18x8xf32> -> vector<18x8xf32>
    %436 = vector.extract_strided_slice %400 {offsets = [0, 8], sizes = [18, 8], strides = [1, 1]} : vector<18x96xf32> to vector<18x8xf32>
    %437 = vector.extract_strided_slice %436 {offsets = [0, 4], sizes = [18, 4], strides = [1, 1]} : vector<18x8xf32> to vector<18x4xf32>
    %cst_127 = arith.constant 0.000000e+00 : f32
    %438 = vector.broadcast %cst_127 : f32 to vector<18x4xf32>
    %439 = arith.subf %438, %437 : vector<18x4xf32>
    %440 = vector.extract_strided_slice %436 {offsets = [0, 0], sizes = [18, 4], strides = [1, 1]} : vector<18x8xf32> to vector<18x4xf32>
    %441 = tpu.concatenate %439, %440 in 1 : vector<18x4xf32>, vector<18x4xf32> -> vector<18x8xf32>
    %442 = arith.mulf %436, %0 : vector<18x8xf32>
    %443 = arith.mulf %441, %1 : vector<18x8xf32>
    %444 = arith.addf %442, %443 : vector<18x8xf32>
    %445 = vector.extract_strided_slice %400 {offsets = [0, 40], sizes = [18, 8], strides = [1, 1]} : vector<18x96xf32> to vector<18x8xf32>
    %446 = vector.extract_strided_slice %445 {offsets = [0, 4], sizes = [18, 4], strides = [1, 1]} : vector<18x8xf32> to vector<18x4xf32>
    %cst_128 = arith.constant 0.000000e+00 : f32
    %447 = vector.broadcast %cst_128 : f32 to vector<18x4xf32>
    %448 = arith.subf %447, %446 : vector<18x4xf32>
    %449 = vector.extract_strided_slice %445 {offsets = [0, 0], sizes = [18, 4], strides = [1, 1]} : vector<18x8xf32> to vector<18x4xf32>
    %450 = tpu.concatenate %448, %449 in 1 : vector<18x4xf32>, vector<18x4xf32> -> vector<18x8xf32>
    %451 = arith.mulf %445, %0 : vector<18x8xf32>
    %452 = arith.mulf %450, %1 : vector<18x8xf32>
    %453 = arith.addf %451, %452 : vector<18x8xf32>
    %454 = vector.extract_strided_slice %400 {offsets = [0, 72], sizes = [18, 8], strides = [1, 1]} : vector<18x96xf32> to vector<18x8xf32>
    %cst_129 = arith.constant dense<0.000000e+00> : vector<18x18xf32>
    %455 = tpu.matmul %444, %453, %cst_129 {dimension_numbers = #tpu.dot_dimension_numbers<[1], [1], [0], [0], [0, 0, 1, 0], [], []>} : vector<18x8xf32>, vector<18x8xf32>, vector<18x18xf32> -> vector<18x18xf32>
    %cst_130 = arith.constant 0.353553385 : f32
    %456 = vector.broadcast %cst_130 : f32 to vector<18x18xf32>
    %457 = arith.mulf %455, %456 : vector<18x18xf32>
    %cst_131 = arith.constant -1.000000e+30 : f32
    %458 = vector.broadcast %cst_131 : f32 to vector<18x18xf32>
    %459 = arith.select %194, %457, %458 : vector<18x18xi1>, vector<18x18xf32>
    %cst_132 = arith.constant dense<0xFF800000> : vector<18xf32>
    %460 = vector.multi_reduction <maximumf>, %459, %cst_132 [1] : vector<18x18xf32> to vector<18xf32>
    %461 = vector.shape_cast %460 : vector<18xf32> to vector<18x1xf32>
    %462 = vector.broadcast %461 : vector<18x1xf32> to vector<18x18xf32>
    %463 = arith.subf %459, %462 : vector<18x18xf32>
    %464 = math.exp %463 : vector<18x18xf32>
    %cst_133 = arith.constant dense<0.000000e+00> : vector<18xf32>
    %465 = vector.multi_reduction <add>, %464, %cst_133 [1] : vector<18x18xf32> to vector<18xf32>
    %466 = vector.shape_cast %465 : vector<18xf32> to vector<18x1xf32>
    %467 = tpu.reciprocal %466 {approx = true} : vector<18x1xf32> -> vector<18x1xf32>
    %468 = vector.broadcast %467 : vector<18x1xf32> to vector<18x18xf32>
    %469 = arith.mulf %464, %468 : vector<18x18xf32>
    %cst_134 = arith.constant dense<0.000000e+00> : vector<18x8xf32>
    %470 = tpu.matmul %469, %454, %cst_134 {dimension_numbers = #tpu.dot_dimension_numbers<[1], [0], [0], [1], [0, 0, 1, 1], [], []>} : vector<18x18xf32>, vector<18x8xf32>, vector<18x8xf32> -> vector<18x8xf32>
    %471 = vector.extract_strided_slice %400 {offsets = [0, 16], sizes = [18, 8], strides = [1, 1]} : vector<18x96xf32> to vector<18x8xf32>
    %472 = vector.extract_strided_slice %471 {offsets = [0, 4], sizes = [18, 4], strides = [1, 1]} : vector<18x8xf32> to vector<18x4xf32>
    %cst_135 = arith.constant 0.000000e+00 : f32
    %473 = vector.broadcast %cst_135 : f32 to vector<18x4xf32>
    %474 = arith.subf %473, %472 : vector<18x4xf32>
    %475 = vector.extract_strided_slice %471 {offsets = [0, 0], sizes = [18, 4], strides = [1, 1]} : vector<18x8xf32> to vector<18x4xf32>
    %476 = tpu.concatenate %474, %475 in 1 : vector<18x4xf32>, vector<18x4xf32> -> vector<18x8xf32>
    %477 = arith.mulf %471, %0 : vector<18x8xf32>
    %478 = arith.mulf %476, %1 : vector<18x8xf32>
    %479 = arith.addf %477, %478 : vector<18x8xf32>
    %480 = vector.extract_strided_slice %400 {offsets = [0, 48], sizes = [18, 8], strides = [1, 1]} : vector<18x96xf32> to vector<18x8xf32>
    %481 = vector.extract_strided_slice %480 {offsets = [0, 4], sizes = [18, 4], strides = [1, 1]} : vector<18x8xf32> to vector<18x4xf32>
    %cst_136 = arith.constant 0.000000e+00 : f32
    %482 = vector.broadcast %cst_136 : f32 to vector<18x4xf32>
    %483 = arith.subf %482, %481 : vector<18x4xf32>
    %484 = vector.extract_strided_slice %480 {offsets = [0, 0], sizes = [18, 4], strides = [1, 1]} : vector<18x8xf32> to vector<18x4xf32>
    %485 = tpu.concatenate %483, %484 in 1 : vector<18x4xf32>, vector<18x4xf32> -> vector<18x8xf32>
    %486 = arith.mulf %480, %0 : vector<18x8xf32>
    %487 = arith.mulf %485, %1 : vector<18x8xf32>
    %488 = arith.addf %486, %487 : vector<18x8xf32>
    %489 = vector.extract_strided_slice %400 {offsets = [0, 80], sizes = [18, 8], strides = [1, 1]} : vector<18x96xf32> to vector<18x8xf32>
    %cst_137 = arith.constant dense<0.000000e+00> : vector<18x18xf32>
    %490 = tpu.matmul %479, %488, %cst_137 {dimension_numbers = #tpu.dot_dimension_numbers<[1], [1], [0], [0], [0, 0, 1, 0], [], []>} : vector<18x8xf32>, vector<18x8xf32>, vector<18x18xf32> -> vector<18x18xf32>
    %cst_138 = arith.constant 0.353553385 : f32
    %491 = vector.broadcast %cst_138 : f32 to vector<18x18xf32>
    %492 = arith.mulf %490, %491 : vector<18x18xf32>
    %cst_139 = arith.constant -1.000000e+30 : f32
    %493 = vector.broadcast %cst_139 : f32 to vector<18x18xf32>
    %494 = arith.select %194, %492, %493 : vector<18x18xi1>, vector<18x18xf32>
    %cst_140 = arith.constant dense<0xFF800000> : vector<18xf32>
    %495 = vector.multi_reduction <maximumf>, %494, %cst_140 [1] : vector<18x18xf32> to vector<18xf32>
    %496 = vector.shape_cast %495 : vector<18xf32> to vector<18x1xf32>
    %497 = vector.broadcast %496 : vector<18x1xf32> to vector<18x18xf32>
    %498 = arith.subf %494, %497 : vector<18x18xf32>
    %499 = math.exp %498 : vector<18x18xf32>
    %cst_141 = arith.constant dense<0.000000e+00> : vector<18xf32>
    %500 = vector.multi_reduction <add>, %499, %cst_141 [1] : vector<18x18xf32> to vector<18xf32>
    %501 = vector.shape_cast %500 : vector<18xf32> to vector<18x1xf32>
    %502 = tpu.reciprocal %501 {approx = true} : vector<18x1xf32> -> vector<18x1xf32>
    %503 = vector.broadcast %502 : vector<18x1xf32> to vector<18x18xf32>
    %504 = arith.mulf %499, %503 : vector<18x18xf32>
    %cst_142 = arith.constant dense<0.000000e+00> : vector<18x8xf32>
    %505 = tpu.matmul %504, %489, %cst_142 {dimension_numbers = #tpu.dot_dimension_numbers<[1], [0], [0], [1], [0, 0, 1, 1], [], []>} : vector<18x18xf32>, vector<18x8xf32>, vector<18x8xf32> -> vector<18x8xf32>
    %506 = vector.extract_strided_slice %400 {offsets = [0, 24], sizes = [18, 8], strides = [1, 1]} : vector<18x96xf32> to vector<18x8xf32>
    %507 = vector.extract_strided_slice %506 {offsets = [0, 4], sizes = [18, 4], strides = [1, 1]} : vector<18x8xf32> to vector<18x4xf32>
    %cst_143 = arith.constant 0.000000e+00 : f32
    %508 = vector.broadcast %cst_143 : f32 to vector<18x4xf32>
    %509 = arith.subf %508, %507 : vector<18x4xf32>
    %510 = vector.extract_strided_slice %506 {offsets = [0, 0], sizes = [18, 4], strides = [1, 1]} : vector<18x8xf32> to vector<18x4xf32>
    %511 = tpu.concatenate %509, %510 in 1 : vector<18x4xf32>, vector<18x4xf32> -> vector<18x8xf32>
    %512 = arith.mulf %506, %0 : vector<18x8xf32>
    %513 = arith.mulf %511, %1 : vector<18x8xf32>
    %514 = arith.addf %512, %513 : vector<18x8xf32>
    %515 = vector.extract_strided_slice %400 {offsets = [0, 56], sizes = [18, 8], strides = [1, 1]} : vector<18x96xf32> to vector<18x8xf32>
    %516 = vector.extract_strided_slice %515 {offsets = [0, 4], sizes = [18, 4], strides = [1, 1]} : vector<18x8xf32> to vector<18x4xf32>
    %cst_144 = arith.constant 0.000000e+00 : f32
    %517 = vector.broadcast %cst_144 : f32 to vector<18x4xf32>
    %518 = arith.subf %517, %516 : vector<18x4xf32>
    %519 = vector.extract_strided_slice %515 {offsets = [0, 0], sizes = [18, 4], strides = [1, 1]} : vector<18x8xf32> to vector<18x4xf32>
    %520 = tpu.concatenate %518, %519 in 1 : vector<18x4xf32>, vector<18x4xf32> -> vector<18x8xf32>
    %521 = arith.mulf %515, %0 : vector<18x8xf32>
    %522 = arith.mulf %520, %1 : vector<18x8xf32>
    %523 = arith.addf %521, %522 : vector<18x8xf32>
    %524 = vector.extract_strided_slice %400 {offsets = [0, 88], sizes = [18, 8], strides = [1, 1]} : vector<18x96xf32> to vector<18x8xf32>
    %cst_145 = arith.constant dense<0.000000e+00> : vector<18x18xf32>
    %525 = tpu.matmul %514, %523, %cst_145 {dimension_numbers = #tpu.dot_dimension_numbers<[1], [1], [0], [0], [0, 0, 1, 0], [], []>} : vector<18x8xf32>, vector<18x8xf32>, vector<18x18xf32> -> vector<18x18xf32>
    %cst_146 = arith.constant 0.353553385 : f32
    %526 = vector.broadcast %cst_146 : f32 to vector<18x18xf32>
    %527 = arith.mulf %525, %526 : vector<18x18xf32>
    %cst_147 = arith.constant -1.000000e+30 : f32
    %528 = vector.broadcast %cst_147 : f32 to vector<18x18xf32>
    %529 = arith.select %194, %527, %528 : vector<18x18xi1>, vector<18x18xf32>
    %cst_148 = arith.constant dense<0xFF800000> : vector<18xf32>
    %530 = vector.multi_reduction <maximumf>, %529, %cst_148 [1] : vector<18x18xf32> to vector<18xf32>
    %531 = vector.shape_cast %530 : vector<18xf32> to vector<18x1xf32>
    %532 = vector.broadcast %531 : vector<18x1xf32> to vector<18x18xf32>
    %533 = arith.subf %529, %532 : vector<18x18xf32>
    %534 = math.exp %533 : vector<18x18xf32>
    %cst_149 = arith.constant dense<0.000000e+00> : vector<18xf32>
    %535 = vector.multi_reduction <add>, %534, %cst_149 [1] : vector<18x18xf32> to vector<18xf32>
    %536 = vector.shape_cast %535 : vector<18xf32> to vector<18x1xf32>
    %537 = tpu.reciprocal %536 {approx = true} : vector<18x1xf32> -> vector<18x1xf32>
    %538 = vector.broadcast %537 : vector<18x1xf32> to vector<18x18xf32>
    %539 = arith.mulf %534, %538 : vector<18x18xf32>
    %cst_150 = arith.constant dense<0.000000e+00> : vector<18x8xf32>
    %540 = tpu.matmul %539, %524, %cst_150 {dimension_numbers = #tpu.dot_dimension_numbers<[1], [0], [0], [1], [0, 0, 1, 1], [], []>} : vector<18x18xf32>, vector<18x8xf32>, vector<18x8xf32> -> vector<18x8xf32>
    %541 = tpu.concatenate %435, %470, %505, %540 in 1 : vector<18x8xf32>, vector<18x8xf32>, vector<18x8xf32>, vector<18x8xf32> -> vector<18x32xf32>
    %c1_151 = arith.constant 1 : index
    %c0_152 = arith.constant 0 : index
    %c0_153 = arith.constant 0 : index
    %542 = vector.load %arg8[%c1_151, %c0_152, %c0_153] : memref<2x32x32xf32, #tpu.memory_space<vmem>>, vector<1x32x32xf32>
    %543 = vector.shape_cast %542 : vector<1x32x32xf32> to vector<32x32xf32>
    %cst_154 = arith.constant dense<0.000000e+00> : vector<18x32xf32>
    %544 = tpu.matmul %541, %543, %cst_154 {dimension_numbers = #tpu.dot_dimension_numbers<[1], [0], [0], [1], [0, 0, 1, 1], [], []>} : vector<18x32xf32>, vector<32x32xf32>, vector<18x32xf32> -> vector<18x32xf32>
    %545 = arith.addf %384, %544 : vector<18x32xf32>
    %546 = vector.extract_strided_slice %4 {offsets = [1, 0], sizes = [1, 32], strides = [1, 1]} : vector<2x32xf32> to vector<1x32xf32>
    %547 = arith.mulf %545, %545 : vector<18x32xf32>
    %cst_155 = arith.constant dense<0.000000e+00> : vector<18xf32>
    %548 = vector.multi_reduction <add>, %547, %cst_155 [1] : vector<18x32xf32> to vector<18xf32>
    %549 = vector.shape_cast %548 : vector<18xf32> to vector<18x1xf32>
    %cst_156 = arith.constant 3.200000e+01 : f32
    %550 = vector.broadcast %cst_156 : f32 to vector<18x1xf32>
    %551 = arith.divf %549, %550 : vector<18x1xf32>
    %cst_157 = arith.constant 9.99999974E-6 : f32
    %552 = vector.broadcast %cst_157 : f32 to vector<18x1xf32>
    %553 = arith.addf %551, %552 : vector<18x1xf32>
    %554 = math.rsqrt %553 : vector<18x1xf32>
    %555 = vector.broadcast %554 : vector<18x1xf32> to vector<18x32xf32>
    %556 = arith.mulf %545, %555 : vector<18x32xf32>
    %557 = vector.broadcast %546 : vector<1x32xf32> to vector<18x32xf32>
    %558 = arith.mulf %556, %557 : vector<18x32xf32>
    %c1_158 = arith.constant 1 : index
    %c0_159 = arith.constant 0 : index
    %c0_160 = arith.constant 0 : index
    %559 = vector.load %arg9[%c1_158, %c0_159, %c0_160] : memref<2x32x128xf32, #tpu.memory_space<vmem>>, vector<1x32x128xf32>
    %560 = vector.shape_cast %559 : vector<1x32x128xf32> to vector<32x128xf32>
    %cst_161 = arith.constant dense<0.000000e+00> : vector<18x128xf32>
    %561 = tpu.matmul %558, %560, %cst_161 {dimension_numbers = #tpu.dot_dimension_numbers<[1], [0], [0], [1], [0, 0, 1, 1], [], []>} : vector<18x32xf32>, vector<32x128xf32>, vector<18x128xf32> -> vector<18x128xf32>
    %562 = vector.extract_strided_slice %561 {offsets = [0, 0], sizes = [18, 64], strides = [1, 1]} : vector<18x128xf32> to vector<18x64xf32>
    %563 = vector.extract_strided_slice %561 {offsets = [0, 64], sizes = [18, 64], strides = [1, 1]} : vector<18x128xf32> to vector<18x64xf32>
    %564 = arith.negf %562 : vector<18x64xf32>
    %565 = math.exp %564 : vector<18x64xf32>
    %cst_162 = arith.constant 1.000000e+00 : f32
    %566 = vector.broadcast %cst_162 : f32 to vector<18x64xf32>
    %567 = arith.addf %566, %565 : vector<18x64xf32>
    %568 = arith.divf %566, %567 : vector<18x64xf32>
    %569 = arith.mulf %562, %568 : vector<18x64xf32>
    %570 = arith.mulf %569, %563 : vector<18x64xf32>
    %c1_163 = arith.constant 1 : index
    %c0_164 = arith.constant 0 : index
    %c0_165 = arith.constant 0 : index
    %571 = vector.load %arg10[%c1_163, %c0_164, %c0_165] : memref<2x64x32xf32, #tpu.memory_space<vmem>>, vector<1x64x32xf32>
    %572 = vector.shape_cast %571 : vector<1x64x32xf32> to vector<64x32xf32>
    %cst_166 = arith.constant dense<0.000000e+00> : vector<18x32xf32>
    %573 = tpu.matmul %570, %572, %cst_166 {dimension_numbers = #tpu.dot_dimension_numbers<[1], [0], [0], [1], [0, 0, 1, 1], [], []>} : vector<18x64xf32>, vector<64x32xf32>, vector<18x32xf32> -> vector<18x32xf32>
    %574 = arith.addf %545, %573 : vector<18x32xf32>
    %575 = arith.mulf %574, %574 : vector<18x32xf32>
    %cst_167 = arith.constant dense<0.000000e+00> : vector<18xf32>
    %576 = vector.multi_reduction <add>, %575, %cst_167 [1] : vector<18x32xf32> to vector<18xf32>
    %577 = vector.shape_cast %576 : vector<18xf32> to vector<18x1xf32>
    %cst_168 = arith.constant 3.200000e+01 : f32
    %578 = vector.broadcast %cst_168 : f32 to vector<18x1xf32>
    %579 = arith.divf %577, %578 : vector<18x1xf32>
    %cst_169 = arith.constant 9.99999974E-6 : f32
    %580 = vector.broadcast %cst_169 : f32 to vector<18x1xf32>
    %581 = arith.addf %579, %580 : vector<18x1xf32>
    %582 = math.rsqrt %581 : vector<18x1xf32>
    %583 = vector.broadcast %582 : vector<18x1xf32> to vector<18x32xf32>
    %584 = arith.mulf %574, %583 : vector<18x32xf32>
    %585 = vector.broadcast %5 : vector<1x32xf32> to vector<18x32xf32>
    %586 = arith.mulf %584, %585 : vector<18x32xf32>
    %587 = tpu.iota {dimensions = array<i32: 0>} : vector<9x18xi32>
    %588 = tpu.iota {dimensions = array<i32: 1>} : vector<9x18xi32>
    %c2_i32_170 = arith.constant 2 : i32
    %589 = vector.broadcast %c2_i32_170 : i32 to vector<9x18xi32>
    %590 = arith.muli %589, %587 : vector<9x18xi32>
    %c1_i32_171 = arith.constant 1 : i32
    %591 = vector.broadcast %c1_i32_171 : i32 to vector<9x18xi32>
    %592 = arith.addi %590, %591 : vector<9x18xi32>
    %593 = arith.cmpi eq, %588, %592 : vector<9x18xi32>
    %594 = arith.extui %593 : vector<9x18xi1> to vector<9x18xi32>
    %595 = arith.sitofp %594 : vector<9x18xi32> to vector<9x18xf32>
    %c0_172 = arith.constant 0 : index
    %c0_173 = arith.constant 0 : index
    %596 = vector.load %arg11[%c0_172, %c0_173] : memref<32x128xf32, #tpu.memory_space<vmem>>, vector<32x128xf32>
    %cst_174 = arith.constant dense<0.000000e+00> : vector<9x32xf32>
    %597 = tpu.matmul %595, %586, %cst_174 {dimension_numbers = #tpu.dot_dimension_numbers<[1], [0], [0], [1], [0, 0, 1, 1], [], []>} : vector<9x18xf32>, vector<18x32xf32>, vector<9x32xf32> -> vector<9x32xf32>
    %cst_175 = arith.constant dense<0.000000e+00> : vector<9x128xf32>
    %598 = tpu.matmul %597, %596, %cst_175 {dimension_numbers = #tpu.dot_dimension_numbers<[1], [0], [0], [1], [0, 0, 1, 1], [], []>} : vector<9x32xf32>, vector<32x128xf32>, vector<9x128xf32> -> vector<9x128xf32>
    %c0_176 = arith.constant 0 : index
    %c0_177 = arith.constant 0 : index
    %c0_178 = arith.constant 0 : index
    %599 = vector.load %arg12[%c0_176, %c0_177, %c0_178] : memref<1x9x128xf32, #tpu.memory_space<vmem>>, vector<1x9x128xf32>
    %600 = vector.shape_cast %599 : vector<1x9x128xf32> to vector<9x128xf32>
    %601 = vector.shape_cast %598 : vector<9x128xf32> to vector<1x9x128xf32>
    tpu.vector_store %arg12[%c0_176, %c0_177, %c0_178], %601 {strides = array<i32>} : memref<1x9x128xf32, #tpu.memory_space<vmem>>, vector<1x9x128xf32>,
    return
  }
  func.func @transform_0(%arg0: i32, %arg1: memref<2x8xi32, #tpu.memory_space<smem>>, %arg2: memref<2x8xi32, #tpu.memory_space<smem>>) -> (i32, i32) {
    %c0_i32 = arith.constant 0 : i32
    %c0_i32_0 = arith.constant 0 : i32
    %c0_i32_1 = arith.constant 0 : i32
    return %c0_i32, %c0_i32_0 : i32, i32
  }
  func.func @transform_1(%arg0: i32, %arg1: memref<2x8xi32, #tpu.memory_space<smem>>, %arg2: memref<2x8xi32, #tpu.memory_space<smem>>) -> (i32, i32) {
    %c0_i32 = arith.constant 0 : i32
    %c0_i32_0 = arith.constant 0 : i32
    %c0_i32_1 = arith.constant 0 : i32
    return %c0_i32, %c0_i32_0 : i32, i32
  }
  func.func @transform_2(%arg0: i32, %arg1: memref<2x8xi32, #tpu.memory_space<smem>>, %arg2: memref<2x8xi32, #tpu.memory_space<smem>>) -> (i32, i32) {
    %c0_i32 = arith.constant 0 : i32
    %c0_i32_0 = arith.constant 0 : i32
    %c0_i32_1 = arith.constant 0 : i32
    return %c0_i32, %c0_i32_0 : i32, i32
  }
  func.func @transform_3(%arg0: i32, %arg1: memref<2x8xi32, #tpu.memory_space<smem>>, %arg2: memref<2x8xi32, #tpu.memory_space<smem>>) -> (i32, i32) {
    %c0_i32 = arith.constant 0 : i32
    %c0_i32_0 = arith.constant 0 : i32
    %c0_i32_1 = arith.constant 0 : i32
    return %c0_i32, %c0_i32_0 : i32, i32
  }
  func.func @transform_4(%arg0: i32, %arg1: memref<2x8xi32, #tpu.memory_space<smem>>, %arg2: memref<2x8xi32, #tpu.memory_space<smem>>) -> (i32, i32, i32) {
    %c0_i32 = arith.constant 0 : i32
    %c0_i32_0 = arith.constant 0 : i32
    %c0_i32_1 = arith.constant 0 : i32
    %c0_i32_2 = arith.constant 0 : i32
    return %c0_i32, %c0_i32_0, %c0_i32_1 : i32, i32, i32
  }
  func.func @transform_5(%arg0: i32, %arg1: memref<2x8xi32, #tpu.memory_space<smem>>, %arg2: memref<2x8xi32, #tpu.memory_space<smem>>) -> (i32, i32, i32) {
    %c0_i32 = arith.constant 0 : i32
    %c0_i32_0 = arith.constant 0 : i32
    %c0_i32_1 = arith.constant 0 : i32
    %c0_i32_2 = arith.constant 0 : i32
    return %c0_i32, %c0_i32_0, %c0_i32_1 : i32, i32, i32
  }
  func.func @transform_6(%arg0: i32, %arg1: memref<2x8xi32, #tpu.memory_space<smem>>, %arg2: memref<2x8xi32, #tpu.memory_space<smem>>) -> (i32, i32, i32) {
    %c0_i32 = arith.constant 0 : i32
    %c0_i32_0 = arith.constant 0 : i32
    %c0_i32_1 = arith.constant 0 : i32
    %c0_i32_2 = arith.constant 0 : i32
    return %c0_i32, %c0_i32_0, %c0_i32_1 : i32, i32, i32
  }
  func.func @transform_7(%arg0: i32, %arg1: memref<2x8xi32, #tpu.memory_space<smem>>, %arg2: memref<2x8xi32, #tpu.memory_space<smem>>) -> (i32, i32, i32) {
    %c0_i32 = arith.constant 0 : i32
    %c0_i32_0 = arith.constant 0 : i32
    %c0_i32_1 = arith.constant 0 : i32
    %c0_i32_2 = arith.constant 0 : i32
    return %c0_i32, %c0_i32_0, %c0_i32_1 : i32, i32, i32
  }
  func.func @transform_8(%arg0: i32, %arg1: memref<2x8xi32, #tpu.memory_space<smem>>, %arg2: memref<2x8xi32, #tpu.memory_space<smem>>) -> (i32, i32) {
    %c0_i32 = arith.constant 0 : i32
    %c0_i32_0 = arith.constant 0 : i32
    %c0_i32_1 = arith.constant 0 : i32
    return %c0_i32, %c0_i32_0 : i32, i32
  }
  func.func @transform_9(%arg0: i32, %arg1: memref<2x8xi32, #tpu.memory_space<smem>>, %arg2: memref<2x8xi32, #tpu.memory_space<smem>>) -> (i32, i32, i32) {
    %c0_i32 = arith.constant 0 : i32
    %c0_i32_0 = arith.constant 0 : i32
    %c0_i32_1 = arith.constant 0 : i32
    return %arg0, %c0_i32, %c0_i32_0 : i32, i32, i32
  }
}

</mosaic_0001>

<llo_original>
// kernel: model_forward.1
$region0: #{model_forward.1}
  #allocation0 [shape = 'u32[]', space=smem, size = 0x4, offset = 0x4, fixed_abs, tag = 'smem constant byte address 0x4 - core index']
  #allocation1 [shape = 'u32[144,128]{1,0:T(1,128)}', space=vmem, size = 0x12000, scoped, tag = 'internal scratch']
  #allocation2 [shape = 's32[1]{0}', space=sflag, size = 0x4, scoped, tag = 'scoped memory for model_forward.1']
  #allocation3 [shape = 'u8[1024]{0}', space=smem, size = 0x400, scoped, tag = 'prefetched SMEM operand 0']
  #allocation4 [shape = 'u8[1024]{0}', space=smem, size = 0x400, scoped, tag = 'prefetched SMEM operand 1']
  %s0 = inlined_call_operand.vmem [shape: s32[2,8], index: 0, kind: input, shape index: {}]
  %s1 = inlined_call_operand.vmem [shape: s32[2,8], index: 1, kind: input, shape index: {}]
  %s2 = inlined_call_operand.vmem [shape: f32[10,16], index: 2, kind: input, shape index: {}]
  %s3 = inlined_call_operand.vmem [shape: f32[16,32], index: 3, kind: input, shape index: {}]
  %s4 = inlined_call_operand.vmem [shape: f32[18,16], index: 4, kind: input, shape index: {}]
  %s5 = inlined_call_operand.vmem [shape: f32[6,32], index: 5, kind: input, shape index: {}]
  %s6 = inlined_call_operand.vmem [shape: f32[2,32,96], index: 6, kind: input, shape index: {}]
  %s7 = inlined_call_operand.vmem [shape: f32[2,32,32], index: 7, kind: input, shape index: {}]
  %s8 = inlined_call_operand.vmem [shape: f32[2,32,128], index: 8, kind: input, shape index: {}]
  %s9 = inlined_call_operand.vmem [shape: f32[2,64,32], index: 9, kind: input, shape index: {}]
  %s10 = inlined_call_operand.vmem [shape: f32[32,128], index: 10, kind: input, shape index: {}]
  %s11 = inlined_call_operand.vmem [shape: f32[2,9,128], index: 11, kind: output, shape index: {}]
  %s12 = sld [smem:[#allocation0]]
  $region69: #{model_forward.1} parent=0
    _
  %s14 = ssub.s32 1, %s12
  %s15 = scalar_select 0, %s14, %s12
  %s16 = sshll.u32 %s0, 4
  %s17 = int_to_ptr.vmem [resolvable:$true] %s16
  %19 = dma.vmem_to_smem %s17, 32, [#allocation3], [#allocation2]
  %s20 = sshll.u32 %s1, 4
  %s21 = int_to_ptr.vmem [resolvable:$true] %s20
  %23 = dma.vmem_to_smem %s21, 32, [#allocation4], [#allocation2]
  %24 = dma.done [#allocation2], 64
  %25 = sfence
  loop: start=0, step=1, limit=4
  $region2: #{model_forward.1} parent=0 // loop_pre_header
    _
  $region3: #{model_forward.1} parent=0 // loop_header
    %s27 = sphi 0, %s31
    %p28 = scmp.ge.s32.totalorder %s27, 4
    %s35 = sphi 0, %s35
    %s37 = sphi 0, %s35
    %s38 = sphi 0, %s37
    %s52 = sphi 0, %s38
    %s56 = sphi 0, %s56
    %s58 = sphi 0, %s56
    %s59 = sphi 0, %s58
    %s73 = sphi 0, %s59
    %s77 = sphi 0, %s77
    %s79 = sphi 0, %s77
    %s80 = sphi 0, %s79
    %s94 = sphi 0, %s80
    %s98 = sphi 0, %s98
    %s100 = sphi 0, %s98
    %s101 = sphi 0, %s100
    %s115 = sphi 0, %s101
    %s119 = sphi 0, %s119
    %s121 = sphi 0, %s119
    %s122 = sphi 0, %s121
    %s136 = sphi 0, %s122
    %s140 = sphi 0, %s140
    %s142 = sphi 0, %s140
    %s143 = sphi 0, %s142
    %s157 = sphi 0, %s143
    %s161 = sphi 0, %s161
    %s163 = sphi 0, %s161
    %s164 = sphi 0, %s163
    %s178 = sphi 0, %s164
    %s182 = sphi 0, %s182
    %s184 = sphi 0, %s182
    %s185 = sphi 0, %s184
    %s199 = sphi 0, %s185
    %s203 = sphi 0, %s203
    %s205 = sphi 0, %s203
    %s206 = sphi 0, %s205
    %s220 = sphi 0, %s206
    %s226 = sphi 0, %s228
    %s229 = sphi 0, %s226
    %s230 = sphi 0, %s229
    %s246 = sphi 0, %s230
  $region4: #{model_forward.1} parent=0 // loop_header_branch
    %30 = sbr.rel (%p28) target = $region8
  $region5: #{model_forward.1} parent=0 // loop_body
    %s32 = ssub.s32 %s27, 1
    %s33 = ssub.s32 %s27, 2
    %s34 = sadd.s32 %s27, 1
    %s36 = sadd.s32 %s35, 1
    %p39 = scmp.eq.s32.totalorder %s27, 1
    %p40 = scmp.ne.s32.totalorder %s35, %s37
    %p41 = scmp.eq.s32.totalorder %s27, 0
    %p42 = por %p40, %p41
    %p43 = scmp.ne.s32.totalorder %s35, %s37
    %p44 = scmp.eq.s32.totalorder %s32, 1
    %p45 = por %p43, %p44
    %p46 = scmp.ne.s32.totalorder %s37, %s38
    %p47 = scmp.eq.s32.totalorder %s32, 0
    %p48 = por %p46, %p47
    %p49 = scmp.ne.s32.totalorder %s37, %s38
    %p50 = scmp.eq.s32.totalorder %s33, 1
    %p51 = por %p49, %p50
    %p53 = scmp.ne.s32.totalorder %s38, %s52
    %p54 = scmp.eq.s32.totalorder %s33, 0
    %p55 = por %p53, %p54
    %s57 = sadd.s32 %s56, 1
    %p60 = scmp.eq.s32.totalorder %s27, 1
    %p61 = scmp.ne.s32.totalorder %s56, %s58
    %p62 = scmp.eq.s32.totalorder %s27, 0
    %p63 = por %p61, %p62
    %p64 = scmp.ne.s32.totalorder %s56, %s58
    %p65 = scmp.eq.s32.totalorder %s32, 1
    %p66 = por %p64, %p65
    %p67 = scmp.ne.s32.totalorder %s58, %s59
    %p68 = scmp.eq.s32.totalorder %s32, 0
    %p69 = por %p67, %p68
    %p70 = scmp.ne.s32.totalorder %s58, %s59
    %p71 = scmp.eq.s32.totalorder %s33, 1
    %p72 = por %p70, %p71
    %p74 = scmp.ne.s32.totalorder %s59, %s73
    %p75 = scmp.eq.s32.totalorder %s33, 0
    %p76 = por %p74, %p75
    %s78 = sadd.s32 %s77, 1
    %p81 = scmp.eq.s32.totalorder %s27, 1
    %p82 = scmp.ne.s32.totalorder %s77, %s79
    %p83 = scmp.eq.s32.totalorder %s27, 0
    %p84 = por %p82, %p83
    %p85 = scmp.ne.s32.totalorder %s77, %s79
    %p86 = scmp.eq.s32.totalorder %s32, 1
    %p87 = por %p85, %p86
    %p88 = scmp.ne.s32.totalorder %s79, %s80
    %p89 = scmp.eq.s32.totalorder %s32, 0
    %p90 = por %p88, %p89
    %p91 = scmp.ne.s32.totalorder %s79, %s80
    %p92 = scmp.eq.s32.totalorder %s33, 1
    %p93 = por %p91, %p92
    %p95 = scmp.ne.s32.totalorder %s80, %s94
    %p96 = scmp.eq.s32.totalorder %s33, 0
    %p97 = por %p95, %p96
    %s99 = sadd.s32 %s98, 1
    %p102 = scmp.eq.s32.totalorder %s27, 1
    %p103 = scmp.ne.s32.totalorder %s98, %s100
    %p104 = scmp.eq.s32.totalorder %s27, 0
    %p105 = por %p103, %p104
    %p106 = scmp.ne.s32.totalorder %s98, %s100
    %p107 = scmp.eq.s32.totalorder %s32, 1
    %p108 = por %p106, %p107
    %p109 = scmp.ne.s32.totalorder %s100, %s101
    %p110 = scmp.eq.s32.totalorder %s32, 0
    %p111 = por %p109, %p110
    %p112 = scmp.ne.s32.totalorder %s100, %s101
    %p113 = scmp.eq.s32.totalorder %s33, 1
    %p114 = por %p112, %p113
    %p116 = scmp.ne.s32.totalorder %s101, %s115
    %p117 = scmp.eq.s32.totalorder %s33, 0
    %p118 = por %p116, %p117
    %s120 = sadd.s32 %s119, 1
    %p123 = scmp.eq.s32.totalorder %s27, 1
    %p124 = scmp.ne.s32.totalorder %s119, %s121
    %p125 = scmp.eq.s32.totalorder %s27, 0
    %p126 = por %p124, %p125
    %p127 = scmp.ne.s32.totalorder %s119, %s121
    %p128 = scmp.eq.s32.totalorder %s32, 1
    %p129 = por %p127, %p128
    %p130 = scmp.ne.s32.totalorder %s121, %s122
    %p131 = scmp.eq.s32.totalorder %s32, 0
    %p132 = por %p130, %p131
    %p133 = scmp.ne.s32.totalorder %s121, %s122
    %p134 = scmp.eq.s32.totalorder %s33, 1
    %p135 = por %p133, %p134
    %p137 = scmp.ne.s32.totalorder %s122, %s136
    %p138 = scmp.eq.s32.totalorder %s33, 0
    %p139 = por %p137, %p138
    %s141 = sadd.s32 %s140, 1
    %p144 = scmp.eq.s32.totalorder %s27, 1
    %p145 = scmp.ne.s32.totalorder %s140, %s142
    %p146 = scmp.eq.s32.totalorder %s27, 0
    %p147 = por %p145, %p146
    %p148 = scmp.ne.s32.totalorder %s140, %s142
    %p149 = scmp.eq.s32.totalorder %s32, 1
    %p150 = por %p148, %p149
    %p151 = scmp.ne.s32.totalorder %s142, %s143
    %p152 = scmp.eq.s32.totalorder %s32, 0
    %p153 = por %p151, %p152
    %p154 = scmp.ne.s32.totalorder %s142, %s143
    %p155 = scmp.eq.s32.totalorder %s33, 1
    %p156 = por %p154, %p155
    %p158 = scmp.ne.s32.totalorder %s143, %s157
    %p159 = scmp.eq.s32.totalorder %s33, 0
    %p160 = por %p158, %p159
    %s162 = sadd.s32 %s161, 1
    %p165 = scmp.eq.s32.totalorder %s27, 1
    %p166 = scmp.ne.s32.totalorder %s161, %s163
    %p167 = scmp.eq.s32.totalorder %s27, 0
    %p168 = por %p166, %p167
    %p169 = scmp.ne.s32.totalorder %s161, %s163
    %p170 = scmp.eq.s32.totalorder %s32, 1
    %p171 = por %p169, %p170
    %p172 = scmp.ne.s32.totalorder %s163, %s164
    %p173 = scmp.eq.s32.totalorder %s32, 0
    %p174 = por %p172, %p173
    %p175 = scmp.ne.s32.totalorder %s163, %s164
    %p176 = scmp.eq.s32.totalorder %s33, 1
    %p177 = por %p175, %p176
    %p179 = scmp.ne.s32.totalorder %s164, %s178
    %p180 = scmp.eq.s32.totalorder %s33, 0
    %p181 = por %p179, %p180
    %s183 = sadd.s32 %s182, 1
    %p186 = scmp.eq.s32.totalorder %s27, 1
    %p187 = scmp.ne.s32.totalorder %s182, %s184
    %p188 = scmp.eq.s32.totalorder %s27, 0
    %p189 = por %p187, %p188
    %p190 = scmp.ne.s32.totalorder %s182, %s184
    %p191 = scmp.eq.s32.totalorder %s32, 1
    %p192 = por %p190, %p191
    %p193 = scmp.ne.s32.totalorder %s184, %s185
    %p194 = scmp.eq.s32.totalorder %s32, 0
    %p195 = por %p193, %p194
    %p196 = scmp.ne.s32.totalorder %s184, %s185
    %p197 = scmp.eq.s32.totalorder %s33, 1
    %p198 = por %p196, %p197
    %p200 = scmp.ne.s32.totalorder %s185, %s199
    %p201 = scmp.eq.s32.totalorder %s33, 0
    %p202 = por %p200, %p201
    %s204 = sadd.s32 %s203, 1
    %p207 = scmp.eq.s32.totalorder %s27, 1
    %p208 = scmp.ne.s32.totalorder %s203, %s205
    %p209 = scmp.eq.s32.totalorder %s27, 0
    %p210 = por %p208, %p209
    %p211 = scmp.ne.s32.totalorder %s203, %s205
    %p212 = scmp.eq.s32.totalorder %s32, 1
    %p213 = por %p211, %p212
    %p214 = scmp.ne.s32.totalorder %s205, %s206
    %p215 = scmp.eq.s32.totalorder %s32, 0
    %p216 = por %p214, %p215
    %p217 = scmp.ne.s32.totalorder %s205, %s206
    %p218 = scmp.eq.s32.totalorder %s33, 1
    %p219 = por %p217, %p218
    %p221 = scmp.ne.s32.totalorder %s206, %s220
    %p222 = scmp.eq.s32.totalorder %s33, 0
    %p223 = por %p221, %p222
    %s224 = ssub.s32 %s27, %s34
    %p225 = scmp.eq.s32.totalorder %s224, 0
    %s227 = sadd.s32 %s226, 1
    %s228 = scalar_select %p225, %s226, %s227
    %p231 = pneg %p225
    %p232 = scmp.eq.s32.totalorder %s27, 1
    %p233 = por %p231, %p232
    %p234 = scmp.ne.s32.totalorder %s226, %s229
    %p235 = scmp.eq.s32.totalorder %s27, 0
    %p236 = por %p234, %p235
    %p237 = scmp.ne.s32.totalorder %s226, %s229
    %p238 = scmp.eq.s32.totalorder %s32, 1
    %p239 = por %p237, %p238
    %p240 = scmp.ne.s32.totalorder %s229, %s230
    %p241 = scmp.eq.s32.totalorder %s32, 0
    %p242 = por %p240, %p241
    %p243 = scmp.ne.s32.totalorder %s229, %s230
    %p244 = scmp.eq.s32.totalorder %s33, 1
    %p245 = por %p243, %p244
    %p247 = scmp.ne.s32.totalorder %s230, %s246
    %p248 = scmp.eq.s32.totalorder %s33, 0
    %p249 = por %p247, %p248
    %p250 = scmp.le.s32.totalorder 1, %s27
    %p251 = scmp.lt.s32.totalorder %s27, 3
    %p252 = pnand %p250, %p251
    %p253 = pneg %p252
    // Predicated region
    $region9: #{model_forward.1} parent=5 // pred_check
      _
    $region10: #{model_forward.1} parent=5 // pred_check_branch
      %255 = sbr.rel (%p252) target = $region12
    $region11: #{model_forward.1} parent=5 // pred_region
      %s256 = ssub.s32 %s27, 1
      // Predicated region
      $region13: #{model_forward.1} parent=11 // pred_check
        %p257 = pneg %p48
      $region14: #{model_forward.1} parent=11 // pred_check_branch
        %259 = sbr.rel (%p257) target = $region16
      $region15: #{model_forward.1} parent=11 // pred_region
        _
      $region16: #{model_forward.1} parent=11 // pred_fallthru
        _
      // Predicated region
      $region17: #{model_forward.1} parent=11 // pred_check
        %p260 = pneg %p69
      $region18: #{model_forward.1} parent=11 // pred_check_branch
        %262 = sbr.rel (%p260) target = $region20
      $region19: #{model_forward.1} parent=11 // pred_region
        _
      $region20: #{model_forward.1} parent=11 // pred_fallthru
        _
      // Predicated region
      $region21: #{model_forward.1} parent=11 // pred_check
        %p263 = pneg %p90
      $region22: #{model_forward.1} parent=11 // pred_check_branch
        %265 = sbr.rel (%p263) target = $region24
      $region23: #{model_forward.1} parent=11 // pred_region
        _
      $region24: #{model_forward.1} parent=11 // pred_fallthru
        _
      // Predicated region
      $region25: #{model_forward.1} parent=11 // pred_check
        %p266 = pneg %p111
      $region26: #{model_forward.1} parent=11 // pred_check_branch
        %268 = sbr.rel (%p266) target = $region28
      $region27: #{model_forward.1} parent=11 // pred_region
        _
      $region28: #{model_forward.1} parent=11 // pred_fallthru
        _
      // Predicated region
      $region29: #{model_forward.1} parent=11 // pred_check
        %p269 = pneg %p132
      $region30: #{model_forward.1} parent=11 // pred_check_branch
        %271 = sbr.rel (%p269) target = $region32
      $region31: #{model_forward.1} parent=11 // pred_region
        _
      $region32: #{model_forward.1} parent=11 // pred_fallthru
        _
      // Predicated region
      $region33: #{model_forward.1} parent=11 // pred_check
        %p272 = pneg %p153
      $region34: #{model_forward.1} parent=11 // pred_check_branch
        %274 = sbr.rel (%p272) target = $region36
      $region35: #{model_forward.1} parent=11 // pred_region
        _
      $region36: #{model_forward.1} parent=11 // pred_fallthru
        _
      // Predicated region
      $region37: #{model_forward.1} parent=11 // pred_check
        %p275 = pneg %p174
      $region38: #{model_forward.1} parent=11 // pred_check_branch
        %277 = sbr.rel (%p275) target = $region40
      $region39: #{model_forward.1} parent=11 // pred_region
        _
      $region40: #{model_forward.1} parent=11 // pred_fallthru
        _
      // Predicated region
      $region41: #{model_forward.1} parent=11 // pred_check
        %p278 = pneg %p195
      $region42: #{model_forward.1} parent=11 // pred_check_branch
        %280 = sbr.rel (%p278) target = $region44
      $region43: #{model_forward.1} parent=11 // pred_region
        _
      $region44: #{model_forward.1} parent=11 // pred_fallthru
        _
      // Predicated region
      $region45: #{model_forward.1} parent=11 // pred_check
        %p281 = pneg %p216
      $region46: #{model_forward.1} parent=11 // pred_check_branch
        %283 = sbr.rel (%p281) target = $region48
      $region47: #{model_forward.1} parent=11 // pred_region
        _
      $region48: #{model_forward.1} parent=11 // pred_fallthru
        _
    $region12: #{model_forward.1} parent=5 // pred_fallthru
      _
    %p284 = scmp.lt.s32.totalorder %s27, 2
    // Predicated region
    $region49: #{model_forward.1} parent=5 // pred_check
      %p285 = pneg %p284
    $region50: #{model_forward.1} parent=5 // pred_check_branch
      %287 = sbr.rel (%p285) target = $region52
    $region51: #{model_forward.1} parent=5 // pred_region
      _
    $region52: #{model_forward.1} parent=5 // pred_fallthru
      _
    %p288 = scmp.le.s32.totalorder 1, %s27
    %p289 = scmp.lt.s32.totalorder %s27, 3
    %p290 = pnand %p288, %p289
    %p291 = pneg %p290
    // Predicated region
    $region53: #{model_forward.1} parent=5 // pred_check
      _
    $region54: #{model_forward.1} parent=5 // pred_check_branch
      %293 = sbr.rel (%p290) target = $region56
    $region55: #{model_forward.1} parent=5 // pred_region
      %s294 = ssub.s32 %s27, 1
      %p295 = pneg %p48
      %p296 = pneg %p45
      %p297 = pneg %p69
      %p298 = pneg %p66
      %p299 = pneg %p90
      %p300 = pneg %p87
      %p301 = pneg %p111
      %p302 = pneg %p108
      %p303 = pneg %p132
      %p304 = pneg %p129
      %p305 = pneg %p153
      %p306 = pneg %p150
      %p307 = pneg %p174
      %p308 = pneg %p171
      %p309 = pneg %p195
      %p310 = pneg %p192
      %p311 = pneg %p216
      %p312 = pneg %p213
      %p313 = pneg %p242
      %p314 = pneg %p239
      %p315 = scmp.lt.s32.totalorder %s32, 1
      %s316 = scalar_select %p315, %s32, 1
      %s317 = smul.addr %s316, 2
      %s318 = smul.addr %s317, 8
      %s319 = scalar_lea.vmem %s11, %s318
      %p320 = scmp.lt.s32.totalorder %s32, 1
      %s321 = scalar_select %p320, %s32, 1
      %s322 = smul.addr %s321, 2
      %s323 = smul.addr %s322, 8
      %s324 = scalar_lea.vmem %s11, %s323
      %v325 = vld [vmem:[%s4] sm:$0xff]
      %v326 = vld [vmem:[%s4 + $0x8] sm:$0xff]
      %v327 = vld [vmem:[%s4 + $0x10] sm:$0x3]
      %v328 = vld [vmem:[%s5] sm:$0x3f]
      %v329 = vld [vmem:[%s2] sm:$0xff]
      %v330 = vld [vmem:[%s2 + $0x8] sm:$0x3]
      %v331 = vld [vmem:[%s3] sm:$0xff]
      %v332 = vld [vmem:[%s3 + $0x8] sm:$0xff]
      %v333 = vlaneseq
      %v334 = vshrl.u32 %v333, 7
      %v335 = vsub.s32 5, %v334
      %v336 = vrot.slane %v328, %v335
      %vm337 = vcmask 130048
      %v339 = vsel %vm337, %v329, 0
      %v342 = vsel %vm337, %v330, 0
      %344 = vmatprep.subr.mxu0 0.0
      %345 = vmatpush1.msra.mxu0 %v331
      %346 = vmatprep.subr.mxu0 0.0
      %347 = vmatpush1.msra.mxu0 %v332
      %348 = vmatprep.subr.mxu0 0.0
      %349 = vmatpush1.msra.mxu0 0.0
      %350 = vmatprep.subr.mxu0 0.0
      %351 = vmatpush1.msra.mxu0 0.0
      %352 = vmatprep.subr.mxu0 0.0
      %353 = vmatpush1.msra.mxu0 0.0
      %354 = vmatprep.subr.mxu0 0.0
      %355 = vmatpush1.msra.mxu0 0.0
      %356 = vmatprep.subr.mxu0 0.0
      %357 = vmatpush1.msra.mxu0 0.0
      %358 = vmatprep.subr.mxu0 0.0
      %359 = vmatpush1.msra.mxu0 0.0
      %360 = vmatprep.subr.mxu0 0.0
      %361 = vmatpush1.msra.mxu0 0.0
      %362 = vmatprep.subr.mxu0 0.0
      %363 = vmatpush1.msra.mxu0 0.0
      %364 = vmatprep.subr.mxu0 0.0
      %365 = vmatpush1.msra.mxu0 0.0
      %366 = vmatprep.subr.mxu0 0.0
      %367 = vmatpush1.msra.mxu0 0.0
      %368 = vmatprep.subr.mxu0 0.0
      %369 = vmatpush1.msra.mxu0 0.0
      %370 = vmatprep.subr.mxu0 0.0
      %371 = vmatpush1.msra.mxu0 0.0
      %372 = vmatprep.subr.mxu0 0.0
      %373 = vmatpush1.msra.mxu0 0.0
      %374 = vmatprep.subr.mxu0 0.0
      %375 = vmatpush1.msra.mxu0 0.0
      %376 = vmatprep.subr.mxu0 0.0
      %377 = vmatpush1.msra.mxu0 0.0
      %378 = vmatprep.subr.mxu0 0.0
      %379 = vmatpush1.msra.mxu0 0.0
      %380 = vmatprep.subr.mxu0 0.0
      %381 = vmatpush1.msra.mxu0 0.0
      %382 = vmatprep.subr.mxu0 0.0
      %383 = vmatpush1.msra.mxu0 0.0
      %384 = vmatprep.subr.mxu0 0.0
      %385 = vmatpush1.msra.mxu0 0.0
      %386 = vmatprep.subr.mxu0 0.0
      %387 = vmatpush1.msra.mxu0 0.0
      %388 = vmatprep.subr.mxu0 0.0
      %389 = vmatpush1.msra.mxu0 0.0
      %390 = vmatprep.subr.mxu0 0.0
      %391 = vmatpush1.msra.mxu0 0.0
      %392 = vmatprep.subr.mxu0 0.0
      %393 = vmatpush1.msra.mxu0 0.0
      %394 = vmatprep.subr.mxu0 0.0
      %395 = vmatpush1.msra.mxu0 0.0
      %396 = vmatprep.subr.mxu0 0.0
      %397 = vmatpush1.msra.mxu0 0.0
      %398 = vmatprep.subr.mxu0 0.0
      %399 = vmatpush1.msra.mxu0 0.0
      %400 = vmatprep.subr.mxu0 0.0
      %401 = vmatpush1.msra.mxu0 0.0
      %402 = vmatprep.subr.mxu0 0.0
      %403 = vmatpush1.msra.mxu0 0.0
      %404 = vmatprep.subr.mxu0 0.0
      %405 = vmatpush1.msra.mxu0 0.0
      %406 = vmatprep.subr.mxu0 0.0
      %407 = vmatpush1.msra.mxu0 0.0
      %408 = vmatprep.mubr.f32.mxu0 0.0
      %409 = vmatmul.mubr.f32.gmra.mrb[0].mxu0 %v339
      %v410 = vpop.f32.mrb[0].mxu0
      %v411 = vadd.f32 %v336, %v410
      %v412 = vpop.f32.mrb[0].mxu0
      %413 = vmatprep.mubr.f32.mxu0 0.0
      %414 = vmatmul.mubr.f32.gmra.mrb[0].mxu0 %v342
      %v415 = vpop.f32.mrb[0].mxu0
      %v416 = vadd.f32 %v336, %v415
      %v417 = vpop.f32.mrb[0].mxu0
      %418 = vdwg.mxu0
      %v419 = vlaneseq
      %v420 = vshrl.u32 %v419, 7
      %v421 = vadd.s32 %v420, 8
      %v422 = vadd.s32 %v420, 16
      %v423 = vlaneseq
      %v424 = vand.u32 %v423, 127
      %vm425 = vcmp.eq.s32.totalorder %v420, 0
      %vm426 = vcmp.eq.s32.totalorder %v421, 0
      %vm427 = vcmp.eq.s32.totalorder %v422, 0
      %vm428 = vcmp.eq.s32.totalorder %v424, 0
      %vm429 = vmand %vm425, %vm428
      %vm430 = vmand %vm426, %vm428
      %vm431 = vmand %vm427, %vm428
      %v432 = vsel %vm429, 1.0, 0.0
      %v433 = vsel %vm430, 1.0, 0.0
      %v434 = vsel %vm431, 1.0, 0.0
      %vm435 = vcmp.eq.s32.totalorder %v420, 1
      %vm436 = vcmp.eq.s32.totalorder %v421, 1
      %vm437 = vcmp.eq.s32.totalorder %v422, 1
      %vm438 = vcmp.eq.s32.totalorder %v424, 1
      %vm439 = vmand %vm435, %vm438
      %vm440 = vmand %vm436, %vm438
      %vm441 = vmand %vm437, %vm438
      %v442 = vsel %vm439, 1.0, %v432
      %v443 = vsel %vm440, 1.0, %v433
      %v444 = vsel %vm441, 1.0, %v434
      %s445 = smul.u32 %s32, 128
      %s446 = sld [smem:[#allocation3 + %s445]]
      %s447 = sld [smem:[#allocation4 + %s445]]
      %vm448 = vcmp.eq.s32.totalorder %v420, 2
      %vm449 = vcmp.eq.s32.totalorder %v421, 2
      %vm450 = vcmp.eq.s32.totalorder %v422, 2
      %s451 = sadd.s32 %s446, 2
      %v452 = vstv %s451
      %vm453 = vcmp.eq.s32.totalorder %v424, %v452
      %vm454 = vmand %vm448, %vm453
      %vm455 = vmand %vm449, %vm453
      %vm456 = vmand %vm450, %vm453
      %v457 = vsel %vm454, 1.0, %v442
      %v458 = vsel %vm455, 1.0, %v443
      %v459 = vsel %vm456, 1.0, %v444
      %vm460 = vcmp.eq.s32.totalorder %v420, 3
      %vm461 = vcmp.eq.s32.totalorder %v421, 3
      %vm462 = vcmp.eq.s32.totalorder %v422, 3
      %s463 = sadd.s32 %s447, 8
      %v464 = vstv %s463
      %vm465 = vcmp.eq.s32.totalorder %v424, %v464
      %vm466 = vmand %vm460, %vm465
      %vm467 = vmand %vm461, %vm465
      %vm468 = vmand %vm462, %vm465
      %v469 = vsel %vm466, 1.0, %v457
      %v470 = vsel %vm467, 1.0, %v458
      %v471 = vsel %vm468, 1.0, %v459
      %s472 = sadd.s32 %s445, 1
      %s473 = sld [smem:[#allocation3 + %s472]]
      %s474 = sld [smem:[#allocation4 + %s472]]
      %vm475 = vcmp.eq.s32.totalorder %v420, 4
      %vm476 = vcmp.eq.s32.totalorder %v421, 4
      %vm477 = vcmp.eq.s32.totalorder %v422, 4
      %s478 = sadd.s32 %s473, 2
      %v479 = vstv %s478
      %vm480 = vcmp.eq.s32.totalorder %v424, %v479
      %vm481 = vmand %vm475, %vm480
      %vm482 = vmand %vm476, %vm480
      %vm483 = vmand %vm477, %vm480
      %v484 = vsel %vm481, 1.0, %v469
      %v485 = vsel %vm482, 1.0, %v470
      %v486 = vsel %vm483, 1.0, %v471
      %vm487 = vcmp.eq.s32.totalorder %v420, 5
      %vm488 = vcmp.eq.s32.totalorder %v421, 5
      %vm489 = vcmp.eq.s32.totalorder %v422, 5
      %s490 = sadd.s32 %s474, 8
      %v491 = vstv %s490
      %vm492 = vcmp.eq.s32.totalorder %v424, %v491
      %vm493 = vmand %vm487, %vm492
      %vm494 = vmand %vm488, %vm492
      %vm495 = vmand %vm489, %vm492
      %v496 = vsel %vm493, 1.0, %v484
      %v497 = vsel %vm494, 1.0, %v485
      %v498 = vsel %vm495, 1.0, %v486
      %s499 = sadd.s32 %s445, 2
      %s500 = sld [smem:[#allocation3 + %s499]]
      %s501 = sld [smem:[#allocation4 + %s499]]
      %vm502 = vcmp.eq.s32.totalorder %v420, 6
      %vm503 = vcmp.eq.s32.totalorder %v421, 6
      %vm504 = vcmp.eq.s32.totalorder %v422, 6
      %s505 = sadd.s32 %s500, 2
      %v506 = vstv %s505
      %vm507 = vcmp.eq.s32.totalorder %v424, %v506
      %vm508 = vmand %vm502, %vm507
      %vm509 = vmand %vm503, %vm507
      %vm510 = vmand %vm504, %vm507
      %v511 = vsel %vm508, 1.0, %v496
      %v512 = vsel %vm509, 1.0, %v497
      %v513 = vsel %vm510, 1.0, %v498
      %vm514 = vcmp.eq.s32.totalorder %v420, 7
      %vm515 = vcmp.eq.s32.totalorder %v421, 7
      %vm516 = vcmp.eq.s32.totalorder %v422, 7
      %s517 = sadd.s32 %s501, 8
      %v518 = vstv %s517
      %vm519 = vcmp.eq.s32.totalorder %v424, %v518
      %vm520 = vmand %vm514, %vm519
      %vm521 = vmand %vm515, %vm519
      %vm522 = vmand %vm516, %vm519
      %v523 = vsel %vm520, 1.0, %v511
      %v524 = vsel %vm521, 1.0, %v512
      %v525 = vsel %vm522, 1.0, %v513
      %s526 = sadd.s32 %s445, 3
      %s527 = sld [smem:[#allocation3 + %s526]]
      %s528 = sld [smem:[#allocation4 + %s526]]
      %vm529 = vcmp.eq.s32.totalorder %v420, 8
      %vm530 = vcmp.eq.s32.totalorder %v421, 8
      %vm531 = vcmp.eq.s32.totalorder %v422, 8
      %s532 = sadd.s32 %s527, 2
      %v533 = vstv %s532
      %vm534 = vcmp.eq.s32.totalorder %v424, %v533
      %vm535 = vmand %vm529, %vm534
      %vm536 = vmand %vm530, %vm534
      %vm537 = vmand %vm531, %vm534
      %v538 = vsel %vm535, 1.0, %v523
      %v539 = vsel %vm536, 1.0, %v524
      %v540 = vsel %vm537, 1.0, %v525
      %vm541 = vcmp.eq.s32.totalorder %v420, 9
      %vm542 = vcmp.eq.s32.totalorder %v421, 9
      %vm543 = vcmp.eq.s32.totalorder %v422, 9
      %s544 = sadd.s32 %s528, 8
      %v545 = vstv %s544
      %vm546 = vcmp.eq.s32.totalorder %v424, %v545
      %vm547 = vmand %vm541, %vm546
      %vm548 = vmand %vm542, %vm546
      %vm549 = vmand %vm543, %vm546
      %v550 = vsel %vm547, 1.0, %v538
      %v551 = vsel %vm548, 1.0, %v539
      %v552 = vsel %vm549, 1.0, %v540
      %s553 = sadd.s32 %s445, 4
      %s554 = sld [smem:[#allocation3 + %s553]]
      %s555 = sld [smem:[#allocation4 + %s553]]
      %vm556 = vcmp.eq.s32.totalorder %v420, 10
      %vm557 = vcmp.eq.s32.totalorder %v421, 10
      %vm558 = vcmp.eq.s32.totalorder %v422, 10
      %s559 = sadd.s32 %s554, 2
      %v560 = vstv %s559
      %vm561 = vcmp.eq.s32.totalorder %v424, %v560
      %vm562 = vmand %vm556, %vm561
      %vm563 = vmand %vm557, %vm561
      %vm564 = vmand %vm558, %vm561
      %v565 = vsel %vm562, 1.0, %v550
      %v566 = vsel %vm563, 1.0, %v551
      %v567 = vsel %vm564, 1.0, %v552
      %vm568 = vcmp.eq.s32.totalorder %v420, 11
      %vm569 = vcmp.eq.s32.totalorder %v421, 11
      %vm570 = vcmp.eq.s32.totalorder %v422, 11
      %s571 = sadd.s32 %s555, 8
      %v572 = vstv %s571
      %vm573 = vcmp.eq.s32.totalorder %v424, %v572
      %vm574 = vmand %vm568, %vm573
      %vm575 = vmand %vm569, %vm573
      %vm576 = vmand %vm570, %vm573
      %v577 = vsel %vm574, 1.0, %v565
      %v578 = vsel %vm575, 1.0, %v566
      %v579 = vsel %vm576, 1.0, %v567
      %s580 = sadd.s32 %s445, 5
      %s581 = sld [smem:[#allocation3 + %s580]]
      %s582 = sld [smem:[#allocation4 + %s580]]
      %vm583 = vcmp.eq.s32.totalorder %v420, 12
      %vm584 = vcmp.eq.s32.totalorder %v421, 12
      %vm585 = vcmp.eq.s32.totalorder %v422, 12
      %s586 = sadd.s32 %s581, 2
      %v587 = vstv %s586
      %vm588 = vcmp.eq.s32.totalorder %v424, %v587
      %vm589 = vmand %vm583, %vm588
      %vm590 = vmand %vm584, %vm588
      %vm591 = vmand %vm585, %vm588
      %v592 = vsel %vm589, 1.0, %v577
      %v593 = vsel %vm590, 1.0, %v578
      %v594 = vsel %vm591, 1.0, %v579
      %vm595 = vcmp.eq.s32.totalorder %v420, 13
      %vm596 = vcmp.eq.s32.totalorder %v421, 13
      %vm597 = vcmp.eq.s32.totalorder %v422, 13
      %s598 = sadd.s32 %s582, 8
      %v599 = vstv %s598
      %vm600 = vcmp.eq.s32.totalorder %v424, %v599
      %vm601 = vmand %vm595, %vm600
      %vm602 = vmand %vm596, %vm600
      %vm603 = vmand %vm597, %vm600
      %v604 = vsel %vm601, 1.0, %v592
      %v605 = vsel %vm602, 1.0, %v593
      %v606 = vsel %vm603, 1.0, %v594
      %s607 = sadd.s32 %s445, 6
      %s608 = sld [smem:[#allocation3 + %s607]]
      %s609 = sld [smem:[#allocation4 + %s607]]
      %vm610 = vcmp.eq.s32.totalorder %v420, 14
      %vm611 = vcmp.eq.s32.totalorder %v421, 14
      %vm612 = vcmp.eq.s32.totalorder %v422, 14
      %s613 = sadd.s32 %s608, 2
      %v614 = vstv %s613
      %vm615 = vcmp.eq.s32.totalorder %v424, %v614
      %vm616 = vmand %vm610, %vm615
      %vm617 = vmand %vm611, %vm615
      %vm618 = vmand %vm612, %vm615
      %v619 = vsel %vm616, 1.0, %v604
      %v620 = vsel %vm617, 1.0, %v605
      %v621 = vsel %vm618, 1.0, %v606
      %vm622 = vcmp.eq.s32.totalorder %v420, 15
      %vm623 = vcmp.eq.s32.totalorder %v421, 15
      %vm624 = vcmp.eq.s32.totalorder %v422, 15
      %s625 = sadd.s32 %s609, 8
      %v626 = vstv %s625
      %vm627 = vcmp.eq.s32.totalorder %v424, %v626
      %vm628 = vmand %vm622, %vm627
      %vm629 = vmand %vm623, %vm627
      %vm630 = vmand %vm624, %vm627
      %v631 = vsel %vm628, 1.0, %v619
      %v632 = vsel %vm629, 1.0, %v620
      %v633 = vsel %vm630, 1.0, %v621
      %s634 = sadd.s32 %s445, 7
      %s635 = sld [smem:[#allocation3 + %s634]]
      %s636 = sld [smem:[#allocation4 + %s634]]
      %vm637 = vcmp.eq.s32.totalorder %v420, 16
      %vm638 = vcmp.eq.s32.totalorder %v421, 16
      %vm639 = vcmp.eq.s32.totalorder %v422, 16
      %s640 = sadd.s32 %s635, 2
      %v641 = vstv %s640
      %vm642 = vcmp.eq.s32.totalorder %v424, %v641
      %vm643 = vmand %vm637, %vm642
      %vm644 = vmand %vm638, %vm642
      %vm645 = vmand %vm639, %vm642
      %v646 = vsel %vm643, 1.0, %v631
      %v647 = vsel %vm644, 1.0, %v632
      %v648 = vsel %vm645, 1.0, %v633
      %vm649 = vcmp.eq.s32.totalorder %v420, 17
      %vm650 = vcmp.eq.s32.totalorder %v421, 17
      %vm651 = vcmp.eq.s32.totalorder %v422, 17
      %s652 = sadd.s32 %s636, 8
      %v653 = vstv %s652
      %vm654 = vcmp.eq.s32.totalorder %v424, %v653
      %vm655 = vmand %vm649, %vm654
      %vm656 = vmand %vm650, %vm654
      %vm657 = vmand %vm651, %vm654
      %v658 = vsel %vm655, 1.0, %v646
      %v659 = vsel %vm656, 1.0, %v647
      %v660 = vsel %vm657, 1.0, %v648
      %vm661 = vcmask 80896
      %v663 = vsel %vm661, %v658, 0
      %v666 = vsel %vm661, %v659, 0
      %v669 = vsel %vm661, %v660, 0
      %vm671 = vcmask 1041408
      %v673 = vsel %vm671, %v416, 0
      %675 = vmatprep.subr.mxu0 0.0
      %676 = vmatpush1.msra.mxu0 %v411
      %677 = vmatprep.subr.mxu0 0.0
      %678 = vmatpush1.msra.mxu0 %v673
      %679 = vmatprep.subr.mxu0 0.0
      %680 = vmatpush1.msra.mxu0 0.0
      %681 = vmatprep.subr.mxu0 0.0
      %682 = vmatpush1.msra.mxu0 0.0
      %683 = vmatprep.subr.mxu0 0.0
      %684 = vmatpush1.msra.mxu0 0.0
      %685 = vmatprep.subr.mxu0 0.0
      %686 = vmatpush1.msra.mxu0 0.0
      %687 = vmatprep.subr.mxu0 0.0
      %688 = vmatpush1.msra.mxu0 0.0
      %689 = vmatprep.subr.mxu0 0.0
      %690 = vmatpush1.msra.mxu0 0.0
      %691 = vmatprep.subr.mxu0 0.0
      %692 = vmatpush1.msra.mxu0 0.0
      %693 = vmatprep.subr.mxu0 0.0
      %694 = vmatpush1.msra.mxu0 0.0
      %695 = vmatprep.subr.mxu0 0.0
      %696 = vmatpush1.msra.mxu0 0.0
      %697 = vmatprep.subr.mxu0 0.0
      %698 = vmatpush1.msra.mxu0 0.0
      %699 = vmatprep.subr.mxu0 0.0
      %700 = vmatpush1.msra.mxu0 0.0
      %701 = vmatprep.subr.mxu0 0.0
      %702 = vmatpush1.msra.mxu0 0.0
      %703 = vmatprep.subr.mxu0 0.0
      %704 = vmatpush1.msra.mxu0 0.0
      %705 = vmatprep.subr.mxu0 0.0
      %706 = vmatpush1.msra.mxu0 0.0
      %707 = vmatprep.subr.mxu0 0.0
      %708 = vmatpush1.msra.mxu0 0.0
      %709 = vmatprep.subr.mxu0 0.0
      %710 = vmatpush1.msra.mxu0 0.0
      %711 = vmatprep.subr.mxu0 0.0
      %712 = vmatpush1.msra.mxu0 0.0
      %713 = vmatprep.subr.mxu0 0.0
      %714 = vmatpush1.msra.mxu0 0.0
      %715 = vmatprep.subr.mxu0 0.0
      %716 = vmatpush1.msra.mxu0 0.0
      %717 = vmatprep.subr.mxu0 0.0
      %718 = vmatpush1.msra.mxu0 0.0
      %719 = vmatprep.subr.mxu0 0.0
      %720 = vmatpush1.msra.mxu0 0.0
      %721 = vmatprep.subr.mxu0 0.0
      %722 = vmatpush1.msra.mxu0 0.0
      %723 = vmatprep.subr.mxu0 0.0
      %724 = vmatpush1.msra.mxu0 0.0
      %725 = vmatprep.subr.mxu0 0.0
      %726 = vmatpush1.msra.mxu0 0.0
      %727 = vmatprep.subr.mxu0 0.0
      %728 = vmatpush1.msra.mxu0 0.0
      %729 = vmatprep.subr.mxu0 0.0
      %730 = vmatpush1.msra.mxu0 0.0
      %731 = vmatprep.subr.mxu0 0.0
      %732 = vmatpush1.msra.mxu0 0.0
      %733 = vmatprep.subr.mxu0 0.0
      %734 = vmatpush1.msra.mxu0 0.0
      %735 = vmatprep.subr.mxu0 0.0
      %736 = vmatpush1.msra.mxu0 0.0
      %737 = vmatprep.subr.mxu0 0.0
      %738 = vmatpush1.msra.mxu0 0.0
      %739 = vmatprep.mubr.f32.mxu0 0.0
      %740 = vmatmul.mubr.f32.gmra.mrb[0].mxu0 %v663
      %v741 = vpop.f32.mrb[0].mxu0
      %v742 = vadd.f32 0.0, %v741
      %v743 = vpop.f32.mrb[0].mxu0
      %744 = vmatprep.mubr.f32.mxu0 0.0
      %745 = vmatmul.mubr.f32.gmra.mrb[0].mxu0 %v666
      %v746 = vpop.f32.mrb[0].mxu0
      %v747 = vadd.f32 0.0, %v746
      %v748 = vpop.f32.mrb[0].mxu0
      %749 = vmatprep.mubr.f32.mxu0 0.0
      %750 = vmatmul.mubr.f32.gmra.mrb[0].mxu0 %v669
      %v751 = vpop.f32.mrb[0].mxu0
      %v752 = vadd.f32 0.0, %v751
      %v753 = vpop.f32.mrb[0].mxu0
      %754 = vdwg.mxu0
      %vm755 = vcmp.ge.s32.totalorder %v420, %v424
      %vm756 = vcmp.ge.s32.totalorder %v421, %v424
      %vm757 = vcmp.ge.s32.totalorder %v422, %v424
      %v758 = vmul.f32 %v742, %v742
      %v759 = vmul.f32 %v747, %v747
      %v760 = vmul.f32 %v752, %v752
      %vm761 = vcmask 261120
      %v762 = vsel %vm761, %v758, 0.0
      %763 = vadd.xlane.f32.xlu0 %v762
      %v764 = vpop.xlane.xlu0 %763
      %v765 = vsel %vm761, %v759, 0.0
      %766 = vadd.xlane.f32.xlu0 %v765
      %v767 = vpop.xlane.xlu0 %766
      %vm768 = vcmask 254976
      %v769 = vsel %vm768, %v760, 0.0
      %770 = vadd.xlane.f32.xlu0 %v769
      %v771 = vpop.xlane.xlu0 %770
      %v772 = vrcp.pop 32.0
      %v773 = vmul.f32 %v764, %v772
      %v774 = vmul.f32 %v767, %v772
      %v775 = vmul.f32 %v771, %v772
      %v776 = vadd.f32 %v773, 1e-05
      %v777 = vadd.f32 %v774, 1e-05
      %v778 = vadd.f32 %v775, 1e-05
      %v779 = vrsqrt.pop %v776
      %v780 = vrsqrt.pop %v777
      %v781 = vrsqrt.pop %v778
      %v782 = vmul.f32 %v742, %v779
      %v783 = vmul.f32 %v747, %v780
      %v784 = vmul.f32 %v752, %v781
      %v785 = vlaneseq
      %v786 = vshrl.u32 %v785, 7
      %v787 = vsub.s32 0, %v786
      %v788 = vrot.slane %v328, %v787
      %v789 = vmul.f32 %v782, %v788
      %v790 = vmul.f32 %v783, %v788
      %v791 = vmul.f32 %v784, %v788
      %v792 = vld [vmem:[%s6] sm:$0xff]
      %v793 = vld [vmem:[%s6 + $0x8] sm:$0xff]
      %v794 = vld [vmem:[%s6 + $0x10] sm:$0xff]
      %v795 = vld [vmem:[%s6 + $0x18] sm:$0xff]
      %v797 = vsel %vm761, %v789, 0
      %v800 = vsel %vm761, %v790, 0
      %v803 = vsel %vm761, %v791, 0
      %805 = vmatprep.subr.mxu0 0.0
      %806 = vmatpush1.msra.mxu0 %v792
      %807 = vmatprep.subr.mxu0 0.0
      %808 = vmatpush1.msra.mxu0 %v793
      %809 = vmatprep.subr.mxu0 0.0
      %810 = vmatpush1.msra.mxu0 %v794
      %811 = vmatprep.subr.mxu0 0.0
      %812 = vmatpush1.msra.mxu0 %v795
      %813 = vmatprep.subr.mxu0 0.0
      %814 = vmatpush1.msra.mxu0 0.0
      %815 = vmatprep.subr.mxu0 0.0
      %816 = vmatpush1.msra.mxu0 0.0
      %817 = vmatprep.subr.mxu0 0.0
      %818 = vmatpush1.msra.mxu0 0.0
      %819 = vmatprep.subr.mxu0 0.0
      %820 = vmatpush1.msra.mxu0 0.0
      %821 = vmatprep.subr.mxu0 0.0
      %822 = vmatpush1.msra.mxu0 0.0
      %823 = vmatprep.subr.mxu0 0.0
      %824 = vmatpush1.msra.mxu0 0.0
      %825 = vmatprep.subr.mxu0 0.0
      %826 = vmatpush1.msra.mxu0 0.0
      %827 = vmatprep.subr.mxu0 0.0
      %828 = vmatpush1.msra.mxu0 0.0
      %829 = vmatprep.subr.mxu0 0.0
      %830 = vmatpush1.msra.mxu0 0.0
      %831 = vmatprep.subr.mxu0 0.0
      %832 = vmatpush1.msra.mxu0 0.0
      %833 = vmatprep.subr.mxu0 0.0
      %834 = vmatpush1.msra.mxu0 0.0
      %835 = vmatprep.subr.mxu0 0.0
      %836 = vmatpush1.msra.mxu0 0.0
      %837 = vmatprep.subr.mxu0 0.0
      %838 = vmatpush1.msra.mxu0 0.0
      %839 = vmatprep.subr.mxu0 0.0
      %840 = vmatpush1.msra.mxu0 0.0
      %841 = vmatprep.subr.mxu0 0.0
      %842 = vmatpush1.msra.mxu0 0.0
      %843 = vmatprep.subr.mxu0 0.0
      %844 = vmatpush1.msra.mxu0 0.0
      %845 = vmatprep.subr.mxu0 0.0
      %846 = vmatpush1.msra.mxu0 0.0
      %847 = vmatprep.subr.mxu0 0.0
      %848 = vmatpush1.msra.mxu0 0.0
      %849 = vmatprep.subr.mxu0 0.0
      %850 = vmatpush1.msra.mxu0 0.0
      %851 = vmatprep.subr.mxu0 0.0
      %852 = vmatpush1.msra.mxu0 0.0
      %853 = vmatprep.subr.mxu0 0.0
      %854 = vmatpush1.msra.mxu0 0.0
      %855 = vmatprep.subr.mxu0 0.0
      %856 = vmatpush1.msra.mxu0 0.0
      %857 = vmatprep.subr.mxu0 0.0
      %858 = vmatpush1.msra.mxu0 0.0
      %859 = vmatprep.subr.mxu0 0.0
      %860 = vmatpush1.msra.mxu0 0.0
      %861 = vmatprep.subr.mxu0 0.0
      %862 = vmatpush1.msra.mxu0 0.0
      %863 = vmatprep.subr.mxu0 0.0
      %864 = vmatpush1.msra.mxu0 0.0
      %865 = vmatprep.subr.mxu0 0.0
      %866 = vmatpush1.msra.mxu0 0.0
      %867 = vmatprep.subr.mxu0 0.0
      %868 = vmatpush1.msra.mxu0 0.0
      %869 = vmatprep.mubr.f32.mxu0 0.0
      %870 = vmatmul.mubr.f32.gmra.mrb[0].mxu0 %v797
      %v871 = vpop.f32.mrb[0].mxu0
      %v872 = vadd.f32 0.0, %v871
      %v873 = vpop.f32.mrb[0].mxu0
      %874 = vmatprep.mubr.f32.mxu0 0.0
      %875 = vmatmul.mubr.f32.gmra.mrb[0].mxu0 %v800
      %v876 = vpop.f32.mrb[0].mxu0
      %v877 = vadd.f32 0.0, %v876
      %v878 = vpop.f32.mrb[0].mxu0
      %879 = vmatprep.mubr.f32.mxu0 0.0
      %880 = vmatmul.mubr.f32.gmra.mrb[0].mxu0 %v803
      %v881 = vpop.f32.mrb[0].mxu0
      %v882 = vadd.f32 0.0, %v881
      %v883 = vpop.f32.mrb[0].mxu0
      %884 = vdwg.mxu0
      %v885 = vsub.f32 0.0, %v872
      %v886 = vsub.f32 0.0, %v877
      %v887 = vsub.f32 0.0, %v882
      %891 = vrot.lane.b32.xlu0 %v885, 124
      %v892 = vpop.permute.xlu0 %891
      %893 = vrot.lane.b32.xlu0 %v886, 124
      %v894 = vpop.permute.xlu0 %893
      %895 = vrot.lane.b32.xlu0 %v887, 124
      %v896 = vpop.permute.xlu0 %895
      %903 = vrot.lane.b32.xlu0 %v872, 4
      %v904 = vpop.permute.xlu0 %903
      %905 = vrot.lane.b32.xlu0 %v877, 4
      %v906 = vpop.permute.xlu0 %905
      %907 = vrot.lane.b32.xlu0 %v882, 4
      %v908 = vpop.permute.xlu0 %907
      %vm912 = vcmask 31744
      %v913 = vsel %vm912, %v892, %v904
      %v914 = vsel %vm912, %v894, %v906
      %v915 = vsel %vm912, %v896, %v908
      %v916 = vmul.f32 %v872, %v325
      %v917 = vmul.f32 %v877, %v326
      %v918 = vmul.f32 %v882, %v327
      %922 = vrot.lane.b32.xlu0 %v325, 120
      %v923 = vpop.permute.xlu0 %922
      %924 = vrot.lane.b32.xlu0 %v326, 120
      %v925 = vpop.permute.xlu0 %924
      %926 = vrot.lane.b32.xlu0 %v327, 120
      %v927 = vpop.permute.xlu0 %926
      %v931 = vmul.f32 %v913, %v923
      %v932 = vmul.f32 %v914, %v925
      %v933 = vmul.f32 %v915, %v927
      %v934 = vadd.f32 %v916, %v931
      %v935 = vadd.f32 %v917, %v932
      %v936 = vadd.f32 %v918, %v933
      %937 = vrot.lane.b32.xlu0 %v885, 92
      %v938 = vpop.permute.xlu0 %937
      %939 = vrot.lane.b32.xlu0 %v886, 92
      %v940 = vpop.permute.xlu0 %939
      %941 = vrot.lane.b32.xlu0 %v887, 92
      %v942 = vpop.permute.xlu0 %941
      %946 = vrot.lane.b32.xlu0 %v872, 100
      %v947 = vpop.permute.xlu0 %946
      %948 = vrot.lane.b32.xlu0 %v877, 100
      %v949 = vpop.permute.xlu0 %948
      %950 = vrot.lane.b32.xlu0 %v882, 100
      %v951 = vpop.permute.xlu0 %950
      %v955 = vsel %vm912, %v938, %v947
      %v956 = vsel %vm912, %v940, %v949
      %v957 = vsel %vm912, %v942, %v951
      %958 = vrot.lane.b32.xlu0 %v325, 32
      %v959 = vpop.permute.xlu0 %958
      %960 = vrot.lane.b32.xlu0 %v326, 32
      %v961 = vpop.permute.xlu0 %960
      %962 = vrot.lane.b32.xlu0 %v327, 32
      %v963 = vpop.permute.xlu0 %962
      %v967 = vmul.f32 %v872, %v959
      %v968 = vmul.f32 %v877, %v961
      %v969 = vmul.f32 %v882, %v963
      %v970 = vmul.f32 %v955, %v923
      %v971 = vmul.f32 %v956, %v925
      %v972 = vmul.f32 %v957, %v927
      %976 = vrot.lane.b32.xlu0 %v970, 32
      %v977 = vpop.permute.xlu0 %976
      %978 = vrot.lane.b32.xlu0 %v971, 32
      %v979 = vpop.permute.xlu0 %978
      %980 = vrot.lane.b32.xlu0 %v972, 32
      %v981 = vpop.permute.xlu0 %980
      %v985 = vadd.f32 %v967, %v977
      %v986 = vadd.f32 %v968, %v979
      %v987 = vadd.f32 %v969, %v981
      %991 = vrot.lane.b32.xlu0 %v985, 96
      %v992 = vpop.permute.xlu0 %991
      %993 = vrot.lane.b32.xlu0 %v986, 96
      %v994 = vpop.permute.xlu0 %993
      %995 = vrot.lane.b32.xlu0 %v987, 96
      %v996 = vpop.permute.xlu0 %995
      %vm997 = vcmask 64512
      %v999 = vsel %vm997, %v934, 0
      %v1002 = vsel %vm997, %v935, 0
      %v1005 = vsel %vm997, %v936, 0
      %v1007 = vsel %vm997, %v992, 0
      %v1009 = vsel %vm997, %v994, 0
      %v1011 = vsel %vm997, %v996, 0
      %1013 = vmatprep.subr.mxu0 0.0
      %1014 = vmatpush1.xpose.msra.mxu0 %v1007
      %1015 = vmatprep.subr.mxu0 0.0
      %1016 = vmatpush1.xpose.msra.mxu0 %v1009
      %1017 = vmatprep.subr.mxu0 0.0
      %1018 = vmatpush1.xpose.msra.mxu0 %v1011
      %1019 = vmatprep.subr.mxu0 0.0
      %1020 = vmatpush1.xpose.msra.mxu0 0.0
      %1021 = vmatprep.subr.mxu0 0.0
      %1022 = vmatpush1.xpose.msra.mxu0 0.0
      %1023 = vmatprep.subr.mxu0 0.0
      %1024 = vmatpush1.xpose.msra.mxu0 0.0
      %1025 = vmatprep.subr.mxu0 0.0
      %1026 = vmatpush1.xpose.msra.mxu0 0.0
      %1027 = vmatprep.subr.mxu0 0.0
      %1028 = vmatpush1.xpose.msra.mxu0 0.0
      %1029 = vmatprep.subr.mxu0 0.0
      %1030 = vmatpush1.xpose.msra.mxu0 0.0
      %1031 = vmatprep.subr.mxu0 0.0
      %1032 = vmatpush1.xpose.msra.mxu0 0.0
      %1033 = vmatprep.subr.mxu0 0.0
      %1034 = vmatpush1.xpose.msra.mxu0 0.0
      %1035 = vmatprep.subr.mxu0 0.0
      %1036 = vmatpush1.xpose.msra.mxu0 0.0
      %1037 = vmatprep.subr.mxu0 0.0
      %1038 = vmatpush1.xpose.msra.mxu0 0.0
      %1039 = vmatprep.subr.mxu0 0.0
      %1040 = vmatpush1.xpose.msra.mxu0 0.0
      %1041 = vmatprep.subr.mxu0 0.0
      %1042 = vmatpush1.xpose.msra.mxu0 0.0
      %1043 = vmatprep.subr.mxu0 0.0
      %1044 = vmatpush1.xpose.msra.mxu0 0.0
      %1045 = vmatprep.subr.mxu0 0.0
      %1046 = vmatpush1.xpose.msra.mxu0 0.0
      %1047 = vmatprep.subr.mxu0 0.0
      %1048 = vmatpush1.xpose.msra.mxu0 0.0
      %1049 = vmatprep.subr.mxu0 0.0
      %1050 = vmatpush1.xpose.msra.mxu0 0.0
      %1051 = vmatprep.subr.mxu0 0.0
      %1052 = vmatpush1.xpose.msra.mxu0 0.0
      %1053 = vmatprep.subr.mxu0 0.0
      %1054 = vmatpush1.xpose.msra.mxu0 0.0
      %1055 = vmatprep.subr.mxu0 0.0
      %1056 = vmatpush1.xpose.msra.mxu0 0.0
      %1057 = vmatprep.subr.mxu0 0.0
      %1058 = vmatpush1.xpose.msra.mxu0 0.0
      %1059 = vmatprep.subr.mxu0 0.0
      %1060 = vmatpush1.xpose.msra.mxu0 0.0
      %1061 = vmatprep.subr.mxu0 0.0
      %1062 = vmatpush1.xpose.msra.mxu0 0.0
      %1063 = vmatprep.subr.mxu0 0.0
      %1064 = vmatpush1.xpose.msra.mxu0 0.0
      %1065 = vmatprep.subr.mxu0 0.0
      %1066 = vmatpush1.xpose.msra.mxu0 0.0
      %1067 = vmatprep.subr.mxu0 0.0
      %1068 = vmatpush1.xpose.msra.mxu0 0.0
      %1069 = vmatprep.subr.mxu0 0.0
      %1070 = vmatpush1.xpose.msra.mxu0 0.0
      %1071 = vmatprep.subr.mxu0 0.0
      %1072 = vmatpush1.xpose.msra.mxu0 0.0
      %1073 = vmatprep.subr.mxu0 0.0
      %1074 = vmatpush1.xpose.msra.mxu0 0.0
      %1075 = vmatprep.subr.mxu0 0.0
      %1076 = vmatpush1.xpose.msra.mxu0 0.0
      %1077 = vmatprep.mubr.f32.mxu0 0.0
      %1078 = vmatmul.mubr.f32.gmra.mrb[0].mxu0 %v999
      %v1079 = vpop.f32.mrb[0].mxu0
      %v1080 = vadd.f32 0.0, %v1079
      %v1081 = vpop.f32.mrb[0].mxu0
      %1082 = vmatprep.mubr.f32.mxu0 0.0
      %1083 = vmatmul.mubr.f32.gmra.mrb[0].mxu0 %v1002
      %v1084 = vpop.f32.mrb[0].mxu0
      %v1085 = vadd.f32 0.0, %v1084
      %v1086 = vpop.f32.mrb[0].mxu0
      %1087 = vmatprep.mubr.f32.mxu0 0.0
      %1088 = vmatmul.mubr.f32.gmra.mrb[0].mxu0 %v1005
      %v1089 = vpop.f32.mrb[0].mxu0
      %v1090 = vadd.f32 0.0, %v1089
      %v1091 = vpop.f32.mrb[0].mxu0
      %1092 = vdwg.mxu0
      %v1093 = vmul.f32 %v1080, 0.35355338
      %v1094 = vmul.f32 %v1085, 0.35355338
      %v1095 = vmul.f32 %v1090, 0.35355338
      %v1096 = vsel %vm755, %v1093, -1e+30
      %v1097 = vsel %vm756, %v1094, -1e+30
      %v1098 = vsel %vm757, %v1095, -1e+30
      %vm1099 = vcmask 146432
      %v1100 = vsel %vm1099, %v1096, -inf
      %1101 = vmax.xlane.f32.xlu0 %v1100
      %v1102 = vpop.xlane.xlu0 %1101
      %v1103 = vsel %vm1099, %v1097, -inf
      %1104 = vmax.xlane.f32.xlu0 %v1103
      %v1105 = vpop.xlane.xlu0 %1104
      %vm1106 = vcmask 140288
      %v1107 = vsel %vm1106, %v1098, -inf
      %1108 = vmax.xlane.f32.xlu0 %v1107
      %v1109 = vpop.xlane.xlu0 %1108
      %v1110 = vsub.f32 %v1096, %v1102
      %v1111 = vsub.f32 %v1097, %v1105
      %v1112 = vsub.f32 %v1098, %v1109
      %v1113 = vmul.f32 %v1110, 1.442695
      %v1114 = vpow.pop %v1113
      %v1115 = vmul.f32 %v1111, 1.442695
      %v1116 = vpow.pop %v1115
      %v1117 = vmul.f32 %v1112, 1.442695
      %v1118 = vpow.pop %v1117
      %v1119 = vsel %vm1099, %v1114, 0.0
      %1120 = vadd.xlane.f32.xlu0 %v1119
      %v1121 = vpop.xlane.xlu0 %1120
      %v1122 = vsel %vm1099, %v1116, 0.0
      %1123 = vadd.xlane.f32.xlu0 %v1122
      %v1124 = vpop.xlane.xlu0 %1123
      %v1125 = vsel %vm1106, %v1118, 0.0
      %1126 = vadd.xlane.f32.xlu0 %v1125
      %v1127 = vpop.xlane.xlu0 %1126
      %v1128 = vrcp.pop %v1121
      %v1129 = vrcp.pop %v1124
      %v1130 = vrcp.pop %v1127
      %v1131 = vmul.f32 %v1114, %v1128
      %v1132 = vmul.f32 %v1116, %v1129
      %v1133 = vmul.f32 %v1118, %v1130
      %1134 = vrot.lane.b32.xlu0 %v872, 64
      %v1135 = vpop.permute.xlu0 %1134
      %1136 = vrot.lane.b32.xlu0 %v877, 64
      %v1137 = vpop.permute.xlu0 %1136
      %1138 = vrot.lane.b32.xlu0 %v882, 64
      %v1139 = vpop.permute.xlu0 %1138
      %v1143 = vsel %vm1099, %v1131, 0
      %v1146 = vsel %vm1099, %v1132, 0
      %v1149 = vsel %vm1099, %v1133, 0
      %v1151 = vsel %vm671, %v1139, 0
      %1153 = vmatprep.subr.mxu0 0.0
      %1154 = vmatpush1.msra.mxu0 %v1135
      %1155 = vmatprep.subr.mxu0 0.0
      %1156 = vmatpush1.msra.mxu0 %v1137
      %1157 = vmatprep.subr.mxu0 0.0
      %1158 = vmatpush1.msra.mxu0 %v1151
      %1159 = vmatprep.subr.mxu0 0.0
      %1160 = vmatpush1.msra.mxu0 0.0
      %1161 = vmatprep.subr.mxu0 0.0
      %1162 = vmatpush1.msra.mxu0 0.0
      %1163 = vmatprep.subr.mxu0 0.0
      %1164 = vmatpush1.msra.mxu0 0.0
      %1165 = vmatprep.subr.mxu0 0.0
      %1166 = vmatpush1.msra.mxu0 0.0
      %1167 = vmatprep.subr.mxu0 0.0
      %1168 = vmatpush1.msra.mxu0 0.0
      %1169 = vmatprep.subr.mxu0 0.0
      %1170 = vmatpush1.msra.mxu0 0.0
      %1171 = vmatprep.subr.mxu0 0.0
      %1172 = vmatpush1.msra.mxu0 0.0
      %1173 = vmatprep.subr.mxu0 0.0
      %1174 = vmatpush1.msra.mxu0 0.0
      %1175 = vmatprep.subr.mxu0 0.0
      %1176 = vmatpush1.msra.mxu0 0.0
      %1177 = vmatprep.subr.mxu0 0.0
      %1178 = vmatpush1.msra.mxu0 0.0
      %1179 = vmatprep.subr.mxu0 0.0
      %1180 = vmatpush1.msra.mxu0 0.0
      %1181 = vmatprep.subr.mxu0 0.0
      %1182 = vmatpush1.msra.mxu0 0.0
      %1183 = vmatprep.subr.mxu0 0.0
      %1184 = vmatpush1.msra.mxu0 0.0
      %1185 = vmatprep.subr.mxu0 0.0
      %1186 = vmatpush1.msra.mxu0 0.0
      %1187 = vmatprep.subr.mxu0 0.0
      %1188 = vmatpush1.msra.mxu0 0.0
      %1189 = vmatprep.subr.mxu0 0.0
      %1190 = vmatpush1.msra.mxu0 0.0
      %1191 = vmatprep.subr.mxu0 0.0
      %1192 = vmatpush1.msra.mxu0 0.0
      %1193 = vmatprep.subr.mxu0 0.0
      %1194 = vmatpush1.msra.mxu0 0.0
      %1195 = vmatprep.subr.mxu0 0.0
      %1196 = vmatpush1.msra.mxu0 0.0
      %1197 = vmatprep.subr.mxu0 0.0
      %1198 = vmatpush1.msra.mxu0 0.0
      %1199 = vmatprep.subr.mxu0 0.0
      %1200 = vmatpush1.msra.mxu0 0.0
      %1201 = vmatprep.subr.mxu0 0.0
      %1202 = vmatpush1.msra.mxu0 0.0
      %1203 = vmatprep.subr.mxu0 0.0
      %1204 = vmatpush1.msra.mxu0 0.0
      %1205 = vmatprep.subr.mxu0 0.0
      %1206 = vmatpush1.msra.mxu0 0.0
      %1207 = vmatprep.subr.mxu0 0.0
      %1208 = vmatpush1.msra.mxu0 0.0
      %1209 = vmatprep.subr.mxu0 0.0
      %1210 = vmatpush1.msra.mxu0 0.0
      %1211 = vmatprep.subr.mxu0 0.0
      %1212 = vmatpush1.msra.mxu0 0.0
      %1213 = vmatprep.subr.mxu0 0.0
      %1214 = vmatpush1.msra.mxu0 0.0
      %1215 = vmatprep.subr.mxu0 0.0
      %1216 = vmatpush1.msra.mxu0 0.0
      %1217 = vmatprep.mubr.f32.mxu0 0.0
      %1218 = vmatmul.mubr.f32.gmra.mrb[0].mxu0 %v1143
      %v1219 = vpop.f32.mrb[0].mxu0
      %v1220 = vadd.f32 0.0, %v1219
      %v1221 = vpop.f32.mrb[0].mxu0
      %1222 = vmatprep.mubr.f32.mxu0 0.0
      %1223 = vmatmul.mubr.f32.gmra.mrb[0].mxu0 %v1146
      %v1224 = vpop.f32.mrb[0].mxu0
      %v1225 = vadd.f32 0.0, %v1224
      %v1226 = vpop.f32.mrb[0].mxu0
      %1227 = vmatprep.mubr.f32.mxu0 0.0
      %1228 = vmatmul.mubr.f32.gmra.mrb[0].mxu0 %v1149
      %v1229 = vpop.f32.mrb[0].mxu0
      %v1230 = vadd.f32 0.0, %v1229
      %v1231 = vpop.f32.mrb[0].mxu0
      %1232 = vdwg.mxu0
      %1233 = vrot.lane.b32.xlu0 %v885, 116
      %v1234 = vpop.permute.xlu0 %1233
      %1235 = vrot.lane.b32.xlu0 %v886, 116
      %v1236 = vpop.permute.xlu0 %1235
      %1237 = vrot.lane.b32.xlu0 %v887, 116
      %v1238 = vpop.permute.xlu0 %1237
      %1242 = vrot.lane.b32.xlu0 %v872, 124
      %v1243 = vpop.permute.xlu0 %1242
      %1244 = vrot.lane.b32.xlu0 %v877, 124
      %v1245 = vpop.permute.xlu0 %1244
      %1246 = vrot.lane.b32.xlu0 %v882, 124
      %v1247 = vpop.permute.xlu0 %1246
      %v1251 = vsel %vm912, %v1234, %v1243
      %v1252 = vsel %vm912, %v1236, %v1245
      %v1253 = vsel %vm912, %v1238, %v1247
      %1254 = vrot.lane.b32.xlu0 %v325, 8
      %v1255 = vpop.permute.xlu0 %1254
      %1256 = vrot.lane.b32.xlu0 %v326, 8
      %v1257 = vpop.permute.xlu0 %1256
      %1258 = vrot.lane.b32.xlu0 %v327, 8
      %v1259 = vpop.permute.xlu0 %1258
      %v1263 = vmul.f32 %v872, %v1255
      %v1264 = vmul.f32 %v877, %v1257
      %v1265 = vmul.f32 %v882, %v1259
      %v1266 = vmul.f32 %v1251, %v923
      %v1267 = vmul.f32 %v1252, %v925
      %v1268 = vmul.f32 %v1253, %v927
      %1272 = vrot.lane.b32.xlu0 %v1266, 8
      %v1273 = vpop.permute.xlu0 %1272
      %1274 = vrot.lane.b32.xlu0 %v1267, 8
      %v1275 = vpop.permute.xlu0 %1274
      %1276 = vrot.lane.b32.xlu0 %v1268, 8
      %v1277 = vpop.permute.xlu0 %1276
      %v1281 = vadd.f32 %v1263, %v1273
      %v1282 = vadd.f32 %v1264, %v1275
      %v1283 = vadd.f32 %v1265, %v1277
      %1284 = vrot.lane.b32.xlu0 %v885, 84
      %v1285 = vpop.permute.xlu0 %1284
      %1286 = vrot.lane.b32.xlu0 %v886, 84
      %v1287 = vpop.permute.xlu0 %1286
      %1288 = vrot.lane.b32.xlu0 %v887, 84
      %v1289 = vpop.permute.xlu0 %1288
      %1293 = vrot.lane.b32.xlu0 %v872, 92
      %v1294 = vpop.permute.xlu0 %1293
      %1295 = vrot.lane.b32.xlu0 %v877, 92
      %v1296 = vpop.permute.xlu0 %1295
      %1297 = vrot.lane.b32.xlu0 %v882, 92
      %v1298 = vpop.permute.xlu0 %1297
      %v1302 = vsel %vm912, %v1285, %v1294
      %v1303 = vsel %vm912, %v1287, %v1296
      %v1304 = vsel %vm912, %v1289, %v1298
      %1305 = vrot.lane.b32.xlu0 %v325, 40
      %v1306 = vpop.permute.xlu0 %1305
      %1307 = vrot.lane.b32.xlu0 %v326, 40
      %v1308 = vpop.permute.xlu0 %1307
      %1309 = vrot.lane.b32.xlu0 %v327, 40
      %v1310 = vpop.permute.xlu0 %1309
      %v1314 = vmul.f32 %v872, %v1306
      %v1315 = vmul.f32 %v877, %v1308
      %v1316 = vmul.f32 %v882, %v1310
      %v1317 = vmul.f32 %v1302, %v923
      %v1318 = vmul.f32 %v1303, %v925
      %v1319 = vmul.f32 %v1304, %v927
      %1323 = vrot.lane.b32.xlu0 %v1317, 40
      %v1324 = vpop.permute.xlu0 %1323
      %1325 = vrot.lane.b32.xlu0 %v1318, 40
      %v1326 = vpop.permute.xlu0 %1325
      %1327 = vrot.lane.b32.xlu0 %v1319, 40
      %v1328 = vpop.permute.xlu0 %1327
      %v1332 = vadd.f32 %v1314, %v1324
      %v1333 = vadd.f32 %v1315, %v1326
      %v1334 = vadd.f32 %v1316, %v1328
      %1338 = vrot.lane.b32.xlu0 %v1281, 120
      %v1339 = vpop.permute.xlu0 %1338
      %1340 = vrot.lane.b32.xlu0 %v1282, 120
      %v1341 = vpop.permute.xlu0 %1340
      %1342 = vrot.lane.b32.xlu0 %v1283, 120
      %v1343 = vpop.permute.xlu0 %1342
      %1347 = vrot.lane.b32.xlu0 %v1332, 88
      %v1348 = vpop.permute.xlu0 %1347
      %1349 = vrot.lane.b32.xlu0 %v1333, 88
      %v1350 = vpop.permute.xlu0 %1349
      %1351 = vrot.lane.b32.xlu0 %v1334, 88
      %v1352 = vpop.permute.xlu0 %1351
      %v1353 = vsel %vm997, %v1339, 0
      %v1355 = vsel %vm997, %v1341, 0
      %v1357 = vsel %vm997, %v1343, 0
      %v1359 = vsel %vm997, %v1348, 0
      %v1361 = vsel %vm997, %v1350, 0
      %v1363 = vsel %vm997, %v1352, 0
      %1365 = vmatprep.subr.mxu0 0.0
      %1366 = vmatpush1.xpose.msra.mxu0 %v1359
      %1367 = vmatprep.subr.mxu0 0.0
      %1368 = vmatpush1.xpose.msra.mxu0 %v1361
      %1369 = vmatprep.subr.mxu0 0.0
      %1370 = vmatpush1.xpose.msra.mxu0 %v1363
      %1371 = vmatprep.subr.mxu0 0.0
      %1372 = vmatpush1.xpose.msra.mxu0 0.0
      %1373 = vmatprep.subr.mxu0 0.0
      %1374 = vmatpush1.xpose.msra.mxu0 0.0
      %1375 = vmatprep.subr.mxu0 0.0
      %1376 = vmatpush1.xpose.msra.mxu0 0.0
      %1377 = vmatprep.subr.mxu0 0.0
      %1378 = vmatpush1.xpose.msra.mxu0 0.0
      %1379 = vmatprep.subr.mxu0 0.0
      %1380 = vmatpush1.xpose.msra.mxu0 0.0
      %1381 = vmatprep.subr.mxu0 0.0
      %1382 = vmatpush1.xpose.msra.mxu0 0.0
      %1383 = vmatprep.subr.mxu0 0.0
      %1384 = vmatpush1.xpose.msra.mxu0 0.0
      %1385 = vmatprep.subr.mxu0 0.0
      %1386 = vmatpush1.xpose.msra.mxu0 0.0
      %1387 = vmatprep.subr.mxu0 0.0
      %1388 = vmatpush1.xpose.msra.mxu0 0.0
      %1389 = vmatprep.subr.mxu0 0.0
      %1390 = vmatpush1.xpose.msra.mxu0 0.0
      %1391 = vmatprep.subr.mxu0 0.0
      %1392 = vmatpush1.xpose.msra.mxu0 0.0
      %1393 = vmatprep.subr.mxu0 0.0
      %1394 = vmatpush1.xpose.msra.mxu0 0.0
      %1395 = vmatprep.subr.mxu0 0.0
      %1396 = vmatpush1.xpose.msra.mxu0 0.0
      %1397 = vmatprep.subr.mxu0 0.0
      %1398 = vmatpush1.xpose.msra.mxu0 0.0
      %1399 = vmatprep.subr.mxu0 0.0
      %1400 = vmatpush1.xpose.msra.mxu0 0.0
      %1401 = vmatprep.subr.mxu0 0.0
      %1402 = vmatpush1.xpose.msra.mxu0 0.0
      %1403 = vmatprep.subr.mxu0 0.0
      %1404 = vmatpush1.xpose.msra.mxu0 0.0
      %1405 = vmatprep.subr.mxu0 0.0
      %1406 = vmatpush1.xpose.msra.mxu0 0.0
      %1407 = vmatprep.subr.mxu0 0.0
      %1408 = vmatpush1.xpose.msra.mxu0 0.0
      %1409 = vmatprep.subr.mxu0 0.0
      %1410 = vmatpush1.xpose.msra.mxu0 0.0
      %1411 = vmatprep.subr.mxu0 0.0
      %1412 = vmatpush1.xpose.msra.mxu0 0.0
      %1413 = vmatprep.subr.mxu0 0.0
      %1414 = vmatpush1.xpose.msra.mxu0 0.0
      %1415 = vmatprep.subr.mxu0 0.0
      %1416 = vmatpush1.xpose.msra.mxu0 0.0
      %1417 = vmatprep.subr.mxu0 0.0
      %1418 = vmatpush1.xpose.msra.mxu0 0.0
      %1419 = vmatprep.subr.mxu0 0.0
      %1420 = vmatpush1.xpose.msra.mxu0 0.0
      %1421 = vmatprep.subr.mxu0 0.0
      %1422 = vmatpush1.xpose.msra.mxu0 0.0
      %1423 = vmatprep.subr.mxu0 0.0
      %1424 = vmatpush1.xpose.msra.mxu0 0.0
      %1425 = vmatprep.subr.mxu0 0.0
      %1426 = vmatpush1.xpose.msra.mxu0 0.0
      %1427 = vmatprep.subr.mxu0 0.0
      %1428 = vmatpush1.xpose.msra.mxu0 0.0
      %1429 = vmatprep.mubr.f32.mxu0 0.0
      %1430 = vmatmul.mubr.f32.gmra.mrb[0].mxu0 %v1353
      %v1431 = vpop.f32.mrb[0].mxu0
      %v1432 = vadd.f32 0.0, %v1431
      %v1433 = vpop.f32.mrb[0].mxu0
      %1434 = vmatprep.mubr.f32.mxu0 0.0
      %1435 = vmatmul.mubr.f32.gmra.mrb[0].mxu0 %v1355
      %v1436 = vpop.f32.mrb[0].mxu0
      %v1437 = vadd.f32 0.0, %v1436
      %v1438 = vpop.f32.mrb[0].mxu0
      %1439 = vmatprep.mubr.f32.mxu0 0.0
      %1440 = vmatmul.mubr.f32.gmra.mrb[0].mxu0 %v1357
      %v1441 = vpop.f32.mrb[0].mxu0
      %v1442 = vadd.f32 0.0, %v1441
      %v1443 = vpop.f32.mrb[0].mxu0
      %1444 = vdwg.mxu0
      %v1445 = vmul.f32 %v1432, 0.35355338
      %v1446 = vmul.f32 %v1437, 0.35355338
      %v1447 = vmul.f32 %v1442, 0.35355338
      %v1448 = vsel %vm755, %v1445, -1e+30
      %v1449 = vsel %vm756, %v1446, -1e+30
      %v1450 = vsel %vm757, %v1447, -1e+30
      %v1451 = vsel %vm1099, %v1448, -inf
      %1452 = vmax.xlane.f32.xlu0 %v1451
      %v1453 = vpop.xlane.xlu0 %1452
      %v1454 = vsel %vm1099, %v1449, -inf
      %1455 = vmax.xlane.f32.xlu0 %v1454
      %v1456 = vpop.xlane.xlu0 %1455
      %v1457 = vsel %vm1106, %v1450, -inf
      %1458 = vmax.xlane.f32.xlu0 %v1457
      %v1459 = vpop.xlane.xlu0 %1458
      %v1460 = vsub.f32 %v1448, %v1453
      %v1461 = vsub.f32 %v1449, %v1456
      %v1462 = vsub.f32 %v1450, %v1459
      %v1463 = vmul.f32 %v1460, 1.442695
      %v1464 = vpow.pop %v1463
      %v1465 = vmul.f32 %v1461, 1.442695
      %v1466 = vpow.pop %v1465
      %v1467 = vmul.f32 %v1462, 1.442695
      %v1468 = vpow.pop %v1467
      %v1469 = vsel %vm1099, %v1464, 0.0
      %1470 = vadd.xlane.f32.xlu0 %v1469
      %v1471 = vpop.xlane.xlu0 %1470
      %v1472 = vsel %vm1099, %v1466, 0.0
      %1473 = vadd.xlane.f32.xlu0 %v1472
      %v1474 = vpop.xlane.xlu0 %1473
      %v1475 = vsel %vm1106, %v1468, 0.0
      %1476 = vadd.xlane.f32.xlu0 %v1475
      %v1477 = vpop.xlane.xlu0 %1476
      %v1478 = vrcp.pop %v1471
      %v1479 = vrcp.pop %v1474
      %v1480 = vrcp.pop %v1477
      %v1481 = vmul.f32 %v1464, %v1478
      %v1482 = vmul.f32 %v1466, %v1479
      %v1483 = vmul.f32 %v1468, %v1480
      %1484 = vrot.lane.b32.xlu0 %v872, 56
      %v1485 = vpop.permute.xlu0 %1484
      %1486 = vrot.lane.b32.xlu0 %v877, 56
      %v1487 = vpop.permute.xlu0 %1486
      %1488 = vrot.lane.b32.xlu0 %v882, 56
      %v1489 = vpop.permute.xlu0 %1488
      %v1493 = vsel %vm1099, %v1481, 0
      %v1496 = vsel %vm1099, %v1482, 0
      %v1499 = vsel %vm1099, %v1483, 0
      %v1501 = vsel %vm671, %v1489, 0
      %1503 = vmatprep.subr.mxu0 0.0
      %1504 = vmatpush1.msra.mxu0 %v1485
      %1505 = vmatprep.subr.mxu0 0.0
      %1506 = vmatpush1.msra.mxu0 %v1487
      %1507 = vmatprep.subr.mxu0 0.0
      %1508 = vmatpush1.msra.mxu0 %v1501
      %1509 = vmatprep.subr.mxu0 0.0
      %1510 = vmatpush1.msra.mxu0 0.0
      %1511 = vmatprep.subr.mxu0 0.0
      %1512 = vmatpush1.msra.mxu0 0.0
      %1513 = vmatprep.subr.mxu0 0.0
      %1514 = vmatpush1.msra.mxu0 0.0
      %1515 = vmatprep.subr.mxu0 0.0
      %1516 = vmatpush1.msra.mxu0 0.0
      %1517 = vmatprep.subr.mxu0 0.0
      %1518 = vmatpush1.msra.mxu0 0.0
      %1519 = vmatprep.subr.mxu0 0.0
      %1520 = vmatpush1.msra.mxu0 0.0
      %1521 = vmatprep.subr.mxu0 0.0
      %1522 = vmatpush1.msra.mxu0 0.0
      %1523 = vmatprep.subr.mxu0 0.0
      %1524 = vmatpush1.msra.mxu0 0.0
      %1525 = vmatprep.subr.mxu0 0.0
      %1526 = vmatpush1.msra.mxu0 0.0
      %1527 = vmatprep.subr.mxu0 0.0
      %1528 = vmatpush1.msra.mxu0 0.0
      %1529 = vmatprep.subr.mxu0 0.0
      %1530 = vmatpush1.msra.mxu0 0.0
      %1531 = vmatprep.subr.mxu0 0.0
      %1532 = vmatpush1.msra.mxu0 0.0
      %1533 = vmatprep.subr.mxu0 0.0
      %1534 = vmatpush1.msra.mxu0 0.0
      %1535 = vmatprep.subr.mxu0 0.0
      %1536 = vmatpush1.msra.mxu0 0.0
      %1537 = vmatprep.subr.mxu0 0.0
      %1538 = vmatpush1.msra.mxu0 0.0
      %1539 = vmatprep.subr.mxu0 0.0
      %1540 = vmatpush1.msra.mxu0 0.0
      %1541 = vmatprep.subr.mxu0 0.0
      %1542 = vmatpush1.msra.mxu0 0.0
      %1543 = vmatprep.subr.mxu0 0.0
      %1544 = vmatpush1.msra.mxu0 0.0
      %1545 = vmatprep.subr.mxu0 0.0
      %1546 = vmatpush1.msra.mxu0 0.0
      %1547 = vmatprep.subr.mxu0 0.0
      %1548 = vmatpush1.msra.mxu0 0.0
      %1549 = vmatprep.subr.mxu0 0.0
      %1550 = vmatpush1.msra.mxu0 0.0
      %1551 = vmatprep.subr.mxu0 0.0
      %1552 = vmatpush1.msra.mxu0 0.0
      %1553 = vmatprep.subr.mxu0 0.0
      %1554 = vmatpush1.msra.mxu0 0.0
      %1555 = vmatprep.subr.mxu0 0.0
      %1556 = vmatpush1.msra.mxu0 0.0
      %1557 = vmatprep.subr.mxu0 0.0
      %1558 = vmatpush1.msra.mxu0 0.0
      %1559 = vmatprep.subr.mxu0 0.0
      %1560 = vmatpush1.msra.mxu0 0.0
      %1561 = vmatprep.subr.mxu0 0.0
      %1562 = vmatpush1.msra.mxu0 0.0
      %1563 = vmatprep.subr.mxu0 0.0
      %1564 = vmatpush1.msra.mxu0 0.0
      %1565 = vmatprep.subr.mxu0 0.0
      %1566 = vmatpush1.msra.mxu0 0.0
      %1567 = vmatprep.mubr.f32.mxu0 0.0
      %1568 = vmatmul.mubr.f32.gmra.mrb[0].mxu0 %v1493
      %v1569 = vpop.f32.mrb[0].mxu0
      %v1570 = vadd.f32 0.0, %v1569
      %v1571 = vpop.f32.mrb[0].mxu0
      %1572 = vmatprep.mubr.f32.mxu0 0.0
      %1573 = vmatmul.mubr.f32.gmra.mrb[0].mxu0 %v1496
      %v1574 = vpop.f32.mrb[0].mxu0
      %v1575 = vadd.f32 0.0, %v1574
      %v1576 = vpop.f32.mrb[0].mxu0
      %1577 = vmatprep.mubr.f32.mxu0 0.0
      %1578 = vmatmul.mubr.f32.gmra.mrb[0].mxu0 %v1499
      %v1579 = vpop.f32.mrb[0].mxu0
      %v1580 = vadd.f32 0.0, %v1579
      %v1581 = vpop.f32.mrb[0].mxu0
      %1582 = vdwg.mxu0
      %1583 = vrot.lane.b32.xlu0 %v885, 108
      %v1584 = vpop.permute.xlu0 %1583
      %1585 = vrot.lane.b32.xlu0 %v886, 108
      %v1586 = vpop.permute.xlu0 %1585
      %1587 = vrot.lane.b32.xlu0 %v887, 108
      %v1588 = vpop.permute.xlu0 %1587
      %1592 = vrot.lane.b32.xlu0 %v872, 116
      %v1593 = vpop.permute.xlu0 %1592
      %1594 = vrot.lane.b32.xlu0 %v877, 116
      %v1595 = vpop.permute.xlu0 %1594
      %1596 = vrot.lane.b32.xlu0 %v882, 116
      %v1597 = vpop.permute.xlu0 %1596
      %v1601 = vsel %vm912, %v1584, %v1593
      %v1602 = vsel %vm912, %v1586, %v1595
      %v1603 = vsel %vm912, %v1588, %v1597
      %1604 = vrot.lane.b32.xlu0 %v325, 16
      %v1605 = vpop.permute.xlu0 %1604
      %1606 = vrot.lane.b32.xlu0 %v326, 16
      %v1607 = vpop.permute.xlu0 %1606
      %1608 = vrot.lane.b32.xlu0 %v327, 16
      %v1609 = vpop.permute.xlu0 %1608
      %v1613 = vmul.f32 %v872, %v1605
      %v1614 = vmul.f32 %v877, %v1607
      %v1615 = vmul.f32 %v882, %v1609
      %v1616 = vmul.f32 %v1601, %v923
      %v1617 = vmul.f32 %v1602, %v925
      %v1618 = vmul.f32 %v1603, %v927
      %1622 = vrot.lane.b32.xlu0 %v1616, 16
      %v1623 = vpop.permute.xlu0 %1622
      %1624 = vrot.lane.b32.xlu0 %v1617, 16
      %v1625 = vpop.permute.xlu0 %1624
      %1626 = vrot.lane.b32.xlu0 %v1618, 16
      %v1627 = vpop.permute.xlu0 %1626
      %v1631 = vadd.f32 %v1613, %v1623
      %v1632 = vadd.f32 %v1614, %v1625
      %v1633 = vadd.f32 %v1615, %v1627
      %1634 = vrot.lane.b32.xlu0 %v885, 76
      %v1635 = vpop.permute.xlu0 %1634
      %1636 = vrot.lane.b32.xlu0 %v886, 76
      %v1637 = vpop.permute.xlu0 %1636
      %1638 = vrot.lane.b32.xlu0 %v887, 76
      %v1639 = vpop.permute.xlu0 %1638
      %1643 = vrot.lane.b32.xlu0 %v872, 84
      %v1644 = vpop.permute.xlu0 %1643
      %1645 = vrot.lane.b32.xlu0 %v877, 84
      %v1646 = vpop.permute.xlu0 %1645
      %1647 = vrot.lane.b32.xlu0 %v882, 84
      %v1648 = vpop.permute.xlu0 %1647
      %v1652 = vsel %vm912, %v1635, %v1644
      %v1653 = vsel %vm912, %v1637, %v1646
      %v1654 = vsel %vm912, %v1639, %v1648
      %1655 = vrot.lane.b32.xlu0 %v325, 48
      %v1656 = vpop.permute.xlu0 %1655
      %1657 = vrot.lane.b32.xlu0 %v326, 48
      %v1658 = vpop.permute.xlu0 %1657
      %1659 = vrot.lane.b32.xlu0 %v327, 48
      %v1660 = vpop.permute.xlu0 %1659
      %v1664 = vmul.f32 %v872, %v1656
      %v1665 = vmul.f32 %v877, %v1658
      %v1666 = vmul.f32 %v882, %v1660
      %v1667 = vmul.f32 %v1652, %v923
      %v1668 = vmul.f32 %v1653, %v925
      %v1669 = vmul.f32 %v1654, %v927
      %1673 = vrot.lane.b32.xlu0 %v1667, 48
      %v1674 = vpop.permute.xlu0 %1673
      %1675 = vrot.lane.b32.xlu0 %v1668, 48
      %v1676 = vpop.permute.xlu0 %1675
      %1677 = vrot.lane.b32.xlu0 %v1669, 48
      %v1678 = vpop.permute.xlu0 %1677
      %v1682 = vadd.f32 %v1664, %v1674
      %v1683 = vadd.f32 %v1665, %v1676
      %v1684 = vadd.f32 %v1666, %v1678
      %1688 = vrot.lane.b32.xlu0 %v1631, 112
      %v1689 = vpop.permute.xlu0 %1688
      %1690 = vrot.lane.b32.xlu0 %v1632, 112
      %v1691 = vpop.permute.xlu0 %1690
      %1692 = vrot.lane.b32.xlu0 %v1633, 112
      %v1693 = vpop.permute.xlu0 %1692
      %1697 = vrot.lane.b32.xlu0 %v1682, 80
      %v1698 = vpop.permute.xlu0 %1697
      %1699 = vrot.lane.b32.xlu0 %v1683, 80
      %v1700 = vpop.permute.xlu0 %1699
      %1701 = vrot.lane.b32.xlu0 %v1684, 80
      %v1702 = vpop.permute.xlu0 %1701
      %v1703 = vsel %vm997, %v1689, 0
      %v1705 = vsel %vm997, %v1691, 0
      %v1707 = vsel %vm997, %v1693, 0
      %v1709 = vsel %vm997, %v1698, 0
      %v1711 = vsel %vm997, %v1700, 0
      %v1713 = vsel %vm997, %v1702, 0
      %1715 = vmatprep.subr.mxu0 0.0
      %1716 = vmatpush1.xpose.msra.mxu0 %v1709
      %1717 = vmatprep.subr.mxu0 0.0
      %1718 = vmatpush1.xpose.msra.mxu0 %v1711
      %1719 = vmatprep.subr.mxu0 0.0
      %1720 = vmatpush1.xpose.msra.mxu0 %v1713
      %1721 = vmatprep.subr.mxu0 0.0
      %1722 = vmatpush1.xpose.msra.mxu0 0.0
      %1723 = vmatprep.subr.mxu0 0.0
      %1724 = vmatpush1.xpose.msra.mxu0 0.0
      %1725 = vmatprep.subr.mxu0 0.0
      %1726 = vmatpush1.xpose.msra.mxu0 0.0
      %1727 = vmatprep.subr.mxu0 0.0
      %1728 = vmatpush1.xpose.msra.mxu0 0.0
      %1729 = vmatprep.subr.mxu0 0.0
      %1730 = vmatpush1.xpose.msra.mxu0 0.0
      %1731 = vmatprep.subr.mxu0 0.0
      %1732 = vmatpush1.xpose.msra.mxu0 0.0
      %1733 = vmatprep.subr.mxu0 0.0
      %1734 = vmatpush1.xpose.msra.mxu0 0.0
      %1735 = vmatprep.subr.mxu0 0.0
      %1736 = vmatpush1.xpose.msra.mxu0 0.0
      %1737 = vmatprep.subr.mxu0 0.0
      %1738 = vmatpush1.xpose.msra.mxu0 0.0
      %1739 = vmatprep.subr.mxu0 0.0
      %1740 = vmatpush1.xpose.msra.mxu0 0.0
      %1741 = vmatprep.subr.mxu0 0.0
      %1742 = vmatpush1.xpose.msra.mxu0 0.0
      %1743 = vmatprep.subr.mxu0 0.0
      %1744 = vmatpush1.xpose.msra.mxu0 0.0
      %1745 = vmatprep.subr.mxu0 0.0
      %1746 = vmatpush1.xpose.msra.mxu0 0.0
      %1747 = vmatprep.subr.mxu0 0.0
      %1748 = vmatpush1.xpose.msra.mxu0 0.0
      %1749 = vmatprep.subr.mxu0 0.0
      %1750 = vmatpush1.xpose.msra.mxu0 0.0
      %1751 = vmatprep.subr.mxu0 0.0
      %1752 = vmatpush1.xpose.msra.mxu0 0.0
      %1753 = vmatprep.subr.mxu0 0.0
      %1754 = vmatpush1.xpose.msra.mxu0 0.0
      %1755 = vmatprep.subr.mxu0 0.0
      %1756 = vmatpush1.xpose.msra.mxu0 0.0
      %1757 = vmatprep.subr.mxu0 0.0
      %1758 = vmatpush1.xpose.msra.mxu0 0.0
      %1759 = vmatprep.subr.mxu0 0.0
      %1760 = vmatpush1.xpose.msra.mxu0 0.0
      %1761 = vmatprep.subr.mxu0 0.0
      %1762 = vmatpush1.xpose.msra.mxu0 0.0
      %1763 = vmatprep.subr.mxu0 0.0
      %1764 = vmatpush1.xpose.msra.mxu0 0.0
      %1765 = vmatprep.subr.mxu0 0.0
      %1766 = vmatpush1.xpose.msra.mxu0 0.0
      %1767 = vmatprep.subr.mxu0 0.0
      %1768 = vmatpush1.xpose.msra.mxu0 0.0
      %1769 = vmatprep.subr.mxu0 0.0
      %1770 = vmatpush1.xpose.msra.mxu0 0.0
      %1771 = vmatprep.subr.mxu0 0.0
      %1772 = vmatpush1.xpose.msra.mxu0 0.0
      %1773 = vmatprep.subr.mxu0 0.0
      %1774 = vmatpush1.xpose.msra.mxu0 0.0
      %1775 = vmatprep.subr.mxu0 0.0
      %1776 = vmatpush1.xpose.msra.mxu0 0.0
      %1777 = vmatprep.subr.mxu0 0.0
      %1778 = vmatpush1.xpose.msra.mxu0 0.0
      %1779 = vmatprep.mubr.f32.mxu0 0.0
      %1780 = vmatmul.mubr.f32.gmra.mrb[0].mxu0 %v1703
      %v1781 = vpop.f32.mrb[0].mxu0
      %v1782 = vadd.f32 0.0, %v1781
      %v1783 = vpop.f32.mrb[0].mxu0
      %1784 = vmatprep.mubr.f32.mxu0 0.0
      %1785 = vmatmul.mubr.f32.gmra.mrb[0].mxu0 %v1705
      %v1786 = vpop.f32.mrb[0].mxu0
      %v1787 = vadd.f32 0.0, %v1786
      %v1788 = vpop.f32.mrb[0].mxu0
      %1789 = vmatprep.mubr.f32.mxu0 0.0
      %1790 = vmatmul.mubr.f32.gmra.mrb[0].mxu0 %v1707
      %v1791 = vpop.f32.mrb[0].mxu0
      %v1792 = vadd.f32 0.0, %v1791
      %v1793 = vpop.f32.mrb[0].mxu0
      %1794 = vdwg.mxu0
      %v1795 = vmul.f32 %v1782, 0.35355338
      %v1796 = vmul.f32 %v1787, 0.35355338
      %v1797 = vmul.f32 %v1792, 0.35355338
      %v1798 = vsel %vm755, %v1795, -1e+30
      %v1799 = vsel %vm756, %v1796, -1e+30
      %v1800 = vsel %vm757, %v1797, -1e+30
      %v1801 = vsel %vm1099, %v1798, -inf
      %1802 = vmax.xlane.f32.xlu0 %v1801
      %v1803 = vpop.xlane.xlu0 %1802
      %v1804 = vsel %vm1099, %v1799, -inf
      %1805 = vmax.xlane.f32.xlu0 %v1804
      %v1806 = vpop.xlane.xlu0 %1805
      %v1807 = vsel %vm1106, %v1800, -inf
      %1808 = vmax.xlane.f32.xlu0 %v1807
      %v1809 = vpop.xlane.xlu0 %1808
      %v1810 = vsub.f32 %v1798, %v1803
      %v1811 = vsub.f32 %v1799, %v1806
      %v1812 = vsub.f32 %v1800, %v1809
      %v1813 = vmul.f32 %v1810, 1.442695
      %v1814 = vpow.pop %v1813
      %v1815 = vmul.f32 %v1811, 1.442695
      %v1816 = vpow.pop %v1815
      %v1817 = vmul.f32 %v1812, 1.442695
      %v1818 = vpow.pop %v1817
      %v1819 = vsel %vm1099, %v1814, 0.0
      %1820 = vadd.xlane.f32.xlu0 %v1819
      %v1821 = vpop.xlane.xlu0 %1820
      %v1822 = vsel %vm1099, %v1816, 0.0
      %1823 = vadd.xlane.f32.xlu0 %v1822
      %v1824 = vpop.xlane.xlu0 %1823
      %v1825 = vsel %vm1106, %v1818, 0.0
      %1826 = vadd.xlane.f32.xlu0 %v1825
      %v1827 = vpop.xlane.xlu0 %1826
      %v1828 = vrcp.pop %v1821
      %v1829 = vrcp.pop %v1824
      %v1830 = vrcp.pop %v1827
      %v1831 = vmul.f32 %v1814, %v1828
      %v1832 = vmul.f32 %v1816, %v1829
      %v1833 = vmul.f32 %v1818, %v1830
      %1834 = vrot.lane.b32.xlu0 %v872, 48
      %v1835 = vpop.permute.xlu0 %1834
      %1836 = vrot.lane.b32.xlu0 %v877, 48
      %v1837 = vpop.permute.xlu0 %1836
      %1838 = vrot.lane.b32.xlu0 %v882, 48
      %v1839 = vpop.permute.xlu0 %1838
      %v1843 = vsel %vm1099, %v1831, 0
      %v1846 = vsel %vm1099, %v1832, 0
      %v1849 = vsel %vm1099, %v1833, 0
      %v1851 = vsel %vm671, %v1839, 0
      %1853 = vmatprep.subr.mxu0 0.0
      %1854 = vmatpush1.msra.mxu0 %v1835
      %1855 = vmatprep.subr.mxu0 0.0
      %1856 = vmatpush1.msra.mxu0 %v1837
      %1857 = vmatprep.subr.mxu0 0.0
      %1858 = vmatpush1.msra.mxu0 %v1851
      %1859 = vmatprep.subr.mxu0 0.0
      %1860 = vmatpush1.msra.mxu0 0.0
      %1861 = vmatprep.subr.mxu0 0.0
      %1862 = vmatpush1.msra.mxu0 0.0
      %1863 = vmatprep.subr.mxu0 0.0
      %1864 = vmatpush1.msra.mxu0 0.0
      %1865 = vmatprep.subr.mxu0 0.0
      %1866 = vmatpush1.msra.mxu0 0.0
      %1867 = vmatprep.subr.mxu0 0.0
      %1868 = vmatpush1.msra.mxu0 0.0
      %1869 = vmatprep.subr.mxu0 0.0
      %1870 = vmatpush1.msra.mxu0 0.0
      %1871 = vmatprep.subr.mxu0 0.0
      %1872 = vmatpush1.msra.mxu0 0.0
      %1873 = vmatprep.subr.mxu0 0.0
      %1874 = vmatpush1.msra.mxu0 0.0
      %1875 = vmatprep.subr.mxu0 0.0
      %1876 = vmatpush1.msra.mxu0 0.0
      %1877 = vmatprep.subr.mxu0 0.0
      %1878 = vmatpush1.msra.mxu0 0.0
      %1879 = vmatprep.subr.mxu0 0.0
      %1880 = vmatpush1.msra.mxu0 0.0
      %1881 = vmatprep.subr.mxu0 0.0
      %1882 = vmatpush1.msra.mxu0 0.0
      %1883 = vmatprep.subr.mxu0 0.0
      %1884 = vmatpush1.msra.mxu0 0.0
      %1885 = vmatprep.subr.mxu0 0.0
      %1886 = vmatpush1.msra.mxu0 0.0
      %1887 = vmatprep.subr.mxu0 0.0
      %1888 = vmatpush1.msra.mxu0 0.0
      %1889 = vmatprep.subr.mxu0 0.0
      %1890 = vmatpush1.msra.mxu0 0.0
      %1891 = vmatprep.subr.mxu0 0.0
      %1892 = vmatpush1.msra.mxu0 0.0
      %1893 = vmatprep.subr.mxu0 0.0
      %1894 = vmatpush1.msra.mxu0 0.0
      %1895 = vmatprep.subr.mxu0 0.0
      %1896 = vmatpush1.msra.mxu0 0.0
      %1897 = vmatprep.subr.mxu0 0.0
      %1898 = vmatpush1.msra.mxu0 0.0
      %1899 = vmatprep.subr.mxu0 0.0
      %1900 = vmatpush1.msra.mxu0 0.0
      %1901 = vmatprep.subr.mxu0 0.0
      %1902 = vmatpush1.msra.mxu0 0.0
      %1903 = vmatprep.subr.mxu0 0.0
      %1904 = vmatpush1.msra.mxu0 0.0
      %1905 = vmatprep.subr.mxu0 0.0
      %1906 = vmatpush1.msra.mxu0 0.0
      %1907 = vmatprep.subr.mxu0 0.0
      %1908 = vmatpush1.msra.mxu0 0.0
      %1909 = vmatprep.subr.mxu0 0.0
      %1910 = vmatpush1.msra.mxu0 0.0
      %1911 = vmatprep.subr.mxu0 0.0
      %1912 = vmatpush1.msra.mxu0 0.0
      %1913 = vmatprep.subr.mxu0 0.0
      %1914 = vmatpush1.msra.mxu0 0.0
      %1915 = vmatprep.subr.mxu0 0.0
      %1916 = vmatpush1.msra.mxu0 0.0
      %1917 = vmatprep.mubr.f32.mxu0 0.0
      %1918 = vmatmul.mubr.f32.gmra.mrb[0].mxu0 %v1843
      %v1919 = vpop.f32.mrb[0].mxu0
      %v1920 = vadd.f32 0.0, %v1919
      %v1921 = vpop.f32.mrb[0].mxu0
      %1922 = vmatprep.mubr.f32.mxu0 0.0
      %1923 = vmatmul.mubr.f32.gmra.mrb[0].mxu0 %v1846
      %v1924 = vpop.f32.mrb[0].mxu0
      %v1925 = vadd.f32 0.0, %v1924
      %v1926 = vpop.f32.mrb[0].mxu0
      %1927 = vmatprep.mubr.f32.mxu0 0.0
      %1928 = vmatmul.mubr.f32.gmra.mrb[0].mxu0 %v1849
      %v1929 = vpop.f32.mrb[0].mxu0
      %v1930 = vadd.f32 0.0, %v1929
      %v1931 = vpop.f32.mrb[0].mxu0
      %1932 = vdwg.mxu0
      %1933 = vrot.lane.b32.xlu0 %v885, 100
      %v1934 = vpop.permute.xlu0 %1933
      %1935 = vrot.lane.b32.xlu0 %v886, 100
      %v1936 = vpop.permute.xlu0 %1935
      %1937 = vrot.lane.b32.xlu0 %v887, 100
      %v1938 = vpop.permute.xlu0 %1937
      %1942 = vrot.lane.b32.xlu0 %v872, 108
      %v1943 = vpop.permute.xlu0 %1942
      %1944 = vrot.lane.b32.xlu0 %v877, 108
      %v1945 = vpop.permute.xlu0 %1944
      %1946 = vrot.lane.b32.xlu0 %v882, 108
      %v1947 = vpop.permute.xlu0 %1946
      %v1951 = vsel %vm912, %v1934, %v1943
      %v1952 = vsel %vm912, %v1936, %v1945
      %v1953 = vsel %vm912, %v1938, %v1947
      %1954 = vrot.lane.b32.xlu0 %v325, 24
      %v1955 = vpop.permute.xlu0 %1954
      %1956 = vrot.lane.b32.xlu0 %v326, 24
      %v1957 = vpop.permute.xlu0 %1956
      %1958 = vrot.lane.b32.xlu0 %v327, 24
      %v1959 = vpop.permute.xlu0 %1958
      %v1963 = vmul.f32 %v872, %v1955
      %v1964 = vmul.f32 %v877, %v1957
      %v1965 = vmul.f32 %v882, %v1959
      %v1966 = vmul.f32 %v1951, %v923
      %v1967 = vmul.f32 %v1952, %v925
      %v1968 = vmul.f32 %v1953, %v927
      %1972 = vrot.lane.b32.xlu0 %v1966, 24
      %v1973 = vpop.permute.xlu0 %1972
      %1974 = vrot.lane.b32.xlu0 %v1967, 24
      %v1975 = vpop.permute.xlu0 %1974
      %1976 = vrot.lane.b32.xlu0 %v1968, 24
      %v1977 = vpop.permute.xlu0 %1976
      %v1981 = vadd.f32 %v1963, %v1973
      %v1982 = vadd.f32 %v1964, %v1975
      %v1983 = vadd.f32 %v1965, %v1977
      %1984 = vrot.lane.b32.xlu0 %v885, 68
      %v1985 = vpop.permute.xlu0 %1984
      %1986 = vrot.lane.b32.xlu0 %v886, 68
      %v1987 = vpop.permute.xlu0 %1986
      %1988 = vrot.lane.b32.xlu0 %v887, 68
      %v1989 = vpop.permute.xlu0 %1988
      %1993 = vrot.lane.b32.xlu0 %v872, 76
      %v1994 = vpop.permute.xlu0 %1993
      %1995 = vrot.lane.b32.xlu0 %v877, 76
      %v1996 = vpop.permute.xlu0 %1995
      %1997 = vrot.lane.b32.xlu0 %v882, 76
      %v1998 = vpop.permute.xlu0 %1997
      %v2002 = vsel %vm912, %v1985, %v1994
      %v2003 = vsel %vm912, %v1987, %v1996
      %v2004 = vsel %vm912, %v1989, %v1998
      %2005 = vrot.lane.b32.xlu0 %v325, 56
      %v2006 = vpop.permute.xlu0 %2005
      %2007 = vrot.lane.b32.xlu0 %v326, 56
      %v2008 = vpop.permute.xlu0 %2007
      %2009 = vrot.lane.b32.xlu0 %v327, 56
      %v2010 = vpop.permute.xlu0 %2009
      %v2014 = vmul.f32 %v872, %v2006
      %v2015 = vmul.f32 %v877, %v2008
      %v2016 = vmul.f32 %v882, %v2010
      %v2017 = vmul.f32 %v2002, %v923
      %v2018 = vmul.f32 %v2003, %v925
      %v2019 = vmul.f32 %v2004, %v927
      %2023 = vrot.lane.b32.xlu0 %v2017, 56
      %v2024 = vpop.permute.xlu0 %2023
      %2025 = vrot.lane.b32.xlu0 %v2018, 56
      %v2026 = vpop.permute.xlu0 %2025
      %2027 = vrot.lane.b32.xlu0 %v2019, 56
      %v2028 = vpop.permute.xlu0 %2027
      %v2032 = vadd.f32 %v2014, %v2024
      %v2033 = vadd.f32 %v2015, %v2026
      %v2034 = vadd.f32 %v2016, %v2028
      %2038 = vrot.lane.b32.xlu0 %v1981, 104
      %v2039 = vpop.permute.xlu0 %2038
      %2040 = vrot.lane.b32.xlu0 %v1982, 104
      %v2041 = vpop.permute.xlu0 %2040
      %2042 = vrot.lane.b32.xlu0 %v1983, 104
      %v2043 = vpop.permute.xlu0 %2042
      %2047 = vrot.lane.b32.xlu0 %v2032, 72
      %v2048 = vpop.permute.xlu0 %2047
      %2049 = vrot.lane.b32.xlu0 %v2033, 72
      %v2050 = vpop.permute.xlu0 %2049
      %2051 = vrot.lane.b32.xlu0 %v2034, 72
      %v2052 = vpop.permute.xlu0 %2051
      %v2053 = vsel %vm997, %v2039, 0
      %v2055 = vsel %vm997, %v2041, 0
      %v2057 = vsel %vm997, %v2043, 0
      %v2059 = vsel %vm997, %v2048, 0
      %v2061 = vsel %vm997, %v2050, 0
      %v2063 = vsel %vm997, %v2052, 0
      %2065 = vmatprep.subr.mxu0 0.0
      %2066 = vmatpush1.xpose.msra.mxu0 %v2059
      %2067 = vmatprep.subr.mxu0 0.0
      %2068 = vmatpush1.xpose.msra.mxu0 %v2061
      %2069 = vmatprep.subr.mxu0 0.0
      %2070 = vmatpush1.xpose.msra.mxu0 %v2063
      %2071 = vmatprep.subr.mxu0 0.0
      %2072 = vmatpush1.xpose.msra.mxu0 0.0
      %2073 = vmatprep.subr.mxu0 0.0
      %2074 = vmatpush1.xpose.msra.mxu0 0.0
      %2075 = vmatprep.subr.mxu0 0.0
      %2076 = vmatpush1.xpose.msra.mxu0 0.0
      %2077 = vmatprep.subr.mxu0 0.0
      %2078 = vmatpush1.xpose.msra.mxu0 0.0
      %2079 = vmatprep.subr.mxu0 0.0
      %2080 = vmatpush1.xpose.msra.mxu0 0.0
      %2081 = vmatprep.subr.mxu0 0.0
      %2082 = vmatpush1.xpose.msra.mxu0 0.0
      %2083 = vmatprep.subr.mxu0 0.0
      %2084 = vmatpush1.xpose.msra.mxu0 0.0
      %2085 = vmatprep.subr.mxu0 0.0
      %2086 = vmatpush1.xpose.msra.mxu0 0.0
      %2087 = vmatprep.subr.mxu0 0.0
      %2088 = vmatpush1.xpose.msra.mxu0 0.0
      %2089 = vmatprep.subr.mxu0 0.0
      %2090 = vmatpush1.xpose.msra.mxu0 0.0
      %2091 = vmatprep.subr.mxu0 0.0
      %2092 = vmatpush1.xpose.msra.mxu0 0.0
      %2093 = vmatprep.subr.mxu0 0.0
      %2094 = vmatpush1.xpose.msra.mxu0 0.0
      %2095 = vmatprep.subr.mxu0 0.0
      %2096 = vmatpush1.xpose.msra.mxu0 0.0
      %2097 = vmatprep.subr.mxu0 0.0
      %2098 = vmatpush1.xpose.msra.mxu0 0.0
      %2099 = vmatprep.subr.mxu0 0.0
      %2100 = vmatpush1.xpose.msra.mxu0 0.0
      %2101 = vmatprep.subr.mxu0 0.0
      %2102 = vmatpush1.xpose.msra.mxu0 0.0
      %2103 = vmatprep.subr.mxu0 0.0
      %2104 = vmatpush1.xpose.msra.mxu0 0.0
      %2105 = vmatprep.subr.mxu0 0.0
      %2106 = vmatpush1.xpose.msra.mxu0 0.0
      %2107 = vmatprep.subr.mxu0 0.0
      %2108 = vmatpush1.xpose.msra.mxu0 0.0
      %2109 = vmatprep.subr.mxu0 0.0
      %2110 = vmatpush1.xpose.msra.mxu0 0.0
      %2111 = vmatprep.subr.mxu0 0.0
      %2112 = vmatpush1.xpose.msra.mxu0 0.0
      %2113 = vmatprep.subr.mxu0 0.0
      %2114 = vmatpush1.xpose.msra.mxu0 0.0
      %2115 = vmatprep.subr.mxu0 0.0
      %2116 = vmatpush1.xpose.msra.mxu0 0.0
      %2117 = vmatprep.subr.mxu0 0.0
      %2118 = vmatpush1.xpose.msra.mxu0 0.0
      %2119 = vmatprep.subr.mxu0 0.0
      %2120 = vmatpush1.xpose.msra.mxu0 0.0
      %2121 = vmatprep.subr.mxu0 0.0
      %2122 = vmatpush1.xpose.msra.mxu0 0.0
      %2123 = vmatprep.subr.mxu0 0.0
      %2124 = vmatpush1.xpose.msra.mxu0 0.0
      %2125 = vmatprep.subr.mxu0 0.0
      %2126 = vmatpush1.xpose.msra.mxu0 0.0
      %2127 = vmatprep.subr.mxu0 0.0
      %2128 = vmatpush1.xpose.msra.mxu0 0.0
      %2129 = vmatprep.mubr.f32.mxu0 0.0
      %2130 = vmatmul.mubr.f32.gmra.mrb[0].mxu0 %v2053
      %v2131 = vpop.f32.mrb[0].mxu0
      %v2132 = vadd.f32 0.0, %v2131
      %v2133 = vpop.f32.mrb[0].mxu0
      %2134 = vmatprep.mubr.f32.mxu0 0.0
      %2135 = vmatmul.mubr.f32.gmra.mrb[0].mxu0 %v2055
      %v2136 = vpop.f32.mrb[0].mxu0
      %v2137 = vadd.f32 0.0, %v2136
      %v2138 = vpop.f32.mrb[0].mxu0
      %2139 = vmatprep.mubr.f32.mxu0 0.0
      %2140 = vmatmul.mubr.f32.gmra.mrb[0].mxu0 %v2057
      %v2141 = vpop.f32.mrb[0].mxu0
      %v2142 = vadd.f32 0.0, %v2141
      %v2143 = vpop.f32.mrb[0].mxu0
      %2144 = vdwg.mxu0
      %v2145 = vmul.f32 %v2132, 0.35355338
      %v2146 = vmul.f32 %v2137, 0.35355338
      %v2147 = vmul.f32 %v2142, 0.35355338
      %v2148 = vsel %vm755, %v2145, -1e+30
      %v2149 = vsel %vm756, %v2146, -1e+30
      %v2150 = vsel %vm757, %v2147, -1e+30
      %v2151 = vsel %vm1099, %v2148, -inf
      %2152 = vmax.xlane.f32.xlu0 %v2151
      %v2153 = vpop.xlane.xlu0 %2152
      %v2154 = vsel %vm1099, %v2149, -inf
      %2155 = vmax.xlane.f32.xlu0 %v2154
      %v2156 = vpop.xlane.xlu0 %2155
      %v2157 = vsel %vm1106, %v2150, -inf
      %2158 = vmax.xlane.f32.xlu0 %v2157
      %v2159 = vpop.xlane.xlu0 %2158
      %v2160 = vsub.f32 %v2148, %v2153
      %v2161 = vsub.f32 %v2149, %v2156
      %v2162 = vsub.f32 %v2150, %v2159
      %v2163 = vmul.f32 %v2160, 1.442695
      %v2164 = vpow.pop %v2163
      %v2165 = vmul.f32 %v2161, 1.442695
      %v2166 = vpow.pop %v2165
      %v2167 = vmul.f32 %v2162, 1.442695
      %v2168 = vpow.pop %v2167
      %v2169 = vsel %vm1099, %v2164, 0.0
      %2170 = vadd.xlane.f32.xlu0 %v2169
      %v2171 = vpop.xlane.xlu0 %2170
      %v2172 = vsel %vm1099, %v2166, 0.0
      %2173 = vadd.xlane.f32.xlu0 %v2172
      %v2174 = vpop.xlane.xlu0 %2173
      %v2175 = vsel %vm1106, %v2168, 0.0
      %2176 = vadd.xlane.f32.xlu0 %v2175
      %v2177 = vpop.xlane.xlu0 %2176
      %v2178 = vrcp.pop %v2171
      %v2179 = vrcp.pop %v2174
      %v2180 = vrcp.pop %v2177
      %v2181 = vmul.f32 %v2164, %v2178
      %v2182 = vmul.f32 %v2166, %v2179
      %v2183 = vmul.f32 %v2168, %v2180
      %2184 = vrot.lane.b32.xlu0 %v872, 40
      %v2185 = vpop.permute.xlu0 %2184
      %2186 = vrot.lane.b32.xlu0 %v877, 40
      %v2187 = vpop.permute.xlu0 %2186
      %2188 = vrot.lane.b32.xlu0 %v882, 40
      %v2189 = vpop.permute.xlu0 %2188
      %v2193 = vsel %vm1099, %v2181, 0
      %v2196 = vsel %vm1099, %v2182, 0
      %v2199 = vsel %vm1099, %v2183, 0
      %v2201 = vsel %vm671, %v2189, 0
      %2203 = vmatprep.subr.mxu0 0.0
      %2204 = vmatpush1.msra.mxu0 %v2185
      %2205 = vmatprep.subr.mxu0 0.0
      %2206 = vmatpush1.msra.mxu0 %v2187
      %2207 = vmatprep.subr.mxu0 0.0
      %2208 = vmatpush1.msra.mxu0 %v2201
      %2209 = vmatprep.subr.mxu0 0.0
      %2210 = vmatpush1.msra.mxu0 0.0
      %2211 = vmatprep.subr.mxu0 0.0
      %2212 = vmatpush1.msra.mxu0 0.0
      %2213 = vmatprep.subr.mxu0 0.0
      %2214 = vmatpush1.msra.mxu0 0.0
      %2215 = vmatprep.subr.mxu0 0.0
      %2216 = vmatpush1.msra.mxu0 0.0
      %2217 = vmatprep.subr.mxu0 0.0
      %2218 = vmatpush1.msra.mxu0 0.0
      %2219 = vmatprep.subr.mxu0 0.0
      %2220 = vmatpush1.msra.mxu0 0.0
      %2221 = vmatprep.subr.mxu0 0.0
      %2222 = vmatpush1.msra.mxu0 0.0
      %2223 = vmatprep.subr.mxu0 0.0
      %2224 = vmatpush1.msra.mxu0 0.0
      %2225 = vmatprep.subr.mxu0 0.0
      %2226 = vmatpush1.msra.mxu0 0.0
      %2227 = vmatprep.subr.mxu0 0.0
      %2228 = vmatpush1.msra.mxu0 0.0
      %2229 = vmatprep.subr.mxu0 0.0
      %2230 = vmatpush1.msra.mxu0 0.0
      %2231 = vmatprep.subr.mxu0 0.0
      %2232 = vmatpush1.msra.mxu0 0.0
      %2233 = vmatprep.subr.mxu0 0.0
      %2234 = vmatpush1.msra.mxu0 0.0
      %2235 = vmatprep.subr.mxu0 0.0
      %2236 = vmatpush1.msra.mxu0 0.0
      %2237 = vmatprep.subr.mxu0 0.0
      %2238 = vmatpush1.msra.mxu0 0.0
      %2239 = vmatprep.subr.mxu0 0.0
      %2240 = vmatpush1.msra.mxu0 0.0
      %2241 = vmatprep.subr.mxu0 0.0
      %2242 = vmatpush1.msra.mxu0 0.0
      %2243 = vmatprep.subr.mxu0 0.0
      %2244 = vmatpush1.msra.mxu0 0.0
      %2245 = vmatprep.subr.mxu0 0.0
      %2246 = vmatpush1.msra.mxu0 0.0
      %2247 = vmatprep.subr.mxu0 0.0
      %2248 = vmatpush1.msra.mxu0 0.0
      %2249 = vmatprep.subr.mxu0 0.0
      %2250 = vmatpush1.msra.mxu0 0.0
      %2251 = vmatprep.subr.mxu0 0.0
      %2252 = vmatpush1.msra.mxu0 0.0
      %2253 = vmatprep.subr.mxu0 0.0
      %2254 = vmatpush1.msra.mxu0 0.0
      %2255 = vmatprep.subr.mxu0 0.0
      %2256 = vmatpush1.msra.mxu0 0.0
      %2257 = vmatprep.subr.mxu0 0.0
      %2258 = vmatpush1.msra.mxu0 0.0
      %2259 = vmatprep.subr.mxu0 0.0
      %2260 = vmatpush1.msra.mxu0 0.0
      %2261 = vmatprep.subr.mxu0 0.0
      %2262 = vmatpush1.msra.mxu0 0.0
      %2263 = vmatprep.subr.mxu0 0.0
      %2264 = vmatpush1.msra.mxu0 0.0
      %2265 = vmatprep.subr.mxu0 0.0
      %2266 = vmatpush1.msra.mxu0 0.0
      %2267 = vmatprep.mubr.f32.mxu0 0.0
      %2268 = vmatmul.mubr.f32.gmra.mrb[0].mxu0 %v2193
      %v2269 = vpop.f32.mrb[0].mxu0
      %v2270 = vadd.f32 0.0, %v2269
      %v2271 = vpop.f32.mrb[0].mxu0
      %2272 = vmatprep.mubr.f32.mxu0 0.0
      %2273 = vmatmul.mubr.f32.gmra.mrb[0].mxu0 %v2196
      %v2274 = vpop.f32.mrb[0].mxu0
      %v2275 = vadd.f32 0.0, %v2274
      %v2276 = vpop.f32.mrb[0].mxu0
      %2277 = vmatprep.mubr.f32.mxu0 0.0
      %2278 = vmatmul.mubr.f32.gmra.mrb[0].mxu0 %v2199
      %v2279 = vpop.f32.mrb[0].mxu0
      %v2280 = vadd.f32 0.0, %v2279
      %v2281 = vpop.f32.mrb[0].mxu0
      %2282 = vdwg.mxu0
      %2286 = vrot.lane.b32.xlu0 %v1570, 8
      %v2287 = vpop.permute.xlu0 %2286
      %2288 = vrot.lane.b32.xlu0 %v1575, 8
      %v2289 = vpop.permute.xlu0 %2288
      %2290 = vrot.lane.b32.xlu0 %v1580, 8
      %v2291 = vpop.permute.xlu0 %2290
      %2298 = vrot.lane.b32.xlu0 %v1920, 16
      %v2299 = vpop.permute.xlu0 %2298
      %2300 = vrot.lane.b32.xlu0 %v1925, 16
      %v2301 = vpop.permute.xlu0 %2300
      %2302 = vrot.lane.b32.xlu0 %v1930, 16
      %v2303 = vpop.permute.xlu0 %2302
      %2310 = vrot.lane.b32.xlu0 %v2270, 24
      %v2311 = vpop.permute.xlu0 %2310
      %2312 = vrot.lane.b32.xlu0 %v2275, 24
      %v2313 = vpop.permute.xlu0 %2312
      %2314 = vrot.lane.b32.xlu0 %v2280, 24
      %v2315 = vpop.permute.xlu0 %2314
      %v2319 = vsel %vm997, %v1220, %v2287
      %v2320 = vsel %vm997, %v1225, %v2289
      %v2321 = vsel %vm997, %v1230, %v2291
      %v2322 = vsel %vm337, %v2319, %v2299
      %v2323 = vsel %vm337, %v2320, %v2301
      %v2324 = vsel %vm337, %v2321, %v2303
      %vm2325 = vcmask 195584
      %v2326 = vsel %vm2325, %v2322, %v2311
      %v2327 = vsel %vm2325, %v2323, %v2313
      %v2328 = vsel %vm2325, %v2324, %v2315
      %v2329 = vld [vmem:[%s7] sm:$0xff]
      %v2330 = vld [vmem:[%s7 + $0x8] sm:$0xff]
      %v2331 = vld [vmem:[%s7 + $0x10] sm:$0xff]
      %v2332 = vld [vmem:[%s7 + $0x18] sm:$0xff]
      %v2334 = vsel %vm761, %v2326, 0
      %v2337 = vsel %vm761, %v2327, 0
      %v2340 = vsel %vm761, %v2328, 0
      %2342 = vmatprep.subr.mxu0 0.0
      %2343 = vmatpush1.msra.mxu0 %v2329
      %2344 = vmatprep.subr.mxu0 0.0
      %2345 = vmatpush1.msra.mxu0 %v2330
      %2346 = vmatprep.subr.mxu0 0.0
      %2347 = vmatpush1.msra.mxu0 %v2331
      %2348 = vmatprep.subr.mxu0 0.0
      %2349 = vmatpush1.msra.mxu0 %v2332
      %2350 = vmatprep.subr.mxu0 0.0
      %2351 = vmatpush1.msra.mxu0 0.0
      %2352 = vmatprep.subr.mxu0 0.0
      %2353 = vmatpush1.msra.mxu0 0.0
      %2354 = vmatprep.subr.mxu0 0.0
      %2355 = vmatpush1.msra.mxu0 0.0
      %2356 = vmatprep.subr.mxu0 0.0
      %2357 = vmatpush1.msra.mxu0 0.0
      %2358 = vmatprep.subr.mxu0 0.0
      %2359 = vmatpush1.msra.mxu0 0.0
      %2360 = vmatprep.subr.mxu0 0.0
      %2361 = vmatpush1.msra.mxu0 0.0
      %2362 = vmatprep.subr.mxu0 0.0
      %2363 = vmatpush1.msra.mxu0 0.0
      %2364 = vmatprep.subr.mxu0 0.0
      %2365 = vmatpush1.msra.mxu0 0.0
      %2366 = vmatprep.subr.mxu0 0.0
      %2367 = vmatpush1.msra.mxu0 0.0
      %2368 = vmatprep.subr.mxu0 0.0
      %2369 = vmatpush1.msra.mxu0 0.0
      %2370 = vmatprep.subr.mxu0 0.0
      %2371 = vmatpush1.msra.mxu0 0.0
      %2372 = vmatprep.subr.mxu0 0.0
      %2373 = vmatpush1.msra.mxu0 0.0
      %2374 = vmatprep.subr.mxu0 0.0
      %2375 = vmatpush1.msra.mxu0 0.0
      %2376 = vmatprep.subr.mxu0 0.0
      %2377 = vmatpush1.msra.mxu0 0.0
      %2378 = vmatprep.subr.mxu0 0.0
      %2379 = vmatpush1.msra.mxu0 0.0
      %2380 = vmatprep.subr.mxu0 0.0
      %2381 = vmatpush1.msra.mxu0 0.0
      %2382 = vmatprep.subr.mxu0 0.0
      %2383 = vmatpush1.msra.mxu0 0.0
      %2384 = vmatprep.subr.mxu0 0.0
      %2385 = vmatpush1.msra.mxu0 0.0
      %2386 = vmatprep.subr.mxu0 0.0
      %2387 = vmatpush1.msra.mxu0 0.0
      %2388 = vmatprep.subr.mxu0 0.0
      %2389 = vmatpush1.msra.mxu0 0.0
      %2390 = vmatprep.subr.mxu0 0.0
      %2391 = vmatpush1.msra.mxu0 0.0
      %2392 = vmatprep.subr.mxu0 0.0
      %2393 = vmatpush1.msra.mxu0 0.0
      %2394 = vmatprep.subr.mxu0 0.0
      %2395 = vmatpush1.msra.mxu0 0.0
      %2396 = vmatprep.subr.mxu0 0.0
      %2397 = vmatpush1.msra.mxu0 0.0
      %2398 = vmatprep.subr.mxu0 0.0
      %2399 = vmatpush1.msra.mxu0 0.0
      %2400 = vmatprep.subr.mxu0 0.0
      %2401 = vmatpush1.msra.mxu0 0.0
      %2402 = vmatprep.subr.mxu0 0.0
      %2403 = vmatpush1.msra.mxu0 0.0
      %2404 = vmatprep.subr.mxu0 0.0
      %2405 = vmatpush1.msra.mxu0 0.0
      %2406 = vmatprep.mubr.f32.mxu0 0.0
      %2407 = vmatmul.mubr.f32.gmra.mrb[0].mxu0 %v2334
      %v2408 = vpop.f32.mrb[0].mxu0
      %v2409 = vadd.f32 0.0, %v2408
      %v2410 = vpop.f32.mrb[0].mxu0
      %2411 = vmatprep.mubr.f32.mxu0 0.0
      %2412 = vmatmul.mubr.f32.gmra.mrb[0].mxu0 %v2337
      %v2413 = vpop.f32.mrb[0].mxu0
      %v2414 = vadd.f32 0.0, %v2413
      %v2415 = vpop.f32.mrb[0].mxu0
      %2416 = vmatprep.mubr.f32.mxu0 0.0
      %2417 = vmatmul.mubr.f32.gmra.mrb[0].mxu0 %v2340
      %v2418 = vpop.f32.mrb[0].mxu0
      %v2419 = vadd.f32 0.0, %v2418
      %v2420 = vpop.f32.mrb[0].mxu0
      %2421 = vdwg.mxu0
      %v2422 = vadd.f32 %v742, %v2409
      %v2423 = vadd.f32 %v747, %v2414
      %v2424 = vadd.f32 %v752, %v2419
      %v2425 = vmul.f32 %v2422, %v2422
      %v2426 = vmul.f32 %v2423, %v2423
      %v2427 = vmul.f32 %v2424, %v2424
      %v2428 = vsel %vm761, %v2425, 0.0
      %2429 = vadd.xlane.f32.xlu0 %v2428
      %v2430 = vpop.xlane.xlu0 %2429
      %v2431 = vsel %vm761, %v2426, 0.0
      %2432 = vadd.xlane.f32.xlu0 %v2431
      %v2433 = vpop.xlane.xlu0 %2432
      %v2434 = vsel %vm768, %v2427, 0.0
      %2435 = vadd.xlane.f32.xlu0 %v2434
      %v2436 = vpop.xlane.xlu0 %2435
      %v2437 = vmul.f32 %v2430, %v772
      %v2438 = vmul.f32 %v2433, %v772
      %v2439 = vmul.f32 %v2436, %v772
      %v2440 = vadd.f32 %v2437, 1e-05
      %v2441 = vadd.f32 %v2438, 1e-05
      %v2442 = vadd.f32 %v2439, 1e-05
      %v2443 = vrsqrt.pop %v2440
      %v2444 = vrsqrt.pop %v2441
      %v2445 = vrsqrt.pop %v2442
      %v2446 = vmul.f32 %v2422, %v2443
      %v2447 = vmul.f32 %v2423, %v2444
      %v2448 = vmul.f32 %v2424, %v2445
      %v2449 = vlaneseq
      %v2450 = vshrl.u32 %v2449, 7
      %v2451 = vsub.s32 2, %v2450
      %v2452 = vrot.slane %v328, %v2451
      %v2453 = vmul.f32 %v2446, %v2452
      %v2454 = vmul.f32 %v2447, %v2452
      %v2455 = vmul.f32 %v2448, %v2452
      %v2456 = vld [vmem:[%s8] sm:$0xff]
      %v2457 = vld [vmem:[%s8 + $0x8] sm:$0xff]
      %v2458 = vld [vmem:[%s8 + $0x10] sm:$0xff]
      %v2459 = vld [vmem:[%s8 + $0x18] sm:$0xff]
      %v2461 = vsel %vm761, %v2453, 0
      %v2464 = vsel %vm761, %v2454, 0
      %v2467 = vsel %vm761, %v2455, 0
      %2469 = vmatprep.subr.mxu0 0.0
      %2470 = vmatpush1.msra.mxu0 %v2456
      %2471 = vmatprep.subr.mxu0 0.0
      %2472 = vmatpush1.msra.mxu0 %v2457
      %2473 = vmatprep.subr.mxu0 0.0
      %2474 = vmatpush1.msra.mxu0 %v2458
      %2475 = vmatprep.subr.mxu0 0.0
      %2476 = vmatpush1.msra.mxu0 %v2459
      %2477 = vmatprep.subr.mxu0 0.0
      %2478 = vmatpush1.msra.mxu0 0.0
      %2479 = vmatprep.subr.mxu0 0.0
      %2480 = vmatpush1.msra.mxu0 0.0
      %2481 = vmatprep.subr.mxu0 0.0
      %2482 = vmatpush1.msra.mxu0 0.0
      %2483 = vmatprep.subr.mxu0 0.0
      %2484 = vmatpush1.msra.mxu0 0.0
      %2485 = vmatprep.subr.mxu0 0.0
      %2486 = vmatpush1.msra.mxu0 0.0
      %2487 = vmatprep.subr.mxu0 0.0
      %2488 = vmatpush1.msra.mxu0 0.0
      %2489 = vmatprep.subr.mxu0 0.0
      %2490 = vmatpush1.msra.mxu0 0.0
      %2491 = vmatprep.subr.mxu0 0.0
      %2492 = vmatpush1.msra.mxu0 0.0
      %2493 = vmatprep.subr.mxu0 0.0
      %2494 = vmatpush1.msra.mxu0 0.0
      %2495 = vmatprep.subr.mxu0 0.0
      %2496 = vmatpush1.msra.mxu0 0.0
      %2497 = vmatprep.subr.mxu0 0.0
      %2498 = vmatpush1.msra.mxu0 0.0
      %2499 = vmatprep.subr.mxu0 0.0
      %2500 = vmatpush1.msra.mxu0 0.0
      %2501 = vmatprep.subr.mxu0 0.0
      %2502 = vmatpush1.msra.mxu0 0.0
      %2503 = vmatprep.subr.mxu0 0.0
      %2504 = vmatpush1.msra.mxu0 0.0
      %2505 = vmatprep.subr.mxu0 0.0
      %2506 = vmatpush1.msra.mxu0 0.0
      %2507 = vmatprep.subr.mxu0 0.0
      %2508 = vmatpush1.msra.mxu0 0.0
      %2509 = vmatprep.subr.mxu0 0.0
      %2510 = vmatpush1.msra.mxu0 0.0
      %2511 = vmatprep.subr.mxu0 0.0
      %2512 = vmatpush1.msra.mxu0 0.0
      %2513 = vmatprep.subr.mxu0 0.0
      %2514 = vmatpush1.msra.mxu0 0.0
      %2515 = vmatprep.subr.mxu0 0.0
      %2516 = vmatpush1.msra.mxu0 0.0
      %2517 = vmatprep.subr.mxu0 0.0
      %2518 = vmatpush1.msra.mxu0 0.0
      %2519 = vmatprep.subr.mxu0 0.0
      %2520 = vmatpush1.msra.mxu0 0.0
      %2521 = vmatprep.subr.mxu0 0.0
      %2522 = vmatpush1.msra.mxu0 0.0
      %2523 = vmatprep.subr.mxu0 0.0
      %2524 = vmatpush1.msra.mxu0 0.0
      %2525 = vmatprep.subr.mxu0 0.0
      %2526 = vmatpush1.msra.mxu0 0.0
      %2527 = vmatprep.subr.mxu0 0.0
      %2528 = vmatpush1.msra.mxu0 0.0
      %2529 = vmatprep.subr.mxu0 0.0
      %2530 = vmatpush1.msra.mxu0 0.0
      %2531 = vmatprep.subr.mxu0 0.0
      %2532 = vmatpush1.msra.mxu0 0.0
      %2533 = vmatprep.mubr.f32.mxu0 0.0
      %2534 = vmatmul.mubr.f32.gmra.mrb[0].mxu0 %v2461
      %v2535 = vpop.f32.mrb[0].mxu0
      %v2536 = vadd.f32 0.0, %v2535
      %v2537 = vpop.f32.mrb[0].mxu0
      %2538 = vmatprep.mubr.f32.mxu0 0.0
      %2539 = vmatmul.mubr.f32.gmra.mrb[0].mxu0 %v2464
      %v2540 = vpop.f32.mrb[0].mxu0
      %v2541 = vadd.f32 0.0, %v2540
      %v2542 = vpop.f32.mrb[0].mxu0
      %2543 = vmatprep.mubr.f32.mxu0 0.0
      %2544 = vmatmul.mubr.f32.gmra.mrb[0].mxu0 %v2467
      %v2545 = vpop.f32.mrb[0].mxu0
      %v2546 = vadd.f32 0.0, %v2545
      %v2547 = vpop.f32.mrb[0].mxu0
      %2548 = vdwg.mxu0
      %v2549 = vxor.u32 %v2536, 2147483648
      %v2550 = vxor.u32 %v2541, 2147483648
      %v2551 = vxor.u32 %v2546, 2147483648
      %v2552 = vmul.f32 %v2549, 1.442695
      %v2553 = vpow.pop %v2552
      %v2554 = vmul.f32 %v2550, 1.442695
      %v2555 = vpow.pop %v2554
      %v2556 = vmul.f32 %v2551, 1.442695
      %v2557 = vpow.pop %v2556
      %v2558 = vadd.f32 %v2553, 1.0
      %v2559 = vadd.f32 %v2555, 1.0
      %v2560 = vadd.f32 %v2557, 1.0
      %v2561 = vrcp.pop %v2558
      %v2562 = vmul.f32 1.0, %v2561
      %v2563 = vrcp.pop %v2559
      %v2564 = vmul.f32 1.0, %v2563
      %v2565 = vrcp.pop %v2560
      %v2566 = vmul.f32 1.0, %v2565
      %v2567 = vmul.f32 %v2536, %v2562
      %v2568 = vmul.f32 %v2541, %v2564
      %v2569 = vmul.f32 %v2546, %v2566
      %2573 = vrot.lane.b32.xlu0 %v2536, 64
      %v2574 = vpop.permute.xlu0 %2573
      %2575 = vrot.lane.b32.xlu0 %v2541, 64
      %v2576 = vpop.permute.xlu0 %2575
      %2577 = vrot.lane.b32.xlu0 %v2546, 64
      %v2578 = vpop.permute.xlu0 %2577
      %v2582 = vmul.f32 %v2567, %v2574
      %v2583 = vmul.f32 %v2568, %v2576
      %v2584 = vmul.f32 %v2569, %v2578
      %v2585 = vld [vmem:[%s9] sm:$0xff]
      %v2586 = vld [vmem:[%s9 + $0x8] sm:$0xff]
      %v2587 = vld [vmem:[%s9 + $0x10] sm:$0xff]
      %v2588 = vld [vmem:[%s9 + $0x18] sm:$0xff]
      %v2589 = vld [vmem:[%s9 + $0x20] sm:$0xff]
      %v2590 = vld [vmem:[%s9 + $0x28] sm:$0xff]
      %v2591 = vld [vmem:[%s9 + $0x30] sm:$0xff]
      %v2592 = vld [vmem:[%s9 + $0x38] sm:$0xff]
      %vm2593 = vcmask 523264
      %v2595 = vsel %vm2593, %v2582, 0
      %v2598 = vsel %vm2593, %v2583, 0
      %v2601 = vsel %vm2593, %v2584, 0
      %2603 = vmatprep.subr.mxu0 0.0
      %2604 = vmatpush1.msra.mxu0 %v2585
      %2605 = vmatprep.subr.mxu0 0.0
      %2606 = vmatpush1.msra.mxu0 %v2586
      %2607 = vmatprep.subr.mxu0 0.0
      %2608 = vmatpush1.msra.mxu0 %v2587
      %2609 = vmatprep.subr.mxu0 0.0
      %2610 = vmatpush1.msra.mxu0 %v2588
      %2611 = vmatprep.subr.mxu0 0.0
      %2612 = vmatpush1.msra.mxu0 %v2589
      %2613 = vmatprep.subr.mxu0 0.0
      %2614 = vmatpush1.msra.mxu0 %v2590
      %2615 = vmatprep.subr.mxu0 0.0
      %2616 = vmatpush1.msra.mxu0 %v2591
      %2617 = vmatprep.subr.mxu0 0.0
      %2618 = vmatpush1.msra.mxu0 %v2592
      %2619 = vmatprep.subr.mxu0 0.0
      %2620 = vmatpush1.msra.mxu0 0.0
      %2621 = vmatprep.subr.mxu0 0.0
      %2622 = vmatpush1.msra.mxu0 0.0
      %2623 = vmatprep.subr.mxu0 0.0
      %2624 = vmatpush1.msra.mxu0 0.0
      %2625 = vmatprep.subr.mxu0 0.0
      %2626 = vmatpush1.msra.mxu0 0.0
      %2627 = vmatprep.subr.mxu0 0.0
      %2628 = vmatpush1.msra.mxu0 0.0
      %2629 = vmatprep.subr.mxu0 0.0
      %2630 = vmatpush1.msra.mxu0 0.0
      %2631 = vmatprep.subr.mxu0 0.0
      %2632 = vmatpush1.msra.mxu0 0.0
      %2633 = vmatprep.subr.mxu0 0.0
      %2634 = vmatpush1.msra.mxu0 0.0
      %2635 = vmatprep.subr.mxu0 0.0
      %2636 = vmatpush1.msra.mxu0 0.0
      %2637 = vmatprep.subr.mxu0 0.0
      %2638 = vmatpush1.msra.mxu0 0.0
      %2639 = vmatprep.subr.mxu0 0.0
      %2640 = vmatpush1.msra.mxu0 0.0
      %2641 = vmatprep.subr.mxu0 0.0
      %2642 = vmatpush1.msra.mxu0 0.0
      %2643 = vmatprep.subr.mxu0 0.0
      %2644 = vmatpush1.msra.mxu0 0.0
      %2645 = vmatprep.subr.mxu0 0.0
      %2646 = vmatpush1.msra.mxu0 0.0
      %2647 = vmatprep.subr.mxu0 0.0
      %2648 = vmatpush1.msra.mxu0 0.0
      %2649 = vmatprep.subr.mxu0 0.0
      %2650 = vmatpush1.msra.mxu0 0.0
      %2651 = vmatprep.subr.mxu0 0.0
      %2652 = vmatpush1.msra.mxu0 0.0
      %2653 = vmatprep.subr.mxu0 0.0
      %2654 = vmatpush1.msra.mxu0 0.0
      %2655 = vmatprep.subr.mxu0 0.0
      %2656 = vmatpush1.msra.mxu0 0.0
      %2657 = vmatprep.subr.mxu0 0.0
      %2658 = vmatpush1.msra.mxu0 0.0
      %2659 = vmatprep.subr.mxu0 0.0
      %2660 = vmatpush1.msra.mxu0 0.0
      %2661 = vmatprep.subr.mxu0 0.0
      %2662 = vmatpush1.msra.mxu0 0.0
      %2663 = vmatprep.subr.mxu0 0.0
      %2664 = vmatpush1.msra.mxu0 0.0
      %2665 = vmatprep.subr.mxu0 0.0
      %2666 = vmatpush1.msra.mxu0 0.0
      %2667 = vmatprep.mubr.f32.mxu0 0.0
      %2668 = vmatmul.mubr.f32.gmra.mrb[0].mxu0 %v2595
      %v2669 = vpop.f32.mrb[0].mxu0
      %v2670 = vadd.f32 0.0, %v2669
      %v2671 = vpop.f32.mrb[0].mxu0
      %2672 = vmatprep.mubr.f32.mxu0 0.0
      %2673 = vmatmul.mubr.f32.gmra.mrb[0].mxu0 %v2598
      %v2674 = vpop.f32.mrb[0].mxu0
      %v2675 = vadd.f32 0.0, %v2674
      %v2676 = vpop.f32.mrb[0].mxu0
      %2677 = vmatprep.mubr.f32.mxu0 0.0
      %2678 = vmatmul.mubr.f32.gmra.mrb[0].mxu0 %v2601
      %v2679 = vpop.f32.mrb[0].mxu0
      %v2680 = vadd.f32 0.0, %v2679
      %v2681 = vpop.f32.mrb[0].mxu0
      %2682 = vdwg.mxu0
      %v2683 = vadd.f32 %v2422, %v2670
      %v2684 = vadd.f32 %v2423, %v2675
      %v2685 = vadd.f32 %v2424, %v2680
      %v2686 = vmul.f32 %v2683, %v2683
      %v2687 = vmul.f32 %v2684, %v2684
      %v2688 = vmul.f32 %v2685, %v2685
      %v2689 = vsel %vm761, %v2686, 0.0
      %2690 = vadd.xlane.f32.xlu0 %v2689
      %v2691 = vpop.xlane.xlu0 %2690
      %v2692 = vsel %vm761, %v2687, 0.0
      %2693 = vadd.xlane.f32.xlu0 %v2692
      %v2694 = vpop.xlane.xlu0 %2693
      %v2695 = vsel %vm768, %v2688, 0.0
      %2696 = vadd.xlane.f32.xlu0 %v2695
      %v2697 = vpop.xlane.xlu0 %2696
      %v2698 = vmul.f32 %v2691, %v772
      %v2699 = vmul.f32 %v2694, %v772
      %v2700 = vmul.f32 %v2697, %v772
      %v2701 = vadd.f32 %v2698, 1e-05
      %v2702 = vadd.f32 %v2699, 1e-05
      %v2703 = vadd.f32 %v2700, 1e-05
      %v2704 = vrsqrt.pop %v2701
      %v2705 = vrsqrt.pop %v2702
      %v2706 = vrsqrt.pop %v2703
      %v2707 = vmul.f32 %v2683, %v2704
      %v2708 = vmul.f32 %v2684, %v2705
      %v2709 = vmul.f32 %v2685, %v2706
      %v2710 = vlaneseq
      %v2711 = vshrl.u32 %v2710, 7
      %v2712 = vsub.s32 1, %v2711
      %v2713 = vrot.slane %v328, %v2712
      %v2714 = vmul.f32 %v2707, %v2713
      %v2715 = vmul.f32 %v2708, %v2713
      %v2716 = vmul.f32 %v2709, %v2713
      %s2717 = scalar_lea.vmem %s6, 32
      %v2718 = vld [vmem:[%s2717] sm:$0xff]
      %v2719 = vld [vmem:[%s2717 + $0x8] sm:$0xff]
      %v2720 = vld [vmem:[%s2717 + $0x10] sm:$0xff]
      %v2721 = vld [vmem:[%s2717 + $0x18] sm:$0xff]
      %v2723 = vsel %vm761, %v2714, 0
      %v2726 = vsel %vm761, %v2715, 0
      %v2729 = vsel %vm761, %v2716, 0
      %2731 = vmatprep.subr.mxu0 0.0
      %2732 = vmatpush1.msra.mxu0 %v2718
      %2733 = vmatprep.subr.mxu0 0.0
      %2734 = vmatpush1.msra.mxu0 %v2719
      %2735 = vmatprep.subr.mxu0 0.0
      %2736 = vmatpush1.msra.mxu0 %v2720
      %2737 = vmatprep.subr.mxu0 0.0
      %2738 = vmatpush1.msra.mxu0 %v2721
      %2739 = vmatprep.subr.mxu0 0.0
      %2740 = vmatpush1.msra.mxu0 0.0
      %2741 = vmatprep.subr.mxu0 0.0
      %2742 = vmatpush1.msra.mxu0 0.0
      %2743 = vmatprep.subr.mxu0 0.0
      %2744 = vmatpush1.msra.mxu0 0.0
      %2745 = vmatprep.subr.mxu0 0.0
      %2746 = vmatpush1.msra.mxu0 0.0
      %2747 = vmatprep.subr.mxu0 0.0
      %2748 = vmatpush1.msra.mxu0 0.0
      %2749 = vmatprep.subr.mxu0 0.0
      %2750 = vmatpush1.msra.mxu0 0.0
      %2751 = vmatprep.subr.mxu0 0.0
      %2752 = vmatpush1.msra.mxu0 0.0
      %2753 = vmatprep.subr.mxu0 0.0
      %2754 = vmatpush1.msra.mxu0 0.0
      %2755 = vmatprep.subr.mxu0 0.0
      %2756 = vmatpush1.msra.mxu0 0.0
      %2757 = vmatprep.subr.mxu0 0.0
      %2758 = vmatpush1.msra.mxu0 0.0
      %2759 = vmatprep.subr.mxu0 0.0
      %2760 = vmatpush1.msra.mxu0 0.0
      %2761 = vmatprep.subr.mxu0 0.0
      %2762 = vmatpush1.msra.mxu0 0.0
      %2763 = vmatprep.subr.mxu0 0.0
      %2764 = vmatpush1.msra.mxu0 0.0
      %2765 = vmatprep.subr.mxu0 0.0
      %2766 = vmatpush1.msra.mxu0 0.0
      %2767 = vmatprep.subr.mxu0 0.0
      %2768 = vmatpush1.msra.mxu0 0.0
      %2769 = vmatprep.subr.mxu0 0.0
      %2770 = vmatpush1.msra.mxu0 0.0
      %2771 = vmatprep.subr.mxu0 0.0
      %2772 = vmatpush1.msra.mxu0 0.0
      %2773 = vmatprep.subr.mxu0 0.0
      %2774 = vmatpush1.msra.mxu0 0.0
      %2775 = vmatprep.subr.mxu0 0.0
      %2776 = vmatpush1.msra.mxu0 0.0
      %2777 = vmatprep.subr.mxu0 0.0
      %2778 = vmatpush1.msra.mxu0 0.0
      %2779 = vmatprep.subr.mxu0 0.0
      %2780 = vmatpush1.msra.mxu0 0.0
      %2781 = vmatprep.subr.mxu0 0.0
      %2782 = vmatpush1.msra.mxu0 0.0
      %2783 = vmatprep.subr.mxu0 0.0
      %2784 = vmatpush1.msra.mxu0 0.0
      %2785 = vmatprep.subr.mxu0 0.0
      %2786 = vmatpush1.msra.mxu0 0.0
      %2787 = vmatprep.subr.mxu0 0.0
      %2788 = vmatpush1.msra.mxu0 0.0
      %2789 = vmatprep.subr.mxu0 0.0
      %2790 = vmatpush1.msra.mxu0 0.0
      %2791 = vmatprep.subr.mxu0 0.0
      %2792 = vmatpush1.msra.mxu0 0.0
      %2793 = vmatprep.subr.mxu0 0.0
      %2794 = vmatpush1.msra.mxu0 0.0
      %2795 = vmatprep.mubr.f32.mxu0 0.0
      %2796 = vmatmul.mubr.f32.gmra.mrb[0].mxu0 %v2723
      %v2797 = vpop.f32.mrb[0].mxu0
      %v2798 = vadd.f32 0.0, %v2797
      %v2799 = vpop.f32.mrb[0].mxu0
      %2800 = vmatprep.mubr.f32.mxu0 0.0
      %2801 = vmatmul.mubr.f32.gmra.mrb[0].mxu0 %v2726
      %v2802 = vpop.f32.mrb[0].mxu0
      %v2803 = vadd.f32 0.0, %v2802
      %v2804 = vpop.f32.mrb[0].mxu0
      %2805 = vmatprep.mubr.f32.mxu0 0.0
      %2806 = vmatmul.mubr.f32.gmra.mrb[0].mxu0 %v2729
      %v2807 = vpop.f32.mrb[0].mxu0
      %v2808 = vadd.f32 0.0, %v2807
      %v2809 = vpop.f32.mrb[0].mxu0
      %2810 = vdwg.mxu0
      %v2811 = vsub.f32 0.0, %v2798
      %v2812 = vsub.f32 0.0, %v2803
      %v2813 = vsub.f32 0.0, %v2808
      %2817 = vrot.lane.b32.xlu0 %v2811, 124
      %v2818 = vpop.permute.xlu0 %2817
      %2819 = vrot.lane.b32.xlu0 %v2812, 124
      %v2820 = vpop.permute.xlu0 %2819
      %2821 = vrot.lane.b32.xlu0 %v2813, 124
      %v2822 = vpop.permute.xlu0 %2821
      %2829 = vrot.lane.b32.xlu0 %v2798, 4
      %v2830 = vpop.permute.xlu0 %2829
      %2831 = vrot.lane.b32.xlu0 %v2803, 4
      %v2832 = vpop.permute.xlu0 %2831
      %2833 = vrot.lane.b32.xlu0 %v2808, 4
      %v2834 = vpop.permute.xlu0 %2833
      %v2838 = vsel %vm912, %v2818, %v2830
      %v2839 = vsel %vm912, %v2820, %v2832
      %v2840 = vsel %vm912, %v2822, %v2834
      %v2841 = vmul.f32 %v2798, %v325
      %v2842 = vmul.f32 %v2803, %v326
      %v2843 = vmul.f32 %v2808, %v327
      %v2844 = vmul.f32 %v2838, %v923
      %v2845 = vmul.f32 %v2839, %v925
      %v2846 = vmul.f32 %v2840, %v927
      %v2847 = vadd.f32 %v2841, %v2844
      %v2848 = vadd.f32 %v2842, %v2845
      %v2849 = vadd.f32 %v2843, %v2846
      %2850 = vrot.lane.b32.xlu0 %v2811, 92
      %v2851 = vpop.permute.xlu0 %2850
      %2852 = vrot.lane.b32.xlu0 %v2812, 92
      %v2853 = vpop.permute.xlu0 %2852
      %2854 = vrot.lane.b32.xlu0 %v2813, 92
      %v2855 = vpop.permute.xlu0 %2854
      %2859 = vrot.lane.b32.xlu0 %v2798, 100
      %v2860 = vpop.permute.xlu0 %2859
      %2861 = vrot.lane.b32.xlu0 %v2803, 100
      %v2862 = vpop.permute.xlu0 %2861
      %2863 = vrot.lane.b32.xlu0 %v2808, 100
      %v2864 = vpop.permute.xlu0 %2863
      %v2868 = vsel %vm912, %v2851, %v2860
      %v2869 = vsel %vm912, %v2853, %v2862
      %v2870 = vsel %vm912, %v2855, %v2864
      %v2871 = vmul.f32 %v2798, %v959
      %v2872 = vmul.f32 %v2803, %v961
      %v2873 = vmul.f32 %v2808, %v963
      %v2874 = vmul.f32 %v2868, %v923
      %v2875 = vmul.f32 %v2869, %v925
      %v2876 = vmul.f32 %v2870, %v927
      %2880 = vrot.lane.b32.xlu0 %v2874, 32
      %v2881 = vpop.permute.xlu0 %2880
      %2882 = vrot.lane.b32.xlu0 %v2875, 32
      %v2883 = vpop.permute.xlu0 %2882
      %2884 = vrot.lane.b32.xlu0 %v2876, 32
      %v2885 = vpop.permute.xlu0 %2884
      %v2889 = vadd.f32 %v2871, %v2881
      %v2890 = vadd.f32 %v2872, %v2883
      %v2891 = vadd.f32 %v2873, %v2885
      %2895 = vrot.lane.b32.xlu0 %v2889, 96
      %v2896 = vpop.permute.xlu0 %2895
      %2897 = vrot.lane.b32.xlu0 %v2890, 96
      %v2898 = vpop.permute.xlu0 %2897
      %2899 = vrot.lane.b32.xlu0 %v2891, 96
      %v2900 = vpop.permute.xlu0 %2899
      %v2902 = vsel %vm997, %v2847, 0
      %v2905 = vsel %vm997, %v2848, 0
      %v2908 = vsel %vm997, %v2849, 0
      %v2910 = vsel %vm997, %v2896, 0
      %v2912 = vsel %vm997, %v2898, 0
      %v2914 = vsel %vm997, %v2900, 0
      %2916 = vmatprep.subr.mxu0 0.0
      %2917 = vmatpush1.xpose.msra.mxu0 %v2910
      %2918 = vmatprep.subr.mxu0 0.0
      %2919 = vmatpush1.xpose.msra.mxu0 %v2912
      %2920 = vmatprep.subr.mxu0 0.0
      %2921 = vmatpush1.xpose.msra.mxu0 %v2914
      %2922 = vmatprep.subr.mxu0 0.0
      %2923 = vmatpush1.xpose.msra.mxu0 0.0
      %2924 = vmatprep.subr.mxu0 0.0
      %2925 = vmatpush1.xpose.msra.mxu0 0.0
      %2926 = vmatprep.subr.mxu0 0.0
      %2927 = vmatpush1.xpose.msra.mxu0 0.0
      %2928 = vmatprep.subr.mxu0 0.0
      %2929 = vmatpush1.xpose.msra.mxu0 0.0
      %2930 = vmatprep.subr.mxu0 0.0
      %2931 = vmatpush1.xpose.msra.mxu0 0.0
      %2932 = vmatprep.subr.mxu0 0.0
      %2933 = vmatpush1.xpose.msra.mxu0 0.0
      %2934 = vmatprep.subr.mxu0 0.0
      %2935 = vmatpush1.xpose.msra.mxu0 0.0
      %2936 = vmatprep.subr.mxu0 0.0
      %2937 = vmatpush1.xpose.msra.mxu0 0.0
      %2938 = vmatprep.subr.mxu0 0.0
      %2939 = vmatpush1.xpose.msra.mxu0 0.0
      %2940 = vmatprep.subr.mxu0 0.0
      %2941 = vmatpush1.xpose.msra.mxu0 0.0
      %2942 = vmatprep.subr.mxu0 0.0
      %2943 = vmatpush1.xpose.msra.mxu0 0.0
      %2944 = vmatprep.subr.mxu0 0.0
      %2945 = vmatpush1.xpose.msra.mxu0 0.0
      %2946 = vmatprep.subr.mxu0 0.0
      %2947 = vmatpush1.xpose.msra.mxu0 0.0
      %2948 = vmatprep.subr.mxu0 0.0
      %2949 = vmatpush1.xpose.msra.mxu0 0.0
      %2950 = vmatprep.subr.mxu0 0.0
      %2951 = vmatpush1.xpose.msra.mxu0 0.0
      %2952 = vmatprep.subr.mxu0 0.0
      %2953 = vmatpush1.xpose.msra.mxu0 0.0
      %2954 = vmatprep.subr.mxu0 0.0
      %2955 = vmatpush1.xpose.msra.mxu0 0.0
      %2956 = vmatprep.subr.mxu0 0.0
      %2957 = vmatpush1.xpose.msra.mxu0 0.0
      %2958 = vmatprep.subr.mxu0 0.0
      %2959 = vmatpush1.xpose.msra.mxu0 0.0
      %2960 = vmatprep.subr.mxu0 0.0
      %2961 = vmatpush1.xpose.msra.mxu0 0.0
      %2962 = vmatprep.subr.mxu0 0.0
      %2963 = vmatpush1.xpose.msra.mxu0 0.0
      %2964 = vmatprep.subr.mxu0 0.0
      %2965 = vmatpush1.xpose.msra.mxu0 0.0
      %2966 = vmatprep.subr.mxu0 0.0
      %2967 = vmatpush1.xpose.msra.mxu0 0.0
      %2968 = vmatprep.subr.mxu0 0.0
      %2969 = vmatpush1.xpose.msra.mxu0 0.0
      %2970 = vmatprep.subr.mxu0 0.0
      %2971 = vmatpush1.xpose.msra.mxu0 0.0
      %2972 = vmatprep.subr.mxu0 0.0
      %2973 = vmatpush1.xpose.msra.mxu0 0.0
      %2974 = vmatprep.subr.mxu0 0.0
      %2975 = vmatpush1.xpose.msra.mxu0 0.0
      %2976 = vmatprep.subr.mxu0 0.0
      %2977 = vmatpush1.xpose.msra.mxu0 0.0
      %2978 = vmatprep.subr.mxu0 0.0
      %2979 = vmatpush1.xpose.msra.mxu0 0.0
      %2980 = vmatprep.mubr.f32.mxu0 0.0
      %2981 = vmatmul.mubr.f32.gmra.mrb[0].mxu0 %v2902
      %v2982 = vpop.f32.mrb[0].mxu0
      %v2983 = vadd.f32 0.0, %v2982
      %v2984 = vpop.f32.mrb[0].mxu0
      %2985 = vmatprep.mubr.f32.mxu0 0.0
      %2986 = vmatmul.mubr.f32.gmra.mrb[0].mxu0 %v2905
      %v2987 = vpop.f32.mrb[0].mxu0
      %v2988 = vadd.f32 0.0, %v2987
      %v2989 = vpop.f32.mrb[0].mxu0
      %2990 = vmatprep.mubr.f32.mxu0 0.0
      %2991 = vmatmul.mubr.f32.gmra.mrb[0].mxu0 %v2908
      %v2992 = vpop.f32.mrb[0].mxu0
      %v2993 = vadd.f32 0.0, %v2992
      %v2994 = vpop.f32.mrb[0].mxu0
      %2995 = vdwg.mxu0
      %v2996 = vmul.f32 %v2983, 0.35355338
      %v2997 = vmul.f32 %v2988, 0.35355338
      %v2998 = vmul.f32 %v2993, 0.35355338
      %v2999 = vsel %vm755, %v2996, -1e+30
      %v3000 = vsel %vm756, %v2997, -1e+30
      %v3001 = vsel %vm757, %v2998, -1e+30
      %v3002 = vsel %vm1099, %v2999, -inf
      %3003 = vmax.xlane.f32.xlu0 %v3002
      %v3004 = vpop.xlane.xlu0 %3003
      %v3005 = vsel %vm1099, %v3000, -inf
      %3006 = vmax.xlane.f32.xlu0 %v3005
      %v3007 = vpop.xlane.xlu0 %3006
      %v3008 = vsel %vm1106, %v3001, -inf
      %3009 = vmax.xlane.f32.xlu0 %v3008
      %v3010 = vpop.xlane.xlu0 %3009
      %v3011 = vsub.f32 %v2999, %v3004
      %v3012 = vsub.f32 %v3000, %v3007
      %v3013 = vsub.f32 %v3001, %v3010
      %v3014 = vmul.f32 %v3011, 1.442695
      %v3015 = vpow.pop %v3014
      %v3016 = vmul.f32 %v3012, 1.442695
      %v3017 = vpow.pop %v3016
      %v3018 = vmul.f32 %v3013, 1.442695
      %v3019 = vpow.pop %v3018
      %v3020 = vsel %vm1099, %v3015, 0.0
      %3021 = vadd.xlane.f32.xlu0 %v3020
      %v3022 = vpop.xlane.xlu0 %3021
      %v3023 = vsel %vm1099, %v3017, 0.0
      %3024 = vadd.xlane.f32.xlu0 %v3023
      %v3025 = vpop.xlane.xlu0 %3024
      %v3026 = vsel %vm1106, %v3019, 0.0
      %3027 = vadd.xlane.f32.xlu0 %v3026
      %v3028 = vpop.xlane.xlu0 %3027
      %v3029 = vrcp.pop %v3022
      %v3030 = vrcp.pop %v3025
      %v3031 = vrcp.pop %v3028
      %v3032 = vmul.f32 %v3015, %v3029
      %v3033 = vmul.f32 %v3017, %v3030
      %v3034 = vmul.f32 %v3019, %v3031
      %3035 = vrot.lane.b32.xlu0 %v2798, 64
      %v3036 = vpop.permute.xlu0 %3035
      %3037 = vrot.lane.b32.xlu0 %v2803, 64
      %v3038 = vpop.permute.xlu0 %3037
      %3039 = vrot.lane.b32.xlu0 %v2808, 64
      %v3040 = vpop.permute.xlu0 %3039
      %v3044 = vsel %vm1099, %v3032, 0
      %v3047 = vsel %vm1099, %v3033, 0
      %v3050 = vsel %vm1099, %v3034, 0
      %v3052 = vsel %vm671, %v3040, 0
      %3054 = vmatprep.subr.mxu0 0.0
      %3055 = vmatpush1.msra.mxu0 %v3036
      %3056 = vmatprep.subr.mxu0 0.0
      %3057 = vmatpush1.msra.mxu0 %v3038
      %3058 = vmatprep.subr.mxu0 0.0
      %3059 = vmatpush1.msra.mxu0 %v3052
      %3060 = vmatprep.subr.mxu0 0.0
      %3061 = vmatpush1.msra.mxu0 0.0
      %3062 = vmatprep.subr.mxu0 0.0
      %3063 = vmatpush1.msra.mxu0 0.0
      %3064 = vmatprep.subr.mxu0 0.0
      %3065 = vmatpush1.msra.mxu0 0.0
      %3066 = vmatprep.subr.mxu0 0.0
      %3067 = vmatpush1.msra.mxu0 0.0
      %3068 = vmatprep.subr.mxu0 0.0
      %3069 = vmatpush1.msra.mxu0 0.0
      %3070 = vmatprep.subr.mxu0 0.0
      %3071 = vmatpush1.msra.mxu0 0.0
      %3072 = vmatprep.subr.mxu0 0.0
      %3073 = vmatpush1.msra.mxu0 0.0
      %3074 = vmatprep.subr.mxu0 0.0
      %3075 = vmatpush1.msra.mxu0 0.0
      %3076 = vmatprep.subr.mxu0 0.0
      %3077 = vmatpush1.msra.mxu0 0.0
      %3078 = vmatprep.subr.mxu0 0.0
      %3079 = vmatpush1.msra.mxu0 0.0
      %3080 = vmatprep.subr.mxu0 0.0
      %3081 = vmatpush1.msra.mxu0 0.0
      %3082 = vmatprep.subr.mxu0 0.0
      %3083 = vmatpush1.msra.mxu0 0.0
      %3084 = vmatprep.subr.mxu0 0.0
      %3085 = vmatpush1.msra.mxu0 0.0
      %3086 = vmatprep.subr.mxu0 0.0
      %3087 = vmatpush1.msra.mxu0 0.0
      %3088 = vmatprep.subr.mxu0 0.0
      %3089 = vmatpush1.msra.mxu0 0.0
      %3090 = vmatprep.subr.mxu0 0.0
      %3091 = vmatpush1.msra.mxu0 0.0
      %3092 = vmatprep.subr.mxu0 0.0
      %3093 = vmatpush1.msra.mxu0 0.0
      %3094 = vmatprep.subr.mxu0 0.0
      %3095 = vmatpush1.msra.mxu0 0.0
      %3096 = vmatprep.subr.mxu0 0.0
      %3097 = vmatpush1.msra.mxu0 0.0
      %3098 = vmatprep.subr.mxu0 0.0
      %3099 = vmatpush1.msra.mxu0 0.0
      %3100 = vmatprep.subr.mxu0 0.0
      %3101 = vmatpush1.msra.mxu0 0.0
      %3102 = vmatprep.subr.mxu0 0.0
      %3103 = vmatpush1.msra.mxu0 0.0
      %3104 = vmatprep.subr.mxu0 0.0
      %3105 = vmatpush1.msra.mxu0 0.0
      %3106 = vmatprep.subr.mxu0 0.0
      %3107 = vmatpush1.msra.mxu0 0.0
      %3108 = vmatprep.subr.mxu0 0.0
      %3109 = vmatpush1.msra.mxu0 0.0
      %3110 = vmatprep.subr.mxu0 0.0
      %3111 = vmatpush1.msra.mxu0 0.0
      %3112 = vmatprep.subr.mxu0 0.0
      %3113 = vmatpush1.msra.mxu0 0.0
      %3114 = vmatprep.subr.mxu0 0.0
      %3115 = vmatpush1.msra.mxu0 0.0
      %3116 = vmatprep.subr.mxu0 0.0
      %3117 = vmatpush1.msra.mxu0 0.0
      %3118 = vmatprep.mubr.f32.mxu0 0.0
      %3119 = vmatmul.mubr.f32.gmra.mrb[0].mxu0 %v3044
      %v3120 = vpop.f32.mrb[0].mxu0
      %v3121 = vadd.f32 0.0, %v3120
      %v3122 = vpop.f32.mrb[0].mxu0
      %3123 = vmatprep.mubr.f32.mxu0 0.0
      %3124 = vmatmul.mubr.f32.gmra.mrb[0].mxu0 %v3047
      %v3125 = vpop.f32.mrb[0].mxu0
      %v3126 = vadd.f32 0.0, %v3125
      %v3127 = vpop.f32.mrb[0].mxu0
      %3128 = vmatprep.mubr.f32.mxu0 0.0
      %3129 = vmatmul.mubr.f32.gmra.mrb[0].mxu0 %v3050
      %v3130 = vpop.f32.mrb[0].mxu0
      %v3131 = vadd.f32 0.0, %v3130
      %v3132 = vpop.f32.mrb[0].mxu0
      %3133 = vdwg.mxu0
      %3134 = vrot.lane.b32.xlu0 %v2811, 116
      %v3135 = vpop.permute.xlu0 %3134
      %3136 = vrot.lane.b32.xlu0 %v2812, 116
      %v3137 = vpop.permute.xlu0 %3136
      %3138 = vrot.lane.b32.xlu0 %v2813, 116
      %v3139 = vpop.permute.xlu0 %3138
      %3143 = vrot.lane.b32.xlu0 %v2798, 124
      %v3144 = vpop.permute.xlu0 %3143
      %3145 = vrot.lane.b32.xlu0 %v2803, 124
      %v3146 = vpop.permute.xlu0 %3145
      %3147 = vrot.lane.b32.xlu0 %v2808, 124
      %v3148 = vpop.permute.xlu0 %3147
      %v3152 = vsel %vm912, %v3135, %v3144
      %v3153 = vsel %vm912, %v3137, %v3146
      %v3154 = vsel %vm912, %v3139, %v3148
      %v3155 = vmul.f32 %v2798, %v1255
      %v3156 = vmul.f32 %v2803, %v1257
      %v3157 = vmul.f32 %v2808, %v1259
      %v3158 = vmul.f32 %v3152, %v923
      %v3159 = vmul.f32 %v3153, %v925
      %v3160 = vmul.f32 %v3154, %v927
      %3164 = vrot.lane.b32.xlu0 %v3158, 8
      %v3165 = vpop.permute.xlu0 %3164
      %3166 = vrot.lane.b32.xlu0 %v3159, 8
      %v3167 = vpop.permute.xlu0 %3166
      %3168 = vrot.lane.b32.xlu0 %v3160, 8
      %v3169 = vpop.permute.xlu0 %3168
      %v3173 = vadd.f32 %v3155, %v3165
      %v3174 = vadd.f32 %v3156, %v3167
      %v3175 = vadd.f32 %v3157, %v3169
      %3176 = vrot.lane.b32.xlu0 %v2811, 84
      %v3177 = vpop.permute.xlu0 %3176
      %3178 = vrot.lane.b32.xlu0 %v2812, 84
      %v3179 = vpop.permute.xlu0 %3178
      %3180 = vrot.lane.b32.xlu0 %v2813, 84
      %v3181 = vpop.permute.xlu0 %3180
      %3185 = vrot.lane.b32.xlu0 %v2798, 92
      %v3186 = vpop.permute.xlu0 %3185
      %3187 = vrot.lane.b32.xlu0 %v2803, 92
      %v3188 = vpop.permute.xlu0 %3187
      %3189 = vrot.lane.b32.xlu0 %v2808, 92
      %v3190 = vpop.permute.xlu0 %3189
      %v3194 = vsel %vm912, %v3177, %v3186
      %v3195 = vsel %vm912, %v3179, %v3188
      %v3196 = vsel %vm912, %v3181, %v3190
      %v3197 = vmul.f32 %v2798, %v1306
      %v3198 = vmul.f32 %v2803, %v1308
      %v3199 = vmul.f32 %v2808, %v1310
      %v3200 = vmul.f32 %v3194, %v923
      %v3201 = vmul.f32 %v3195, %v925
      %v3202 = vmul.f32 %v3196, %v927
      %3206 = vrot.lane.b32.xlu0 %v3200, 40
      %v3207 = vpop.permute.xlu0 %3206
      %3208 = vrot.lane.b32.xlu0 %v3201, 40
      %v3209 = vpop.permute.xlu0 %3208
      %3210 = vrot.lane.b32.xlu0 %v3202, 40
      %v3211 = vpop.permute.xlu0 %3210
      %v3215 = vadd.f32 %v3197, %v3207
      %v3216 = vadd.f32 %v3198, %v3209
      %v3217 = vadd.f32 %v3199, %v3211
      %3221 = vrot.lane.b32.xlu0 %v3173, 120
      %v3222 = vpop.permute.xlu0 %3221
      %3223 = vrot.lane.b32.xlu0 %v3174, 120
      %v3224 = vpop.permute.xlu0 %3223
      %3225 = vrot.lane.b32.xlu0 %v3175, 120
      %v3226 = vpop.permute.xlu0 %3225
      %3230 = vrot.lane.b32.xlu0 %v3215, 88
      %v3231 = vpop.permute.xlu0 %3230
      %3232 = vrot.lane.b32.xlu0 %v3216, 88
      %v3233 = vpop.permute.xlu0 %3232
      %3234 = vrot.lane.b32.xlu0 %v3217, 88
      %v3235 = vpop.permute.xlu0 %3234
      %v3236 = vsel %vm997, %v3222, 0
      %v3238 = vsel %vm997, %v3224, 0
      %v3240 = vsel %vm997, %v3226, 0
      %v3242 = vsel %vm997, %v3231, 0
      %v3244 = vsel %vm997, %v3233, 0
      %v3246 = vsel %vm997, %v3235, 0
      %3248 = vmatprep.subr.mxu0 0.0
      %3249 = vmatpush1.xpose.msra.mxu0 %v3242
      %3250 = vmatprep.subr.mxu0 0.0
      %3251 = vmatpush1.xpose.msra.mxu0 %v3244
      %3252 = vmatprep.subr.mxu0 0.0
      %3253 = vmatpush1.xpose.msra.mxu0 %v3246
      %3254 = vmatprep.subr.mxu0 0.0
      %3255 = vmatpush1.xpose.msra.mxu0 0.0
      %3256 = vmatprep.subr.mxu0 0.0
      %3257 = vmatpush1.xpose.msra.mxu0 0.0
      %3258 = vmatprep.subr.mxu0 0.0
      %3259 = vmatpush1.xpose.msra.mxu0 0.0
      %3260 = vmatprep.subr.mxu0 0.0
      %3261 = vmatpush1.xpose.msra.mxu0 0.0
      %3262 = vmatprep.subr.mxu0 0.0
      %3263 = vmatpush1.xpose.msra.mxu0 0.0
      %3264 = vmatprep.subr.mxu0 0.0
      %3265 = vmatpush1.xpose.msra.mxu0 0.0
      %3266 = vmatprep.subr.mxu0 0.0
      %3267 = vmatpush1.xpose.msra.mxu0 0.0
      %3268 = vmatprep.subr.mxu0 0.0
      %3269 = vmatpush1.xpose.msra.mxu0 0.0
      %3270 = vmatprep.subr.mxu0 0.0
      %3271 = vmatpush1.xpose.msra.mxu0 0.0
      %3272 = vmatprep.subr.mxu0 0.0
      %3273 = vmatpush1.xpose.msra.mxu0 0.0
      %3274 = vmatprep.subr.mxu0 0.0
      %3275 = vmatpush1.xpose.msra.mxu0 0.0
      %3276 = vmatprep.subr.mxu0 0.0
      %3277 = vmatpush1.xpose.msra.mxu0 0.0
      %3278 = vmatprep.subr.mxu0 0.0
      %3279 = vmatpush1.xpose.msra.mxu0 0.0
      %3280 = vmatprep.subr.mxu0 0.0
      %3281 = vmatpush1.xpose.msra.mxu0 0.0
      %3282 = vmatprep.subr.mxu0 0.0
      %3283 = vmatpush1.xpose.msra.mxu0 0.0
      %3284 = vmatprep.subr.mxu0 0.0
      %3285 = vmatpush1.xpose.msra.mxu0 0.0
      %3286 = vmatprep.subr.mxu0 0.0
      %3287 = vmatpush1.xpose.msra.mxu0 0.0
      %3288 = vmatprep.subr.mxu0 0.0
      %3289 = vmatpush1.xpose.msra.mxu0 0.0
      %3290 = vmatprep.subr.mxu0 0.0
      %3291 = vmatpush1.xpose.msra.mxu0 0.0
      %3292 = vmatprep.subr.mxu0 0.0
      %3293 = vmatpush1.xpose.msra.mxu0 0.0
      %3294 = vmatprep.subr.mxu0 0.0
      %3295 = vmatpush1.xpose.msra.mxu0 0.0
      %3296 = vmatprep.subr.mxu0 0.0
      %3297 = vmatpush1.xpose.msra.mxu0 0.0
      %3298 = vmatprep.subr.mxu0 0.0
      %3299 = vmatpush1.xpose.msra.mxu0 0.0
      %3300 = vmatprep.subr.mxu0 0.0
      %3301 = vmatpush1.xpose.msra.mxu0 0.0
      %3302 = vmatprep.subr.mxu0 0.0
      %3303 = vmatpush1.xpose.msra.mxu0 0.0
      %3304 = vmatprep.subr.mxu0 0.0
      %3305 = vmatpush1.xpose.msra.mxu0 0.0
      %3306 = vmatprep.subr.mxu0 0.0
      %3307 = vmatpush1.xpose.msra.mxu0 0.0
      %3308 = vmatprep.subr.mxu0 0.0
      %3309 = vmatpush1.xpose.msra.mxu0 0.0
      %3310 = vmatprep.subr.mxu0 0.0
      %3311 = vmatpush1.xpose.msra.mxu0 0.0
      %3312 = vmatprep.mubr.f32.mxu0 0.0
      %3313 = vmatmul.mubr.f32.gmra.mrb[0].mxu0 %v3236
      %v3314 = vpop.f32.mrb[0].mxu0
      %v3315 = vadd.f32 0.0, %v3314
      %v3316 = vpop.f32.mrb[0].mxu0
      %3317 = vmatprep.mubr.f32.mxu0 0.0
      %3318 = vmatmul.mubr.f32.gmra.mrb[0].mxu0 %v3238
      %v3319 = vpop.f32.mrb[0].mxu0
      %v3320 = vadd.f32 0.0, %v3319
      %v3321 = vpop.f32.mrb[0].mxu0
      %3322 = vmatprep.mubr.f32.mxu0 0.0
      %3323 = vmatmul.mubr.f32.gmra.mrb[0].mxu0 %v3240
      %v3324 = vpop.f32.mrb[0].mxu0
      %v3325 = vadd.f32 0.0, %v3324
      %v3326 = vpop.f32.mrb[0].mxu0
      %3327 = vdwg.mxu0
      %v3328 = vmul.f32 %v3315, 0.35355338
      %v3329 = vmul.f32 %v3320, 0.35355338
      %v3330 = vmul.f32 %v3325, 0.35355338
      %v3331 = vsel %vm755, %v3328, -1e+30
      %v3332 = vsel %vm756, %v3329, -1e+30
      %v3333 = vsel %vm757, %v3330, -1e+30
      %v3334 = vsel %vm1099, %v3331, -inf
      %3335 = vmax.xlane.f32.xlu0 %v3334
      %v3336 = vpop.xlane.xlu0 %3335
      %v3337 = vsel %vm1099, %v3332, -inf
      %3338 = vmax.xlane.f32.xlu0 %v3337
      %v3339 = vpop.xlane.xlu0 %3338
      %v3340 = vsel %vm1106, %v3333, -inf
      %3341 = vmax.xlane.f32.xlu0 %v3340
      %v3342 = vpop.xlane.xlu0 %3341
      %v3343 = vsub.f32 %v3331, %v3336
      %v3344 = vsub.f32 %v3332, %v3339
      %v3345 = vsub.f32 %v3333, %v3342
      %v3346 = vmul.f32 %v3343, 1.442695
      %v3347 = vpow.pop %v3346
      %v3348 = vmul.f32 %v3344, 1.442695
      %v3349 = vpow.pop %v3348
      %v3350 = vmul.f32 %v3345, 1.442695
      %v3351 = vpow.pop %v3350
      %v3352 = vsel %vm1099, %v3347, 0.0
      %3353 = vadd.xlane.f32.xlu0 %v3352
      %v3354 = vpop.xlane.xlu0 %3353
      %v3355 = vsel %vm1099, %v3349, 0.0
      %3356 = vadd.xlane.f32.xlu0 %v3355
      %v3357 = vpop.xlane.xlu0 %3356
      %v3358 = vsel %vm1106, %v3351, 0.0
      %3359 = vadd.xlane.f32.xlu0 %v3358
      %v3360 = vpop.xlane.xlu0 %3359
      %v3361 = vrcp.pop %v3354
      %v3362 = vrcp.pop %v3357
      %v3363 = vrcp.pop %v3360
      %v3364 = vmul.f32 %v3347, %v3361
      %v3365 = vmul.f32 %v3349, %v3362
      %v3366 = vmul.f32 %v3351, %v3363
      %3367 = vrot.lane.b32.xlu0 %v2798, 56
      %v3368 = vpop.permute.xlu0 %3367
      %3369 = vrot.lane.b32.xlu0 %v2803, 56
      %v3370 = vpop.permute.xlu0 %3369
      %3371 = vrot.lane.b32.xlu0 %v2808, 56
      %v3372 = vpop.permute.xlu0 %3371
      %v3376 = vsel %vm1099, %v3364, 0
      %v3379 = vsel %vm1099, %v3365, 0
      %v3382 = vsel %vm1099, %v3366, 0
      %v3384 = vsel %vm671, %v3372, 0
      %3386 = vmatprep.subr.mxu0 0.0
      %3387 = vmatpush1.msra.mxu0 %v3368
      %3388 = vmatprep.subr.mxu0 0.0
      %3389 = vmatpush1.msra.mxu0 %v3370
      %3390 = vmatprep.subr.mxu0 0.0
      %3391 = vmatpush1.msra.mxu0 %v3384
      %3392 = vmatprep.subr.mxu0 0.0
      %3393 = vmatpush1.msra.mxu0 0.0
      %3394 = vmatprep.subr.mxu0 0.0
      %3395 = vmatpush1.msra.mxu0 0.0
      %3396 = vmatprep.subr.mxu0 0.0
      %3397 = vmatpush1.msra.mxu0 0.0
      %3398 = vmatprep.subr.mxu0 0.0
      %3399 = vmatpush1.msra.mxu0 0.0
      %3400 = vmatprep.subr.mxu0 0.0
      %3401 = vmatpush1.msra.mxu0 0.0
      %3402 = vmatprep.subr.mxu0 0.0
      %3403 = vmatpush1.msra.mxu0 0.0
      %3404 = vmatprep.subr.mxu0 0.0
      %3405 = vmatpush1.msra.mxu0 0.0
      %3406 = vmatprep.subr.mxu0 0.0
      %3407 = vmatpush1.msra.mxu0 0.0
      %3408 = vmatprep.subr.mxu0 0.0
      %3409 = vmatpush1.msra.mxu0 0.0
      %3410 = vmatprep.subr.mxu0 0.0
      %3411 = vmatpush1.msra.mxu0 0.0
      %3412 = vmatprep.subr.mxu0 0.0
      %3413 = vmatpush1.msra.mxu0 0.0
      %3414 = vmatprep.subr.mxu0 0.0
      %3415 = vmatpush1.msra.mxu0 0.0
      %3416 = vmatprep.subr.mxu0 0.0
      %3417 = vmatpush1.msra.mxu0 0.0
      %3418 = vmatprep.subr.mxu0 0.0
      %3419 = vmatpush1.msra.mxu0 0.0
      %3420 = vmatprep.subr.mxu0 0.0
      %3421 = vmatpush1.msra.mxu0 0.0
      %3422 = vmatprep.subr.mxu0 0.0
      %3423 = vmatpush1.msra.mxu0 0.0
      %3424 = vmatprep.subr.mxu0 0.0
      %3425 = vmatpush1.msra.mxu0 0.0
      %3426 = vmatprep.subr.mxu0 0.0
      %3427 = vmatpush1.msra.mxu0 0.0
      %3428 = vmatprep.subr.mxu0 0.0
      %3429 = vmatpush1.msra.mxu0 0.0
      %3430 = vmatprep.subr.mxu0 0.0
      %3431 = vmatpush1.msra.mxu0 0.0
      %3432 = vmatprep.subr.mxu0 0.0
      %3433 = vmatpush1.msra.mxu0 0.0
      %3434 = vmatprep.subr.mxu0 0.0
      %3435 = vmatpush1.msra.mxu0 0.0
      %3436 = vmatprep.subr.mxu0 0.0
      %3437 = vmatpush1.msra.mxu0 0.0
      %3438 = vmatprep.subr.mxu0 0.0
      %3439 = vmatpush1.msra.mxu0 0.0
      %3440 = vmatprep.subr.mxu0 0.0
      %3441 = vmatpush1.msra.mxu0 0.0
      %3442 = vmatprep.subr.mxu0 0.0
      %3443 = vmatpush1.msra.mxu0 0.0
      %3444 = vmatprep.subr.mxu0 0.0
      %3445 = vmatpush1.msra.mxu0 0.0
      %3446 = vmatprep.subr.mxu0 0.0
      %3447 = vmatpush1.msra.mxu0 0.0
      %3448 = vmatprep.subr.mxu0 0.0
      %3449 = vmatpush1.msra.mxu0 0.0
      %3450 = vmatprep.mubr.f32.mxu0 0.0
      %3451 = vmatmul.mubr.f32.gmra.mrb[0].mxu0 %v3376
      %v3452 = vpop.f32.mrb[0].mxu0
      %v3453 = vadd.f32 0.0, %v3452
      %v3454 = vpop.f32.mrb[0].mxu0
      %3455 = vmatprep.mubr.f32.mxu0 0.0
      %3456 = vmatmul.mubr.f32.gmra.mrb[0].mxu0 %v3379
      %v3457 = vpop.f32.mrb[0].mxu0
      %v3458 = vadd.f32 0.0, %v3457
      %v3459 = vpop.f32.mrb[0].mxu0
      %3460 = vmatprep.mubr.f32.mxu0 0.0
      %3461 = vmatmul.mubr.f32.gmra.mrb[0].mxu0 %v3382
      %v3462 = vpop.f32.mrb[0].mxu0
      %v3463 = vadd.f32 0.0, %v3462
      %v3464 = vpop.f32.mrb[0].mxu0
      %3465 = vdwg.mxu0
      %3466 = vrot.lane.b32.xlu0 %v2811, 108
      %v3467 = vpop.permute.xlu0 %3466
      %3468 = vrot.lane.b32.xlu0 %v2812, 108
      %v3469 = vpop.permute.xlu0 %3468
      %3470 = vrot.lane.b32.xlu0 %v2813, 108
      %v3471 = vpop.permute.xlu0 %3470
      %3475 = vrot.lane.b32.xlu0 %v2798, 116
      %v3476 = vpop.permute.xlu0 %3475
      %3477 = vrot.lane.b32.xlu0 %v2803, 116
      %v3478 = vpop.permute.xlu0 %3477
      %3479 = vrot.lane.b32.xlu0 %v2808, 116
      %v3480 = vpop.permute.xlu0 %3479
      %v3484 = vsel %vm912, %v3467, %v3476
      %v3485 = vsel %vm912, %v3469, %v3478
      %v3486 = vsel %vm912, %v3471, %v3480
      %v3487 = vmul.f32 %v2798, %v1605
      %v3488 = vmul.f32 %v2803, %v1607
      %v3489 = vmul.f32 %v2808, %v1609
      %v3490 = vmul.f32 %v3484, %v923
      %v3491 = vmul.f32 %v3485, %v925
      %v3492 = vmul.f32 %v3486, %v927
      %3496 = vrot.lane.b32.xlu0 %v3490, 16
      %v3497 = vpop.permute.xlu0 %3496
      %3498 = vrot.lane.b32.xlu0 %v3491, 16
      %v3499 = vpop.permute.xlu0 %3498
      %3500 = vrot.lane.b32.xlu0 %v3492, 16
      %v3501 = vpop.permute.xlu0 %3500
      %v3505 = vadd.f32 %v3487, %v3497
      %v3506 = vadd.f32 %v3488, %v3499
      %v3507 = vadd.f32 %v3489, %v3501
      %3508 = vrot.lane.b32.xlu0 %v2811, 76
      %v3509 = vpop.permute.xlu0 %3508
      %3510 = vrot.lane.b32.xlu0 %v2812, 76
      %v3511 = vpop.permute.xlu0 %3510
      %3512 = vrot.lane.b32.xlu0 %v2813, 76
      %v3513 = vpop.permute.xlu0 %3512
      %3517 = vrot.lane.b32.xlu0 %v2798, 84
      %v3518 = vpop.permute.xlu0 %3517
      %3519 = vrot.lane.b32.xlu0 %v2803, 84
      %v3520 = vpop.permute.xlu0 %3519
      %3521 = vrot.lane.b32.xlu0 %v2808, 84
      %v3522 = vpop.permute.xlu0 %3521
      %v3526 = vsel %vm912, %v3509, %v3518
      %v3527 = vsel %vm912, %v3511, %v3520
      %v3528 = vsel %vm912, %v3513, %v3522
      %v3529 = vmul.f32 %v2798, %v1656
      %v3530 = vmul.f32 %v2803, %v1658
      %v3531 = vmul.f32 %v2808, %v1660
      %v3532 = vmul.f32 %v3526, %v923
      %v3533 = vmul.f32 %v3527, %v925
      %v3534 = vmul.f32 %v3528, %v927
      %3538 = vrot.lane.b32.xlu0 %v3532, 48
      %v3539 = vpop.permute.xlu0 %3538
      %3540 = vrot.lane.b32.xlu0 %v3533, 48
      %v3541 = vpop.permute.xlu0 %3540
      %3542 = vrot.lane.b32.xlu0 %v3534, 48
      %v3543 = vpop.permute.xlu0 %3542
      %v3547 = vadd.f32 %v3529, %v3539
      %v3548 = vadd.f32 %v3530, %v3541
      %v3549 = vadd.f32 %v3531, %v3543
      %3553 = vrot.lane.b32.xlu0 %v3505, 112
      %v3554 = vpop.permute.xlu0 %3553
      %3555 = vrot.lane.b32.xlu0 %v3506, 112
      %v3556 = vpop.permute.xlu0 %3555
      %3557 = vrot.lane.b32.xlu0 %v3507, 112
      %v3558 = vpop.permute.xlu0 %3557
      %3562 = vrot.lane.b32.xlu0 %v3547, 80
      %v3563 = vpop.permute.xlu0 %3562
      %3564 = vrot.lane.b32.xlu0 %v3548, 80
      %v3565 = vpop.permute.xlu0 %3564
      %3566 = vrot.lane.b32.xlu0 %v3549, 80
      %v3567 = vpop.permute.xlu0 %3566
      %v3568 = vsel %vm997, %v3554, 0
      %v3570 = vsel %vm997, %v3556, 0
      %v3572 = vsel %vm997, %v3558, 0
      %v3574 = vsel %vm997, %v3563, 0
      %v3576 = vsel %vm997, %v3565, 0
      %v3578 = vsel %vm997, %v3567, 0
      %3580 = vmatprep.subr.mxu0 0.0
      %3581 = vmatpush1.xpose.msra.mxu0 %v3574
      %3582 = vmatprep.subr.mxu0 0.0
      %3583 = vmatpush1.xpose.msra.mxu0 %v3576
      %3584 = vmatprep.subr.mxu0 0.0
      %3585 = vmatpush1.xpose.msra.mxu0 %v3578
      %3586 = vmatprep.subr.mxu0 0.0
      %3587 = vmatpush1.xpose.msra.mxu0 0.0
      %3588 = vmatprep.subr.mxu0 0.0
      %3589 = vmatpush1.xpose.msra.mxu0 0.0
      %3590 = vmatprep.subr.mxu0 0.0
      %3591 = vmatpush1.xpose.msra.mxu0 0.0
      %3592 = vmatprep.subr.mxu0 0.0
      %3593 = vmatpush1.xpose.msra.mxu0 0.0
      %3594 = vmatprep.subr.mxu0 0.0
      %3595 = vmatpush1.xpose.msra.mxu0 0.0
      %3596 = vmatprep.subr.mxu0 0.0
      %3597 = vmatpush1.xpose.msra.mxu0 0.0
      %3598 = vmatprep.subr.mxu0 0.0
      %3599 = vmatpush1.xpose.msra.mxu0 0.0
      %3600 = vmatprep.subr.mxu0 0.0
      %3601 = vmatpush1.xpose.msra.mxu0 0.0
      %3602 = vmatprep.subr.mxu0 0.0
      %3603 = vmatpush1.xpose.msra.mxu0 0.0
      %3604 = vmatprep.subr.mxu0 0.0
      %3605 = vmatpush1.xpose.msra.mxu0 0.0
      %3606 = vmatprep.subr.mxu0 0.0
      %3607 = vmatpush1.xpose.msra.mxu0 0.0
      %3608 = vmatprep.subr.mxu0 0.0
      %3609 = vmatpush1.xpose.msra.mxu0 0.0
      %3610 = vmatprep.subr.mxu0 0.0
      %3611 = vmatpush1.xpose.msra.mxu0 0.0
      %3612 = vmatprep.subr.mxu0 0.0
      %3613 = vmatpush1.xpose.msra.mxu0 0.0
      %3614 = vmatprep.subr.mxu0 0.0
      %3615 = vmatpush1.xpose.msra.mxu0 0.0
      %3616 = vmatprep.subr.mxu0 0.0
      %3617 = vmatpush1.xpose.msra.mxu0 0.0
      %3618 = vmatprep.subr.mxu0 0.0
      %3619 = vmatpush1.xpose.msra.mxu0 0.0
      %3620 = vmatprep.subr.mxu0 0.0
      %3621 = vmatpush1.xpose.msra.mxu0 0.0
      %3622 = vmatprep.subr.mxu0 0.0
      %3623 = vmatpush1.xpose.msra.mxu0 0.0
      %3624 = vmatprep.subr.mxu0 0.0
      %3625 = vmatpush1.xpose.msra.mxu0 0.0
      %3626 = vmatprep.subr.mxu0 0.0
      %3627 = vmatpush1.xpose.msra.mxu0 0.0
      %3628 = vmatprep.subr.mxu0 0.0
      %3629 = vmatpush1.xpose.msra.mxu0 0.0
      %3630 = vmatprep.subr.mxu0 0.0
      %3631 = vmatpush1.xpose.msra.mxu0 0.0
      %3632 = vmatprep.subr.mxu0 0.0
      %3633 = vmatpush1.xpose.msra.mxu0 0.0
      %3634 = vmatprep.subr.mxu0 0.0
      %3635 = vmatpush1.xpose.msra.mxu0 0.0
      %3636 = vmatprep.subr.mxu0 0.0
      %3637 = vmatpush1.xpose.msra.mxu0 0.0
      %3638 = vmatprep.subr.mxu0 0.0
      %3639 = vmatpush1.xpose.msra.mxu0 0.0
      %3640 = vmatprep.subr.mxu0 0.0
      %3641 = vmatpush1.xpose.msra.mxu0 0.0
      %3642 = vmatprep.subr.mxu0 0.0
      %3643 = vmatpush1.xpose.msra.mxu0 0.0
      %3644 = vmatprep.mubr.f32.mxu0 0.0
      %3645 = vmatmul.mubr.f32.gmra.mrb[0].mxu0 %v3568
      %v3646 = vpop.f32.mrb[0].mxu0
      %v3647 = vadd.f32 0.0, %v3646
      %v3648 = vpop.f32.mrb[0].mxu0
      %3649 = vmatprep.mubr.f32.mxu0 0.0
      %3650 = vmatmul.mubr.f32.gmra.mrb[0].mxu0 %v3570
      %v3651 = vpop.f32.mrb[0].mxu0
      %v3652 = vadd.f32 0.0, %v3651
      %v3653 = vpop.f32.mrb[0].mxu0
      %3654 = vmatprep.mubr.f32.mxu0 0.0
      %3655 = vmatmul.mubr.f32.gmra.mrb[0].mxu0 %v3572
      %v3656 = vpop.f32.mrb[0].mxu0
      %v3657 = vadd.f32 0.0, %v3656
      %v3658 = vpop.f32.mrb[0].mxu0
      %3659 = vdwg.mxu0
      %v3660 = vmul.f32 %v3647, 0.35355338
      %v3661 = vmul.f32 %v3652, 0.35355338
      %v3662 = vmul.f32 %v3657, 0.35355338
      %v3663 = vsel %vm755, %v3660, -1e+30
      %v3664 = vsel %vm756, %v3661, -1e+30
      %v3665 = vsel %vm757, %v3662, -1e+30
      %v3666 = vsel %vm1099, %v3663, -inf
      %3667 = vmax.xlane.f32.xlu0 %v3666
      %v3668 = vpop.xlane.xlu0 %3667
      %v3669 = vsel %vm1099, %v3664, -inf
      %3670 = vmax.xlane.f32.xlu0 %v3669
      %v3671 = vpop.xlane.xlu0 %3670
      %v3672 = vsel %vm1106, %v3665, -inf
      %3673 = vmax.xlane.f32.xlu0 %v3672
      %v3674 = vpop.xlane.xlu0 %3673
      %v3675 = vsub.f32 %v3663, %v3668
      %v3676 = vsub.f32 %v3664, %v3671
      %v3677 = vsub.f32 %v3665, %v3674
      %v3678 = vmul.f32 %v3675, 1.442695
      %v3679 = vpow.pop %v3678
      %v3680 = vmul.f32 %v3676, 1.442695
      %v3681 = vpow.pop %v3680
      %v3682 = vmul.f32 %v3677, 1.442695
      %v3683 = vpow.pop %v3682
      %v3684 = vsel %vm1099, %v3679, 0.0
      %3685 = vadd.xlane.f32.xlu0 %v3684
      %v3686 = vpop.xlane.xlu0 %3685
      %v3687 = vsel %vm1099, %v3681, 0.0
      %3688 = vadd.xlane.f32.xlu0 %v3687
      %v3689 = vpop.xlane.xlu0 %3688
      %v3690 = vsel %vm1106, %v3683, 0.0
      %3691 = vadd.xlane.f32.xlu0 %v3690
      %v3692 = vpop.xlane.xlu0 %3691
      %v3693 = vrcp.pop %v3686
      %v3694 = vrcp.pop %v3689
      %v3695 = vrcp.pop %v3692
      %v3696 = vmul.f32 %v3679, %v3693
      %v3697 = vmul.f32 %v3681, %v3694
      %v3698 = vmul.f32 %v3683, %v3695
      %3699 = vrot.lane.b32.xlu0 %v2798, 48
      %v3700 = vpop.permute.xlu0 %3699
      %3701 = vrot.lane.b32.xlu0 %v2803, 48
      %v3702 = vpop.permute.xlu0 %3701
      %3703 = vrot.lane.b32.xlu0 %v2808, 48
      %v3704 = vpop.permute.xlu0 %3703
      %v3708 = vsel %vm1099, %v3696, 0
      %v3711 = vsel %vm1099, %v3697, 0
      %v3714 = vsel %vm1099, %v3698, 0
      %v3716 = vsel %vm671, %v3704, 0
      %3718 = vmatprep.subr.mxu0 0.0
      %3719 = vmatpush1.msra.mxu0 %v3700
      %3720 = vmatprep.subr.mxu0 0.0
      %3721 = vmatpush1.msra.mxu0 %v3702
      %3722 = vmatprep.subr.mxu0 0.0
      %3723 = vmatpush1.msra.mxu0 %v3716
      %3724 = vmatprep.subr.mxu0 0.0
      %3725 = vmatpush1.msra.mxu0 0.0
      %3726 = vmatprep.subr.mxu0 0.0
      %3727 = vmatpush1.msra.mxu0 0.0
      %3728 = vmatprep.subr.mxu0 0.0
      %3729 = vmatpush1.msra.mxu0 0.0
      %3730 = vmatprep.subr.mxu0 0.0
      %3731 = vmatpush1.msra.mxu0 0.0
      %3732 = vmatprep.subr.mxu0 0.0
      %3733 = vmatpush1.msra.mxu0 0.0
      %3734 = vmatprep.subr.mxu0 0.0
      %3735 = vmatpush1.msra.mxu0 0.0
      %3736 = vmatprep.subr.mxu0 0.0
      %3737 = vmatpush1.msra.mxu0 0.0
      %3738 = vmatprep.subr.mxu0 0.0
      %3739 = vmatpush1.msra.mxu0 0.0
      %3740 = vmatprep.subr.mxu0 0.0
      %3741 = vmatpush1.msra.mxu0 0.0
      %3742 = vmatprep.subr.mxu0 0.0
      %3743 = vmatpush1.msra.mxu0 0.0
      %3744 = vmatprep.subr.mxu0 0.0
      %3745 = vmatpush1.msra.mxu0 0.0
      %3746 = vmatprep.subr.mxu0 0.0
      %3747 = vmatpush1.msra.mxu0 0.0
      %3748 = vmatprep.subr.mxu0 0.0
      %3749 = vmatpush1.msra.mxu0 0.0
      %3750 = vmatprep.subr.mxu0 0.0
      %3751 = vmatpush1.msra.mxu0 0.0
      %3752 = vmatprep.subr.mxu0 0.0
      %3753 = vmatpush1.msra.mxu0 0.0
      %3754 = vmatprep.subr.mxu0 0.0
      %3755 = vmatpush1.msra.mxu0 0.0
      %3756 = vmatprep.subr.mxu0 0.0
      %3757 = vmatpush1.msra.mxu0 0.0
      %3758 = vmatprep.subr.mxu0 0.0
      %3759 = vmatpush1.msra.mxu0 0.0
      %3760 = vmatprep.subr.mxu0 0.0
      %3761 = vmatpush1.msra.mxu0 0.0
      %3762 = vmatprep.subr.mxu0 0.0
      %3763 = vmatpush1.msra.mxu0 0.0
      %3764 = vmatprep.subr.mxu0 0.0
      %3765 = vmatpush1.msra.mxu0 0.0
      %3766 = vmatprep.subr.mxu0 0.0
      %3767 = vmatpush1.msra.mxu0 0.0
      %3768 = vmatprep.subr.mxu0 0.0
      %3769 = vmatpush1.msra.mxu0 0.0
      %3770 = vmatprep.subr.mxu0 0.0
      %3771 = vmatpush1.msra.mxu0 0.0
      %3772 = vmatprep.subr.mxu0 0.0
      %3773 = vmatpush1.msra.mxu0 0.0
      %3774 = vmatprep.subr.mxu0 0.0
      %3775 = vmatpush1.msra.mxu0 0.0
      %3776 = vmatprep.subr.mxu0 0.0
      %3777 = vmatpush1.msra.mxu0 0.0
      %3778 = vmatprep.subr.mxu0 0.0
      %3779 = vmatpush1.msra.mxu0 0.0
      %3780 = vmatprep.subr.mxu0 0.0
      %3781 = vmatpush1.msra.mxu0 0.0
      %3782 = vmatprep.mubr.f32.mxu0 0.0
      %3783 = vmatmul.mubr.f32.gmra.mrb[0].mxu0 %v3708
      %v3784 = vpop.f32.mrb[0].mxu0
      %v3785 = vadd.f32 0.0, %v3784
      %v3786 = vpop.f32.mrb[0].mxu0
      %3787 = vmatprep.mubr.f32.mxu0 0.0
      %3788 = vmatmul.mubr.f32.gmra.mrb[0].mxu0 %v3711
      %v3789 = vpop.f32.mrb[0].mxu0
      %v3790 = vadd.f32 0.0, %v3789
      %v3791 = vpop.f32.mrb[0].mxu0
      %3792 = vmatprep.mubr.f32.mxu0 0.0
      %3793 = vmatmul.mubr.f32.gmra.mrb[0].mxu0 %v3714
      %v3794 = vpop.f32.mrb[0].mxu0
      %v3795 = vadd.f32 0.0, %v3794
      %v3796 = vpop.f32.mrb[0].mxu0
      %3797 = vdwg.mxu0
      %3798 = vrot.lane.b32.xlu0 %v2811, 100
      %v3799 = vpop.permute.xlu0 %3798
      %3800 = vrot.lane.b32.xlu0 %v2812, 100
      %v3801 = vpop.permute.xlu0 %3800
      %3802 = vrot.lane.b32.xlu0 %v2813, 100
      %v3803 = vpop.permute.xlu0 %3802
      %3807 = vrot.lane.b32.xlu0 %v2798, 108
      %v3808 = vpop.permute.xlu0 %3807
      %3809 = vrot.lane.b32.xlu0 %v2803, 108
      %v3810 = vpop.permute.xlu0 %3809
      %3811 = vrot.lane.b32.xlu0 %v2808, 108
      %v3812 = vpop.permute.xlu0 %3811
      %v3816 = vsel %vm912, %v3799, %v3808
      %v3817 = vsel %vm912, %v3801, %v3810
      %v3818 = vsel %vm912, %v3803, %v3812
      %v3819 = vmul.f32 %v2798, %v1955
      %v3820 = vmul.f32 %v2803, %v1957
      %v3821 = vmul.f32 %v2808, %v1959
      %v3822 = vmul.f32 %v3816, %v923
      %v3823 = vmul.f32 %v3817, %v925
      %v3824 = vmul.f32 %v3818, %v927
      %3828 = vrot.lane.b32.xlu0 %v3822, 24
      %v3829 = vpop.permute.xlu0 %3828
      %3830 = vrot.lane.b32.xlu0 %v3823, 24
      %v3831 = vpop.permute.xlu0 %3830
      %3832 = vrot.lane.b32.xlu0 %v3824, 24
      %v3833 = vpop.permute.xlu0 %3832
      %v3837 = vadd.f32 %v3819, %v3829
      %v3838 = vadd.f32 %v3820, %v3831
      %v3839 = vadd.f32 %v3821, %v3833
      %3840 = vrot.lane.b32.xlu0 %v2811, 68
      %v3841 = vpop.permute.xlu0 %3840
      %3842 = vrot.lane.b32.xlu0 %v2812, 68
      %v3843 = vpop.permute.xlu0 %3842
      %3844 = vrot.lane.b32.xlu0 %v2813, 68
      %v3845 = vpop.permute.xlu0 %3844
      %3849 = vrot.lane.b32.xlu0 %v2798, 76
      %v3850 = vpop.permute.xlu0 %3849
      %3851 = vrot.lane.b32.xlu0 %v2803, 76
      %v3852 = vpop.permute.xlu0 %3851
      %3853 = vrot.lane.b32.xlu0 %v2808, 76
      %v3854 = vpop.permute.xlu0 %3853
      %v3858 = vsel %vm912, %v3841, %v3850
      %v3859 = vsel %vm912, %v3843, %v3852
      %v3860 = vsel %vm912, %v3845, %v3854
      %v3861 = vmul.f32 %v2798, %v2006
      %v3862 = vmul.f32 %v2803, %v2008
      %v3863 = vmul.f32 %v2808, %v2010
      %v3864 = vmul.f32 %v3858, %v923
      %v3865 = vmul.f32 %v3859, %v925
      %v3866 = vmul.f32 %v3860, %v927
      %3870 = vrot.lane.b32.xlu0 %v3864, 56
      %v3871 = vpop.permute.xlu0 %3870
      %3872 = vrot.lane.b32.xlu0 %v3865, 56
      %v3873 = vpop.permute.xlu0 %3872
      %3874 = vrot.lane.b32.xlu0 %v3866, 56
      %v3875 = vpop.permute.xlu0 %3874
      %v3879 = vadd.f32 %v3861, %v3871
      %v3880 = vadd.f32 %v3862, %v3873
      %v3881 = vadd.f32 %v3863, %v3875
      %3885 = vrot.lane.b32.xlu0 %v3837, 104
      %v3886 = vpop.permute.xlu0 %3885
      %3887 = vrot.lane.b32.xlu0 %v3838, 104
      %v3888 = vpop.permute.xlu0 %3887
      %3889 = vrot.lane.b32.xlu0 %v3839, 104
      %v3890 = vpop.permute.xlu0 %3889
      %3894 = vrot.lane.b32.xlu0 %v3879, 72
      %v3895 = vpop.permute.xlu0 %3894
      %3896 = vrot.lane.b32.xlu0 %v3880, 72
      %v3897 = vpop.permute.xlu0 %3896
      %3898 = vrot.lane.b32.xlu0 %v3881, 72
      %v3899 = vpop.permute.xlu0 %3898
      %v3900 = vsel %vm997, %v3886, 0
      %v3902 = vsel %vm997, %v3888, 0
      %v3904 = vsel %vm997, %v3890, 0
      %v3906 = vsel %vm997, %v3895, 0
      %v3908 = vsel %vm997, %v3897, 0
      %v3910 = vsel %vm997, %v3899, 0
      %3912 = vmatprep.subr.mxu0 0.0
      %3913 = vmatpush1.xpose.msra.mxu0 %v3906
      %3914 = vmatprep.subr.mxu0 0.0
      %3915 = vmatpush1.xpose.msra.mxu0 %v3908
      %3916 = vmatprep.subr.mxu0 0.0
      %3917 = vmatpush1.xpose.msra.mxu0 %v3910
      %3918 = vmatprep.subr.mxu0 0.0
      %3919 = vmatpush1.xpose.msra.mxu0 0.0
      %3920 = vmatprep.subr.mxu0 0.0
      %3921 = vmatpush1.xpose.msra.mxu0 0.0
      %3922 = vmatprep.subr.mxu0 0.0
      %3923 = vmatpush1.xpose.msra.mxu0 0.0
      %3924 = vmatprep.subr.mxu0 0.0
      %3925 = vmatpush1.xpose.msra.mxu0 0.0
      %3926 = vmatprep.subr.mxu0 0.0
      %3927 = vmatpush1.xpose.msra.mxu0 0.0
      %3928 = vmatprep.subr.mxu0 0.0
      %3929 = vmatpush1.xpose.msra.mxu0 0.0
      %3930 = vmatprep.subr.mxu0 0.0
      %3931 = vmatpush1.xpose.msra.mxu0 0.0
      %3932 = vmatprep.subr.mxu0 0.0
      %3933 = vmatpush1.xpose.msra.mxu0 0.0
      %3934 = vmatprep.subr.mxu0 0.0
      %3935 = vmatpush1.xpose.msra.mxu0 0.0
      %3936 = vmatprep.subr.mxu0 0.0
      %3937 = vmatpush1.xpose.msra.mxu0 0.0
      %3938 = vmatprep.subr.mxu0 0.0
      %3939 = vmatpush1.xpose.msra.mxu0 0.0
      %3940 = vmatprep.subr.mxu0 0.0
      %3941 = vmatpush1.xpose.msra.mxu0 0.0
      %3942 = vmatprep.subr.mxu0 0.0
      %3943 = vmatpush1.xpose.msra.mxu0 0.0
      %3944 = vmatprep.subr.mxu0 0.0
      %3945 = vmatpush1.xpose.msra.mxu0 0.0
      %3946 = vmatprep.subr.mxu0 0.0
      %3947 = vmatpush1.xpose.msra.mxu0 0.0
      %3948 = vmatprep.subr.mxu0 0.0
      %3949 = vmatpush1.xpose.msra.mxu0 0.0
      %3950 = vmatprep.subr.mxu0 0.0
      %3951 = vmatpush1.xpose.msra.mxu0 0.0
      %3952 = vmatprep.subr.mxu0 0.0
      %3953 = vmatpush1.xpose.msra.mxu0 0.0
      %3954 = vmatprep.subr.mxu0 0.0
      %3955 = vmatpush1.xpose.msra.mxu0 0.0
      %3956 = vmatprep.subr.mxu0 0.0
      %3957 = vmatpush1.xpose.msra.mxu0 0.0
      %3958 = vmatprep.subr.mxu0 0.0
      %3959 = vmatpush1.xpose.msra.mxu0 0.0
      %3960 = vmatprep.subr.mxu0 0.0
      %3961 = vmatpush1.xpose.msra.mxu0 0.0
      %3962 = vmatprep.subr.mxu0 0.0
      %3963 = vmatpush1.xpose.msra.mxu0 0.0
      %3964 = vmatprep.subr.mxu0 0.0
      %3965 = vmatpush1.xpose.msra.mxu0 0.0
      %3966 = vmatprep.subr.mxu0 0.0
      %3967 = vmatpush1.xpose.msra.mxu0 0.0
      %3968 = vmatprep.subr.mxu0 0.0
      %3969 = vmatpush1.xpose.msra.mxu0 0.0
      %3970 = vmatprep.subr.mxu0 0.0
      %3971 = vmatpush1.xpose.msra.mxu0 0.0
      %3972 = vmatprep.subr.mxu0 0.0
      %3973 = vmatpush1.xpose.msra.mxu0 0.0
      %3974 = vmatprep.subr.mxu0 0.0
      %3975 = vmatpush1.xpose.msra.mxu0 0.0
      %3976 = vmatprep.mubr.f32.mxu0 0.0
      %3977 = vmatmul.mubr.f32.gmra.mrb[0].mxu0 %v3900
      %v3978 = vpop.f32.mrb[0].mxu0
      %v3979 = vadd.f32 0.0, %v3978
      %v3980 = vpop.f32.mrb[0].mxu0
      %3981 = vmatprep.mubr.f32.mxu0 0.0
      %3982 = vmatmul.mubr.f32.gmra.mrb[0].mxu0 %v3902
      %v3983 = vpop.f32.mrb[0].mxu0
      %v3984 = vadd.f32 0.0, %v3983
      %v3985 = vpop.f32.mrb[0].mxu0
      %3986 = vmatprep.mubr.f32.mxu0 0.0
      %3987 = vmatmul.mubr.f32.gmra.mrb[0].mxu0 %v3904
      %v3988 = vpop.f32.mrb[0].mxu0
      %v3989 = vadd.f32 0.0, %v3988
      %v3990 = vpop.f32.mrb[0].mxu0
      %3991 = vdwg.mxu0
      %v3992 = vmul.f32 %v3979, 0.35355338
      %v3993 = vmul.f32 %v3984, 0.35355338
      %v3994 = vmul.f32 %v3989, 0.35355338
      %v3995 = vsel %vm755, %v3992, -1e+30
      %v3996 = vsel %vm756, %v3993, -1e+30
      %v3997 = vsel %vm757, %v3994, -1e+30
      %v3998 = vsel %vm1099, %v3995, -inf
      %3999 = vmax.xlane.f32.xlu0 %v3998
      %v4000 = vpop.xlane.xlu0 %3999
      %v4001 = vsel %vm1099, %v3996, -inf
      %4002 = vmax.xlane.f32.xlu0 %v4001
      %v4003 = vpop.xlane.xlu0 %4002
      %v4004 = vsel %vm1106, %v3997, -inf
      %4005 = vmax.xlane.f32.xlu0 %v4004
      %v4006 = vpop.xlane.xlu0 %4005
      %v4007 = vsub.f32 %v3995, %v4000
      %v4008 = vsub.f32 %v3996, %v4003
      %v4009 = vsub.f32 %v3997, %v4006
      %v4010 = vmul.f32 %v4007, 1.442695
      %v4011 = vpow.pop %v4010
      %v4012 = vmul.f32 %v4008, 1.442695
      %v4013 = vpow.pop %v4012
      %v4014 = vmul.f32 %v4009, 1.442695
      %v4015 = vpow.pop %v4014
      %v4016 = vsel %vm1099, %v4011, 0.0
      %4017 = vadd.xlane.f32.xlu0 %v4016
      %v4018 = vpop.xlane.xlu0 %4017
      %v4019 = vsel %vm1099, %v4013, 0.0
      %4020 = vadd.xlane.f32.xlu0 %v4019
      %v4021 = vpop.xlane.xlu0 %4020
      %v4022 = vsel %vm1106, %v4015, 0.0
      %4023 = vadd.xlane.f32.xlu0 %v4022
      %v4024 = vpop.xlane.xlu0 %4023
      %v4025 = vrcp.pop %v4018
      %v4026 = vrcp.pop %v4021
      %v4027 = vrcp.pop %v4024
      %v4028 = vmul.f32 %v4011, %v4025
      %v4029 = vmul.f32 %v4013, %v4026
      %v4030 = vmul.f32 %v4015, %v4027
      %4031 = vrot.lane.b32.xlu0 %v2798, 40
      %v4032 = vpop.permute.xlu0 %4031
      %4033 = vrot.lane.b32.xlu0 %v2803, 40
      %v4034 = vpop.permute.xlu0 %4033
      %4035 = vrot.lane.b32.xlu0 %v2808, 40
      %v4036 = vpop.permute.xlu0 %4035
      %v4040 = vsel %vm1099, %v4028, 0
      %v4043 = vsel %vm1099, %v4029, 0
      %v4046 = vsel %vm1099, %v4030, 0
      %v4048 = vsel %vm671, %v4036, 0
      %4050 = vmatprep.subr.mxu0 0.0
      %4051 = vmatpush1.msra.mxu0 %v4032
      %4052 = vmatprep.subr.mxu0 0.0
      %4053 = vmatpush1.msra.mxu0 %v4034
      %4054 = vmatprep.subr.mxu0 0.0
      %4055 = vmatpush1.msra.mxu0 %v4048
      %4056 = vmatprep.subr.mxu0 0.0
      %4057 = vmatpush1.msra.mxu0 0.0
      %4058 = vmatprep.subr.mxu0 0.0
      %4059 = vmatpush1.msra.mxu0 0.0
      %4060 = vmatprep.subr.mxu0 0.0
      %4061 = vmatpush1.msra.mxu0 0.0
      %4062 = vmatprep.subr.mxu0 0.0
      %4063 = vmatpush1.msra.mxu0 0.0
      %4064 = vmatprep.subr.mxu0 0.0
      %4065 = vmatpush1.msra.mxu0 0.0
      %4066 = vmatprep.subr.mxu0 0.0
      %4067 = vmatpush1.msra.mxu0 0.0
      %4068 = vmatprep.subr.mxu0 0.0
      %4069 = vmatpush1.msra.mxu0 0.0
      %4070 = vmatprep.subr.mxu0 0.0
      %4071 = vmatpush1.msra.mxu0 0.0
      %4072 = vmatprep.subr.mxu0 0.0
      %4073 = vmatpush1.msra.mxu0 0.0
      %4074 = vmatprep.subr.mxu0 0.0
      %4075 = vmatpush1.msra.mxu0 0.0
      %4076 = vmatprep.subr.mxu0 0.0
      %4077 = vmatpush1.msra.mxu0 0.0
      %4078 = vmatprep.subr.mxu0 0.0
      %4079 = vmatpush1.msra.mxu0 0.0
      %4080 = vmatprep.subr.mxu0 0.0
      %4081 = vmatpush1.msra.mxu0 0.0
      %4082 = vmatprep.subr.mxu0 0.0
      %4083 = vmatpush1.msra.mxu0 0.0
      %4084 = vmatprep.subr.mxu0 0.0
      %4085 = vmatpush1.msra.mxu0 0.0
      %4086 = vmatprep.subr.mxu0 0.0
      %4087 = vmatpush1.msra.mxu0 0.0
      %4088 = vmatprep.subr.mxu0 0.0
      %4089 = vmatpush1.msra.mxu0 0.0
      %4090 = vmatprep.subr.mxu0 0.0
      %4091 = vmatpush1.msra.mxu0 0.0
      %4092 = vmatprep.subr.mxu0 0.0
      %4093 = vmatpush1.msra.mxu0 0.0
      %4094 = vmatprep.subr.mxu0 0.0
      %4095 = vmatpush1.msra.mxu0 0.0
      %4096 = vmatprep.subr.mxu0 0.0
      %4097 = vmatpush1.msra.mxu0 0.0
      %4098 = vmatprep.subr.mxu0 0.0
      %4099 = vmatpush1.msra.mxu0 0.0
      %4100 = vmatprep.subr.mxu0 0.0
      %4101 = vmatpush1.msra.mxu0 0.0
      %4102 = vmatprep.subr.mxu0 0.0
      %4103 = vmatpush1.msra.mxu0 0.0
      %4104 = vmatprep.subr.mxu0 0.0
      %4105 = vmatpush1.msra.mxu0 0.0
      %4106 = vmatprep.subr.mxu0 0.0
      %4107 = vmatpush1.msra.mxu0 0.0
      %4108 = vmatprep.subr.mxu0 0.0
      %4109 = vmatpush1.msra.mxu0 0.0
      %4110 = vmatprep.subr.mxu0 0.0
      %4111 = vmatpush1.msra.mxu0 0.0
      %4112 = vmatprep.subr.mxu0 0.0
      %4113 = vmatpush1.msra.mxu0 0.0
      %4114 = vmatprep.mubr.f32.mxu0 0.0
      %4115 = vmatmul.mubr.f32.gmra.mrb[0].mxu0 %v4040
      %v4116 = vpop.f32.mrb[0].mxu0
      %v4117 = vadd.f32 0.0, %v4116
      %v4118 = vpop.f32.mrb[0].mxu0
      %4119 = vmatprep.mubr.f32.mxu0 0.0
      %4120 = vmatmul.mubr.f32.gmra.mrb[0].mxu0 %v4043
      %v4121 = vpop.f32.mrb[0].mxu0
      %v4122 = vadd.f32 0.0, %v4121
      %v4123 = vpop.f32.mrb[0].mxu0
      %4124 = vmatprep.mubr.f32.mxu0 0.0
      %4125 = vmatmul.mubr.f32.gmra.mrb[0].mxu0 %v4046
      %v4126 = vpop.f32.mrb[0].mxu0
      %v4127 = vadd.f32 0.0, %v4126
      %v4128 = vpop.f32.mrb[0].mxu0
      %4129 = vdwg.mxu0
      %4133 = vrot.lane.b32.xlu0 %v3453, 8
      %v4134 = vpop.permute.xlu0 %4133
      %4135 = vrot.lane.b32.xlu0 %v3458, 8
      %v4136 = vpop.permute.xlu0 %4135
      %4137 = vrot.lane.b32.xlu0 %v3463, 8
      %v4138 = vpop.permute.xlu0 %4137
      %4145 = vrot.lane.b32.xlu0 %v3785, 16
      %v4146 = vpop.permute.xlu0 %4145
      %4147 = vrot.lane.b32.xlu0 %v3790, 16
      %v4148 = vpop.permute.xlu0 %4147
      %4149 = vrot.lane.b32.xlu0 %v3795, 16
      %v4150 = vpop.permute.xlu0 %4149
      %4157 = vrot.lane.b32.xlu0 %v4117, 24
      %v4158 = vpop.permute.xlu0 %4157
      %4159 = vrot.lane.b32.xlu0 %v4122, 24
      %v4160 = vpop.permute.xlu0 %4159
      %4161 = vrot.lane.b32.xlu0 %v4127, 24
      %v4162 = vpop.permute.xlu0 %4161
      %v4166 = vsel %vm997, %v3121, %v4134
      %v4167 = vsel %vm997, %v3126, %v4136
      %v4168 = vsel %vm997, %v3131, %v4138
      %v4169 = vsel %vm337, %v4166, %v4146
      %v4170 = vsel %vm337, %v4167, %v4148
      %v4171 = vsel %vm337, %v4168, %v4150
      %v4172 = vsel %vm2325, %v4169, %v4158
      %v4173 = vsel %vm2325, %v4170, %v4160
      %v4174 = vsel %vm2325, %v4171, %v4162
      %s4175 = scalar_lea.vmem %s7, 32
      %v4176 = vld [vmem:[%s4175] sm:$0xff]
      %v4177 = vld [vmem:[%s4175 + $0x8] sm:$0xff]
      %v4178 = vld [vmem:[%s4175 + $0x10] sm:$0xff]
      %v4179 = vld [vmem:[%s4175 + $0x18] sm:$0xff]
      %v4181 = vsel %vm761, %v4172, 0
      %v4184 = vsel %vm761, %v4173, 0
      %v4187 = vsel %vm761, %v4174, 0
      %4189 = vmatprep.subr.mxu0 0.0
      %4190 = vmatpush1.msra.mxu0 %v4176
      %4191 = vmatprep.subr.mxu0 0.0
      %4192 = vmatpush1.msra.mxu0 %v4177
      %4193 = vmatprep.subr.mxu0 0.0
      %4194 = vmatpush1.msra.mxu0 %v4178
      %4195 = vmatprep.subr.mxu0 0.0
      %4196 = vmatpush1.msra.mxu0 %v4179
      %4197 = vmatprep.subr.mxu0 0.0
      %4198 = vmatpush1.msra.mxu0 0.0
      %4199 = vmatprep.subr.mxu0 0.0
      %4200 = vmatpush1.msra.mxu0 0.0
      %4201 = vmatprep.subr.mxu0 0.0
      %4202 = vmatpush1.msra.mxu0 0.0
      %4203 = vmatprep.subr.mxu0 0.0
      %4204 = vmatpush1.msra.mxu0 0.0
      %4205 = vmatprep.subr.mxu0 0.0
      %4206 = vmatpush1.msra.mxu0 0.0
      %4207 = vmatprep.subr.mxu0 0.0
      %4208 = vmatpush1.msra.mxu0 0.0
      %4209 = vmatprep.subr.mxu0 0.0
      %4210 = vmatpush1.msra.mxu0 0.0
      %4211 = vmatprep.subr.mxu0 0.0
      %4212 = vmatpush1.msra.mxu0 0.0
      %4213 = vmatprep.subr.mxu0 0.0
      %4214 = vmatpush1.msra.mxu0 0.0
      %4215 = vmatprep.subr.mxu0 0.0
      %4216 = vmatpush1.msra.mxu0 0.0
      %4217 = vmatprep.subr.mxu0 0.0
      %4218 = vmatpush1.msra.mxu0 0.0
      %4219 = vmatprep.subr.mxu0 0.0
      %4220 = vmatpush1.msra.mxu0 0.0
      %4221 = vmatprep.subr.mxu0 0.0
      %4222 = vmatpush1.msra.mxu0 0.0
      %4223 = vmatprep.subr.mxu0 0.0
      %4224 = vmatpush1.msra.mxu0 0.0
      %4225 = vmatprep.subr.mxu0 0.0
      %4226 = vmatpush1.msra.mxu0 0.0
      %4227 = vmatprep.subr.mxu0 0.0
      %4228 = vmatpush1.msra.mxu0 0.0
      %4229 = vmatprep.subr.mxu0 0.0
      %4230 = vmatpush1.msra.mxu0 0.0
      %4231 = vmatprep.subr.mxu0 0.0
      %4232 = vmatpush1.msra.mxu0 0.0
      %4233 = vmatprep.subr.mxu0 0.0
      %4234 = vmatpush1.msra.mxu0 0.0
      %4235 = vmatprep.subr.mxu0 0.0
      %4236 = vmatpush1.msra.mxu0 0.0
      %4237 = vmatprep.subr.mxu0 0.0
      %4238 = vmatpush1.msra.mxu0 0.0
      %4239 = vmatprep.subr.mxu0 0.0
      %4240 = vmatpush1.msra.mxu0 0.0
      %4241 = vmatprep.subr.mxu0 0.0
      %4242 = vmatpush1.msra.mxu0 0.0
      %4243 = vmatprep.subr.mxu0 0.0
      %4244 = vmatpush1.msra.mxu0 0.0
      %4245 = vmatprep.subr.mxu0 0.0
      %4246 = vmatpush1.msra.mxu0 0.0
      %4247 = vmatprep.subr.mxu0 0.0
      %4248 = vmatpush1.msra.mxu0 0.0
      %4249 = vmatprep.subr.mxu0 0.0
      %4250 = vmatpush1.msra.mxu0 0.0
      %4251 = vmatprep.subr.mxu0 0.0
      %4252 = vmatpush1.msra.mxu0 0.0
      %4253 = vmatprep.mubr.f32.mxu0 0.0
      %4254 = vmatmul.mubr.f32.gmra.mrb[0].mxu0 %v4181
      %v4255 = vpop.f32.mrb[0].mxu0
      %v4256 = vadd.f32 0.0, %v4255
      %v4257 = vpop.f32.mrb[0].mxu0
      %4258 = vmatprep.mubr.f32.mxu0 0.0
      %4259 = vmatmul.mubr.f32.gmra.mrb[0].mxu0 %v4184
      %v4260 = vpop.f32.mrb[0].mxu0
      %v4261 = vadd.f32 0.0, %v4260
      %v4262 = vpop.f32.mrb[0].mxu0
      %4263 = vmatprep.mubr.f32.mxu0 0.0
      %4264 = vmatmul.mubr.f32.gmra.mrb[0].mxu0 %v4187
      %v4265 = vpop.f32.mrb[0].mxu0
      %v4266 = vadd.f32 0.0, %v4265
      %v4267 = vpop.f32.mrb[0].mxu0
      %4268 = vdwg.mxu0
      %v4269 = vadd.f32 %v2683, %v4256
      %v4270 = vadd.f32 %v2684, %v4261
      %v4271 = vadd.f32 %v2685, %v4266
      %v4272 = vmul.f32 %v4269, %v4269
      %v4273 = vmul.f32 %v4270, %v4270
      %v4274 = vmul.f32 %v4271, %v4271
      %v4275 = vsel %vm761, %v4272, 0.0
      %4276 = vadd.xlane.f32.xlu0 %v4275
      %v4277 = vpop.xlane.xlu0 %4276
      %v4278 = vsel %vm761, %v4273, 0.0
      %4279 = vadd.xlane.f32.xlu0 %v4278
      %v4280 = vpop.xlane.xlu0 %4279
      %v4281 = vsel %vm768, %v4274, 0.0
      %4282 = vadd.xlane.f32.xlu0 %v4281
      %v4283 = vpop.xlane.xlu0 %4282
      %v4284 = vmul.f32 %v4277, %v772
      %v4285 = vmul.f32 %v4280, %v772
      %v4286 = vmul.f32 %v4283, %v772
      %v4287 = vadd.f32 %v4284, 1e-05
      %v4288 = vadd.f32 %v4285, 1e-05
      %v4289 = vadd.f32 %v4286, 1e-05
      %v4290 = vrsqrt.pop %v4287
      %v4291 = vrsqrt.pop %v4288
      %v4292 = vrsqrt.pop %v4289
      %v4293 = vmul.f32 %v4269, %v4290
      %v4294 = vmul.f32 %v4270, %v4291
      %v4295 = vmul.f32 %v4271, %v4292
      %v4296 = vlaneseq
      %v4297 = vshrl.u32 %v4296, 7
      %v4298 = vsub.s32 3, %v4297
      %v4299 = vrot.slane %v328, %v4298
      %v4300 = vmul.f32 %v4293, %v4299
      %v4301 = vmul.f32 %v4294, %v4299
      %v4302 = vmul.f32 %v4295, %v4299
      %s4303 = scalar_lea.vmem %s8, 32
      %v4304 = vld [vmem:[%s4303] sm:$0xff]
      %v4305 = vld [vmem:[%s4303 + $0x8] sm:$0xff]
      %v4306 = vld [vmem:[%s4303 + $0x10] sm:$0xff]
      %v4307 = vld [vmem:[%s4303 + $0x18] sm:$0xff]
      %v4309 = vsel %vm761, %v4300, 0
      %v4312 = vsel %vm761, %v4301, 0
      %v4315 = vsel %vm761, %v4302, 0
      %4317 = vmatprep.subr.mxu0 0.0
      %4318 = vmatpush1.msra.mxu0 %v4304
      %4319 = vmatprep.subr.mxu0 0.0
      %4320 = vmatpush1.msra.mxu0 %v4305
      %4321 = vmatprep.subr.mxu0 0.0
      %4322 = vmatpush1.msra.mxu0 %v4306
      %4323 = vmatprep.subr.mxu0 0.0
      %4324 = vmatpush1.msra.mxu0 %v4307
      %4325 = vmatprep.subr.mxu0 0.0
      %4326 = vmatpush1.msra.mxu0 0.0
      %4327 = vmatprep.subr.mxu0 0.0
      %4328 = vmatpush1.msra.mxu0 0.0
      %4329 = vmatprep.subr.mxu0 0.0
      %4330 = vmatpush1.msra.mxu0 0.0
      %4331 = vmatprep.subr.mxu0 0.0
      %4332 = vmatpush1.msra.mxu0 0.0
      %4333 = vmatprep.subr.mxu0 0.0
      %4334 = vmatpush1.msra.mxu0 0.0
      %4335 = vmatprep.subr.mxu0 0.0
      %4336 = vmatpush1.msra.mxu0 0.0
      %4337 = vmatprep.subr.mxu0 0.0
      %4338 = vmatpush1.msra.mxu0 0.0
      %4339 = vmatprep.subr.mxu0 0.0
      %4340 = vmatpush1.msra.mxu0 0.0
      %4341 = vmatprep.subr.mxu0 0.0
      %4342 = vmatpush1.msra.mxu0 0.0
      %4343 = vmatprep.subr.mxu0 0.0
      %4344 = vmatpush1.msra.mxu0 0.0
      %4345 = vmatprep.subr.mxu0 0.0
      %4346 = vmatpush1.msra.mxu0 0.0
      %4347 = vmatprep.subr.mxu0 0.0
      %4348 = vmatpush1.msra.mxu0 0.0
      %4349 = vmatprep.subr.mxu0 0.0
      %4350 = vmatpush1.msra.mxu0 0.0
      %4351 = vmatprep.subr.mxu0 0.0
      %4352 = vmatpush1.msra.mxu0 0.0
      %4353 = vmatprep.subr.mxu0 0.0
      %4354 = vmatpush1.msra.mxu0 0.0
      %4355 = vmatprep.subr.mxu0 0.0
      %4356 = vmatpush1.msra.mxu0 0.0
      %4357 = vmatprep.subr.mxu0 0.0
      %4358 = vmatpush1.msra.mxu0 0.0
      %4359 = vmatprep.subr.mxu0 0.0
      %4360 = vmatpush1.msra.mxu0 0.0
      %4361 = vmatprep.subr.mxu0 0.0
      %4362 = vmatpush1.msra.mxu0 0.0
      %4363 = vmatprep.subr.mxu0 0.0
      %4364 = vmatpush1.msra.mxu0 0.0
      %4365 = vmatprep.subr.mxu0 0.0
      %4366 = vmatpush1.msra.mxu0 0.0
      %4367 = vmatprep.subr.mxu0 0.0
      %4368 = vmatpush1.msra.mxu0 0.0
      %4369 = vmatprep.subr.mxu0 0.0
      %4370 = vmatpush1.msra.mxu0 0.0
      %4371 = vmatprep.subr.mxu0 0.0
      %4372 = vmatpush1.msra.mxu0 0.0
      %4373 = vmatprep.subr.mxu0 0.0
      %4374 = vmatpush1.msra.mxu0 0.0
      %4375 = vmatprep.subr.mxu0 0.0
      %4376 = vmatpush1.msra.mxu0 0.0
      %4377 = vmatprep.subr.mxu0 0.0
      %4378 = vmatpush1.msra.mxu0 0.0
      %4379 = vmatprep.subr.mxu0 0.0
      %4380 = vmatpush1.msra.mxu0 0.0
      %4381 = vmatprep.mubr.f32.mxu0 0.0
      %4382 = vmatmul.mubr.f32.gmra.mrb[0].mxu0 %v4309
      %v4383 = vpop.f32.mrb[0].mxu0
      %v4384 = vadd.f32 0.0, %v4383
      %v4385 = vpop.f32.mrb[0].mxu0
      %4386 = vmatprep.mubr.f32.mxu0 0.0
      %4387 = vmatmul.mubr.f32.gmra.mrb[0].mxu0 %v4312
      %v4388 = vpop.f32.mrb[0].mxu0
      %v4389 = vadd.f32 0.0, %v4388
      %v4390 = vpop.f32.mrb[0].mxu0
      %4391 = vmatprep.mubr.f32.mxu0 0.0
      %4392 = vmatmul.mubr.f32.gmra.mrb[0].mxu0 %v4315
      %v4393 = vpop.f32.mrb[0].mxu0
      %v4394 = vadd.f32 0.0, %v4393
      %v4395 = vpop.f32.mrb[0].mxu0
      %4396 = vdwg.mxu0
      %v4397 = vxor.u32 %v4384, 2147483648
      %v4398 = vxor.u32 %v4389, 2147483648
      %v4399 = vxor.u32 %v4394, 2147483648
      %v4400 = vmul.f32 %v4397, 1.442695
      %v4401 = vpow.pop %v4400
      %v4402 = vmul.f32 %v4398, 1.442695
      %v4403 = vpow.pop %v4402
      %v4404 = vmul.f32 %v4399, 1.442695
      %v4405 = vpow.pop %v4404
      %v4406 = vadd.f32 %v4401, 1.0
      %v4407 = vadd.f32 %v4403, 1.0
      %v4408 = vadd.f32 %v4405, 1.0
      %v4409 = vrcp.pop %v4406
      %v4410 = vmul.f32 1.0, %v4409
      %v4411 = vrcp.pop %v4407
      %v4412 = vmul.f32 1.0, %v4411
      %v4413 = vrcp.pop %v4408
      %v4414 = vmul.f32 1.0, %v4413
      %v4415 = vmul.f32 %v4384, %v4410
      %v4416 = vmul.f32 %v4389, %v4412
      %v4417 = vmul.f32 %v4394, %v4414
      %4421 = vrot.lane.b32.xlu0 %v4384, 64
      %v4422 = vpop.permute.xlu0 %4421
      %4423 = vrot.lane.b32.xlu0 %v4389, 64
      %v4424 = vpop.permute.xlu0 %4423
      %4425 = vrot.lane.b32.xlu0 %v4394, 64
      %v4426 = vpop.permute.xlu0 %4425
      %v4430 = vmul.f32 %v4415, %v4422
      %v4431 = vmul.f32 %v4416, %v4424
      %v4432 = vmul.f32 %v4417, %v4426
      %s4433 = scalar_lea.vmem %s9, 64
      %v4434 = vld [vmem:[%s4433] sm:$0xff]
      %v4435 = vld [vmem:[%s4433 + $0x8] sm:$0xff]
      %v4436 = vld [vmem:[%s4433 + $0x10] sm:$0xff]
      %v4437 = vld [vmem:[%s4433 + $0x18] sm:$0xff]
      %v4438 = vld [vmem:[%s4433 + $0x20] sm:$0xff]
      %v4439 = vld [vmem:[%s4433 + $0x28] sm:$0xff]
      %v4440 = vld [vmem:[%s4433 + $0x30] sm:$0xff]
      %v4441 = vld [vmem:[%s4433 + $0x38] sm:$0xff]
      %v4443 = vsel %vm2593, %v4430, 0
      %v4446 = vsel %vm2593, %v4431, 0
      %v4449 = vsel %vm2593, %v4432, 0
      %4451 = vmatprep.subr.mxu0 0.0
      %4452 = vmatpush1.msra.mxu0 %v4434
      %4453 = vmatprep.subr.mxu0 0.0
      %4454 = vmatpush1.msra.mxu0 %v4435
      %4455 = vmatprep.subr.mxu0 0.0
      %4456 = vmatpush1.msra.mxu0 %v4436
      %4457 = vmatprep.subr.mxu0 0.0
      %4458 = vmatpush1.msra.mxu0 %v4437
      %4459 = vmatprep.subr.mxu0 0.0
      %4460 = vmatpush1.msra.mxu0 %v4438
      %4461 = vmatprep.subr.mxu0 0.0
      %4462 = vmatpush1.msra.mxu0 %v4439
      %4463 = vmatprep.subr.mxu0 0.0
      %4464 = vmatpush1.msra.mxu0 %v4440
      %4465 = vmatprep.subr.mxu0 0.0
      %4466 = vmatpush1.msra.mxu0 %v4441
      %4467 = vmatprep.subr.mxu0 0.0
      %4468 = vmatpush1.msra.mxu0 0.0
      %4469 = vmatprep.subr.mxu0 0.0
      %4470 = vmatpush1.msra.mxu0 0.0
      %4471 = vmatprep.subr.mxu0 0.0
      %4472 = vmatpush1.msra.mxu0 0.0
      %4473 = vmatprep.subr.mxu0 0.0
      %4474 = vmatpush1.msra.mxu0 0.0
      %4475 = vmatprep.subr.mxu0 0.0
      %4476 = vmatpush1.msra.mxu0 0.0
      %4477 = vmatprep.subr.mxu0 0.0
      %4478 = vmatpush1.msra.mxu0 0.0
      %4479 = vmatprep.subr.mxu0 0.0
      %4480 = vmatpush1.msra.mxu0 0.0
      %4481 = vmatprep.subr.mxu0 0.0
      %4482 = vmatpush1.msra.mxu0 0.0
      %4483 = vmatprep.subr.mxu0 0.0
      %4484 = vmatpush1.msra.mxu0 0.0
      %4485 = vmatprep.subr.mxu0 0.0
      %4486 = vmatpush1.msra.mxu0 0.0
      %4487 = vmatprep.subr.mxu0 0.0
      %4488 = vmatpush1.msra.mxu0 0.0
      %4489 = vmatprep.subr.mxu0 0.0
      %4490 = vmatpush1.msra.mxu0 0.0
      %4491 = vmatprep.subr.mxu0 0.0
      %4492 = vmatpush1.msra.mxu0 0.0
      %4493 = vmatprep.subr.mxu0 0.0
      %4494 = vmatpush1.msra.mxu0 0.0
      %4495 = vmatprep.subr.mxu0 0.0
      %4496 = vmatpush1.msra.mxu0 0.0
      %4497 = vmatprep.subr.mxu0 0.0
      %4498 = vmatpush1.msra.mxu0 0.0
      %4499 = vmatprep.subr.mxu0 0.0
      %4500 = vmatpush1.msra.mxu0 0.0
      %4501 = vmatprep.subr.mxu0 0.0
      %4502 = vmatpush1.msra.mxu0 0.0
      %4503 = vmatprep.subr.mxu0 0.0
      %4504 = vmatpush1.msra.mxu0 0.0
      %4505 = vmatprep.subr.mxu0 0.0
      %4506 = vmatpush1.msra.mxu0 0.0
      %4507 = vmatprep.subr.mxu0 0.0
      %4508 = vmatpush1.msra.mxu0 0.0
      %4509 = vmatprep.subr.mxu0 0.0
      %4510 = vmatpush1.msra.mxu0 0.0
      %4511 = vmatprep.subr.mxu0 0.0
      %4512 = vmatpush1.msra.mxu0 0.0
      %4513 = vmatprep.subr.mxu0 0.0
      %4514 = vmatpush1.msra.mxu0 0.0
      %4515 = vmatprep.mubr.f32.mxu0 0.0
      %4516 = vmatmul.mubr.f32.gmra.mrb[0].mxu0 %v4443
      %v4517 = vpop.f32.mrb[0].mxu0
      %v4518 = vadd.f32 0.0, %v4517
      %v4519 = vpop.f32.mrb[0].mxu0
      %4520 = vmatprep.mubr.f32.mxu0 0.0
      %4521 = vmatmul.mubr.f32.gmra.mrb[0].mxu0 %v4446
      %v4522 = vpop.f32.mrb[0].mxu0
      %v4523 = vadd.f32 0.0, %v4522
      %v4524 = vpop.f32.mrb[0].mxu0
      %4525 = vmatprep.mubr.f32.mxu0 0.0
      %4526 = vmatmul.mubr.f32.gmra.mrb[0].mxu0 %v4449
      %v4527 = vpop.f32.mrb[0].mxu0
      %v4528 = vadd.f32 0.0, %v4527
      %v4529 = vpop.f32.mrb[0].mxu0
      %4530 = vdwg.mxu0
      %v4531 = vadd.f32 %v4269, %v4518
      %v4532 = vadd.f32 %v4270, %v4523
      %v4533 = vadd.f32 %v4271, %v4528
      %v4534 = vmul.f32 %v4531, %v4531
      %v4535 = vmul.f32 %v4532, %v4532
      %v4536 = vmul.f32 %v4533, %v4533
      %v4537 = vsel %vm761, %v4534, 0.0
      %4538 = vadd.xlane.f32.xlu0 %v4537
      %v4539 = vpop.xlane.xlu0 %4538
      %v4540 = vsel %vm761, %v4535, 0.0
      %4541 = vadd.xlane.f32.xlu0 %v4540
      %v4542 = vpop.xlane.xlu0 %4541
      %v4543 = vsel %vm768, %v4536, 0.0
      %4544 = vadd.xlane.f32.xlu0 %v4543
      %v4545 = vpop.xlane.xlu0 %4544
      %v4546 = vmul.f32 %v4539, %v772
      %v4547 = vmul.f32 %v4542, %v772
      %v4548 = vmul.f32 %v4545, %v772
      %v4549 = vadd.f32 %v4546, 1e-05
      %v4550 = vadd.f32 %v4547, 1e-05
      %v4551 = vadd.f32 %v4548, 1e-05
      %v4552 = vrsqrt.pop %v4549
      %v4553 = vrsqrt.pop %v4550
      %v4554 = vrsqrt.pop %v4551
      %v4555 = vmul.f32 %v4531, %v4552
      %v4556 = vmul.f32 %v4532, %v4553
      %v4557 = vmul.f32 %v4533, %v4554
      %v4558 = vlaneseq
      %v4559 = vshrl.u32 %v4558, 7
      %v4560 = vsub.s32 4, %v4559
      %v4561 = vrot.slane %v328, %v4560
      %v4562 = vmul.f32 %v4555, %v4561
      %v4563 = vmul.f32 %v4556, %v4561
      %v4564 = vmul.f32 %v4557, %v4561
      %v4565 = vmul.u32 %v420, 2
      %v4566 = vmul.u32 %v421, 2
      %v4567 = vadd.s32 %v4565, 1
      %v4568 = vadd.s32 %v4566, 1
      %vm4569 = vcmp.eq.s32.totalorder %v424, %v4567
      %vm4570 = vcmp.eq.s32.totalorder %v424, %v4568
      %v4571 = vsel %vm4569, 1, 0
      %v4572 = vsel %vm4570, 1, 0
      %v4573 = vcvt.s32.f32 %v4571
      %v4574 = vcvt.s32.f32 %v4572
      %v4575 = vld [vmem:[%s10] sm:$0xff]
      %v4576 = vld [vmem:[%s10 + $0x8] sm:$0xff]
      %v4577 = vld [vmem:[%s10 + $0x10] sm:$0xff]
      %v4578 = vld [vmem:[%s10 + $0x18] sm:$0xff]
      %v4580 = vsel %vm1099, %v4573, 0
      %v4583 = vsel %vm1099, %v4574, 0
      %v4586 = vsel %vm671, %v4564, 0
      %4588 = vmatprep.subr.mxu0 0.0
      %4589 = vmatpush1.msra.mxu0 %v4562
      %4590 = vmatprep.subr.mxu0 0.0
      %4591 = vmatpush1.msra.mxu0 %v4563
      %4592 = vmatprep.subr.mxu0 0.0
      %4593 = vmatpush1.msra.mxu0 %v4586
      %4594 = vmatprep.subr.mxu0 0.0
      %4595 = vmatpush1.msra.mxu0 0.0
      %4596 = vmatprep.subr.mxu0 0.0
      %4597 = vmatpush1.msra.mxu0 0.0
      %4598 = vmatprep.subr.mxu0 0.0
      %4599 = vmatpush1.msra.mxu0 0.0
      %4600 = vmatprep.subr.mxu0 0.0
      %4601 = vmatpush1.msra.mxu0 0.0
      %4602 = vmatprep.subr.mxu0 0.0
      %4603 = vmatpush1.msra.mxu0 0.0
      %4604 = vmatprep.subr.mxu0 0.0
      %4605 = vmatpush1.msra.mxu0 0.0
      %4606 = vmatprep.subr.mxu0 0.0
      %4607 = vmatpush1.msra.mxu0 0.0
      %4608 = vmatprep.subr.mxu0 0.0
      %4609 = vmatpush1.msra.mxu0 0.0
      %4610 = vmatprep.subr.mxu0 0.0
      %4611 = vmatpush1.msra.mxu0 0.0
      %4612 = vmatprep.subr.mxu0 0.0
      %4613 = vmatpush1.msra.mxu0 0.0
      %4614 = vmatprep.subr.mxu0 0.0
      %4615 = vmatpush1.msra.mxu0 0.0
      %4616 = vmatprep.subr.mxu0 0.0
      %4617 = vmatpush1.msra.mxu0 0.0
      %4618 = vmatprep.subr.mxu0 0.0
      %4619 = vmatpush1.msra.mxu0 0.0
      %4620 = vmatprep.subr.mxu0 0.0
      %4621 = vmatpush1.msra.mxu0 0.0
      %4622 = vmatprep.subr.mxu0 0.0
      %4623 = vmatpush1.msra.mxu0 0.0
      %4624 = vmatprep.subr.mxu0 0.0
      %4625 = vmatpush1.msra.mxu0 0.0
      %4626 = vmatprep.subr.mxu0 0.0
      %4627 = vmatpush1.msra.mxu0 0.0
      %4628 = vmatprep.subr.mxu0 0.0
      %4629 = vmatpush1.msra.mxu0 0.0
      %4630 = vmatprep.subr.mxu0 0.0
      %4631 = vmatpush1.msra.mxu0 0.0
      %4632 = vmatprep.subr.mxu0 0.0
      %4633 = vmatpush1.msra.mxu0 0.0
      %4634 = vmatprep.subr.mxu0 0.0
      %4635 = vmatpush1.msra.mxu0 0.0
      %4636 = vmatprep.subr.mxu0 0.0
      %4637 = vmatpush1.msra.mxu0 0.0
      %4638 = vmatprep.subr.mxu0 0.0
      %4639 = vmatpush1.msra.mxu0 0.0
      %4640 = vmatprep.subr.mxu0 0.0
      %4641 = vmatpush1.msra.mxu0 0.0
      %4642 = vmatprep.subr.mxu0 0.0
      %4643 = vmatpush1.msra.mxu0 0.0
      %4644 = vmatprep.subr.mxu0 0.0
      %4645 = vmatpush1.msra.mxu0 0.0
      %4646 = vmatprep.subr.mxu0 0.0
      %4647 = vmatpush1.msra.mxu0 0.0
      %4648 = vmatprep.subr.mxu0 0.0
      %4649 = vmatpush1.msra.mxu0 0.0
      %4650 = vmatprep.subr.mxu0 0.0
      %4651 = vmatpush1.msra.mxu0 0.0
      %4652 = vmatprep.mubr.f32.mxu0 0.0
      %4653 = vmatmul.mubr.f32.gmra.mrb[0].mxu0 %v4580
      %v4654 = vpop.f32.mrb[0].mxu0
      %v4655 = vadd.f32 0.0, %v4654
      %v4656 = vpop.f32.mrb[0].mxu0
      %4657 = vmatprep.mubr.f32.mxu0 0.0
      %4658 = vmatmul.mubr.f32.gmra.mrb[0].mxu0 %v4583
      %v4659 = vpop.f32.mrb[0].mxu0
      %v4660 = vadd.f32 0.0, %v4659
      %v4661 = vpop.f32.mrb[0].mxu0
      %4662 = vdwg.mxu0
      %v4664 = vsel %vm761, %v4655, 0
      %v4667 = vsel %vm761, %v4660, 0
      %4669 = vmatprep.subr.mxu0 0.0
      %4670 = vmatpush1.msra.mxu0 %v4575
      %4671 = vmatprep.subr.mxu0 0.0
      %4672 = vmatpush1.msra.mxu0 %v4576
      %4673 = vmatprep.subr.mxu0 0.0
      %4674 = vmatpush1.msra.mxu0 %v4577
      %4675 = vmatprep.subr.mxu0 0.0
      %4676 = vmatpush1.msra.mxu0 %v4578
      %4677 = vmatprep.subr.mxu0 0.0
      %4678 = vmatpush1.msra.mxu0 0.0
      %4679 = vmatprep.subr.mxu0 0.0
      %4680 = vmatpush1.msra.mxu0 0.0
      %4681 = vmatprep.subr.mxu0 0.0
      %4682 = vmatpush1.msra.mxu0 0.0
      %4683 = vmatprep.subr.mxu0 0.0
      %4684 = vmatpush1.msra.mxu0 0.0
      %4685 = vmatprep.subr.mxu0 0.0
      %4686 = vmatpush1.msra.mxu0 0.0
      %4687 = vmatprep.subr.mxu0 0.0
      %4688 = vmatpush1.msra.mxu0 0.0
      %4689 = vmatprep.subr.mxu0 0.0
      %4690 = vmatpush1.msra.mxu0 0.0
      %4691 = vmatprep.subr.mxu0 0.0
      %4692 = vmatpush1.msra.mxu0 0.0
      %4693 = vmatprep.subr.mxu0 0.0
      %4694 = vmatpush1.msra.mxu0 0.0
      %4695 = vmatprep.subr.mxu0 0.0
      %4696 = vmatpush1.msra.mxu0 0.0
      %4697 = vmatprep.subr.mxu0 0.0
      %4698 = vmatpush1.msra.mxu0 0.0
      %4699 = vmatprep.subr.mxu0 0.0
      %4700 = vmatpush1.msra.mxu0 0.0
      %4701 = vmatprep.subr.mxu0 0.0
      %4702 = vmatpush1.msra.mxu0 0.0
      %4703 = vmatprep.subr.mxu0 0.0
      %4704 = vmatpush1.msra.mxu0 0.0
      %4705 = vmatprep.subr.mxu0 0.0
      %4706 = vmatpush1.msra.mxu0 0.0
      %4707 = vmatprep.subr.mxu0 0.0
      %4708 = vmatpush1.msra.mxu0 0.0
      %4709 = vmatprep.subr.mxu0 0.0
      %4710 = vmatpush1.msra.mxu0 0.0
      %4711 = vmatprep.subr.mxu0 0.0
      %4712 = vmatpush1.msra.mxu0 0.0
      %4713 = vmatprep.subr.mxu0 0.0
      %4714 = vmatpush1.msra.mxu0 0.0
      %4715 = vmatprep.subr.mxu0 0.0
      %4716 = vmatpush1.msra.mxu0 0.0
      %4717 = vmatprep.subr.mxu0 0.0
      %4718 = vmatpush1.msra.mxu0 0.0
      %4719 = vmatprep.subr.mxu0 0.0
      %4720 = vmatpush1.msra.mxu0 0.0
      %4721 = vmatprep.subr.mxu0 0.0
      %4722 = vmatpush1.msra.mxu0 0.0
      %4723 = vmatprep.subr.mxu0 0.0
      %4724 = vmatpush1.msra.mxu0 0.0
      %4725 = vmatprep.subr.mxu0 0.0
      %4726 = vmatpush1.msra.mxu0 0.0
      %4727 = vmatprep.subr.mxu0 0.0
      %4728 = vmatpush1.msra.mxu0 0.0
      %4729 = vmatprep.subr.mxu0 0.0
      %4730 = vmatpush1.msra.mxu0 0.0
      %4731 = vmatprep.subr.mxu0 0.0
      %4732 = vmatpush1.msra.mxu0 0.0
      %4733 = vmatprep.mubr.f32.mxu0 0.0
      %4734 = vmatmul.mubr.f32.gmra.mrb[0].mxu0 %v4664
      %v4735 = vpop.f32.mrb[0].mxu0
      %v4736 = vadd.f32 0.0, %v4735
      %v4737 = vpop.f32.mrb[0].mxu0
      %4738 = vmatprep.mubr.f32.mxu0 0.0
      %4739 = vmatmul.mubr.f32.gmra.mrb[0].mxu0 %v4667
      %v4740 = vpop.f32.mrb[0].mxu0
      %v4741 = vadd.f32 0.0, %v4740
      %v4742 = vpop.f32.mrb[0].mxu0
      %4743 = vdwg.mxu0
      %4744 = vst [vmem:[%s324] sm:$0xff] %v4736
      %4745 = vst [vmem:[%s324 + $0x8] sm:$0x1] %v4741
      %p4746 = scmp.lt.s32.totalorder %s32, 1
      %s4747 = scalar_select %p4746, %s32, 1
      %s4748 = smul.addr %s4747, 2
      %s4749 = smul.addr %s4748, 8
      %s4750 = scalar_lea.vmem %s11, %s4749
      // Predicated region
      $region57: #{model_forward.1} parent=55 // pred_check
        %p4751 = pneg %p239
      $region58: #{model_forward.1} parent=55 // pred_check_branch
        %4753 = sbr.rel (%p4751) target = $region60
      $region59: #{model_forward.1} parent=55 // pred_region
        _
      $region60: #{model_forward.1} parent=55 // pred_fallthru
        _
    $region56: #{model_forward.1} parent=5 // pred_fallthru
      _
    %p4754 = scmp.le.s32.totalorder 2, %s27
    // Predicated region
    $region61: #{model_forward.1} parent=5 // pred_check
      %p4755 = pneg %p4754
    $region62: #{model_forward.1} parent=5 // pred_check_branch
      %4757 = sbr.rel (%p4755) target = $region64
    $region63: #{model_forward.1} parent=5 // pred_region
      %s4758 = ssub.s32 %s27, 2
      // Predicated region
      $region65: #{model_forward.1} parent=63 // pred_check
        %p4759 = pneg %p245
      $region66: #{model_forward.1} parent=63 // pred_check_branch
        %4761 = sbr.rel (%p4759) target = $region68
      $region67: #{model_forward.1} parent=63 // pred_region
        %p4762 = scmp.lt.s32.totalorder %s33, 1
        %s4763 = scalar_select %p4762, %s33, 1
        %s4764 = smul.addr %s4763, 2
        %s4765 = smul.addr %s4764, 8
        %s4766 = scalar_lea.vmem %s11, %s4765
      $region68: #{model_forward.1} parent=63 // pred_fallthru
        _
    $region64: #{model_forward.1} parent=5 // pred_fallthru
      _
  $region6: #{model_forward.1} parent=0 // loop_footer
    %s31 = sadd.s32 1, %s27
  $region7: #{model_forward.1} parent=0 // loop_footer_branch
    %26 = sbr.rel target = $region3
  $region8: #{model_forward.1} parent=0 // loop_exit
    _

</llo_original>
